<compile_context>
chip_gen: v5e
topology: v5e:2x2
jax: 0.10.0
libtpu: 0.0.40
codegen_flags: <defaults>
</compile_context>

<pallas_src>
import math

import numpy as np
import jax
import jax.numpy as jnp
from jax.experimental import pallas as pl
from jax.experimental.pallas import tpu as pltpu

_CONV_CH = (8, 16, 32)
_FC_HIDDEN = 64
_FC_OUT = 50
_FC_OUT_PAD = 128          # lane-dense final store; sliced back to 50 outside


def _pool_out(n):
    # torch.nn.MaxPool2d(kernel_size=2, padding=1): stride=kernel, floor mode
    return (n + 2 - 2) // 2 + 1


def _spp_geometry(hc, wc, num_levels):
    """Per-level (oh, ow, [(r0, r1, c0, c1)]) windows matching SPPLayer."""
    levels = []
    for i in range(num_levels):
        kh = math.ceil(hc / 2 ** i)
        kw = math.ceil(wc / 2 ** i)
        ph = math.floor((kh * 2 ** i - hc + 1) / 2)
        pw = math.floor((kw * 2 ** i - wc + 1) / 2)
        oh = (hc + 2 * ph - kh) // kh + 1
        ow = (wc + 2 * pw - kw) // kw + 1
        cells = []
        for a in range(oh):
            for b in range(ow):
                r0, r1 = max(0, a * kh - ph), min(hc, a * kh - ph + kh)
                c0, c1 = max(0, b * kw - pw), min(wc, b * kw - pw + kw)
                cells.append((r0, r1, c0, c1))
        levels.append((oh, ow, cells))
    return levels


# ----------------------- constant-matrix builders (host) --------------------

def _conv_toeplitz(w, out_w):
    """w: (3, 3, cin, cout).  Returns (3, (out_w+2)*cin, out_w*cout) so a 3x3
    'same' conv over a zero-padded row-major image is 3 row-shifted matmuls
    (one per dy) with all (dx, cin) taps fused into the contraction dim."""
    w = np.asarray(w, np.float32)
    kh, kw, cin, cout = w.shape
    wp = out_w + 2
    t = np.zeros((kh, wp, cin, out_w, cout), np.float32)
    for dx in range(kw):
        for j in range(out_w):
            t[:, j + dx, :, j, :] = w[:, dx, :, :]
    return jnp.asarray(t.reshape(kh, wp * cin, out_w * cout))


def _pool_row_sel(bt, h_in, hp_in, h_out, hp_out):
    """(2, bt*hp_out, bt*hp_in-2): phase d copies conv-output row 2*oi-1+d of
    each image into padded pooled row 1+oi (zero row if clipped / padding)."""
    L = bt * hp_in - 2
    r = np.zeros((2, bt * hp_out, L), np.float32)
    for d in range(2):
        for b in range(bt):
            for oi in range(h_out):
                src = 2 * oi - 1 + d
                if 0 <= src < h_in:
                    r[d, b * hp_out + 1 + oi, b * hp_in + src] = 1.0
    return jnp.asarray(r)


def _pool_col_sel(w_in, c, w_out, wp_out):
    """(2, w_in*c, wp_out*c): phase d copies column 2*oj-1+d into padded pooled
    column 1+oj (per channel); zero column if clipped / padding."""
    q = np.zeros((2, w_in * c, wp_out * c), np.float32)
    for d in range(2):
        for oj in range(w_out):
            src = 2 * oj - 1 + d
            if 0 <= src < w_in:
                for ch in range(c):
                    q[d, src * c + ch, (1 + oj) * c + ch] = 1.0
    return jnp.asarray(q)


def _spp_col_sel(level, w3, c):
    oh, ow, cells = level
    bounds = [cells[u][2:4] for u in range(ow)]
    cw = max(c1 - c0 for c0, c1 in bounds)
    ident = (cw == 1 and ow == w3
             and all(c0 == u for u, (c0, _) in enumerate(bounds)))
    s = np.zeros((cw, w3 * c, ow * c), np.float32)
    for d in range(cw):
        for u, (c0, c1) in enumerate(bounds):
            src = c0 + d
            if src < c1:
                for ch in range(c):
                    s[d, src * c + ch, u * c + ch] = 1.0
    return jnp.asarray(s), cw, ident


def _spp_row_sel(level, bt, hp3):
    oh, ow, cells = level
    bounds = [cells[a * ow][0:2] for a in range(oh)]
    chh = max(r1 - r0 for r0, r1 in bounds)
    L = bt * hp3 - 2
    s = np.zeros((oh * chh, bt, L), np.float32)
    for a, (r0, r1) in enumerate(bounds):
        for d in range(chh):
            src = r0 + d
            if src < r1:
                for b in range(bt):
                    s[a * chh + d, b, b * hp3 + src] = 1.0
    return jnp.asarray(s), chh


def _fc1_perm(levels, c):
    """Kernel feature order (level, cell-row, cell-col, channel) -> PyTorch SPP
    flatten order (level, channel, cell) row permutation for fc1's weight."""
    perm = []
    base = 0
    for oh, ow, _ in levels:
        n = oh * ow
        for a in range(oh):
            for u in range(ow):
                for ch in range(c):
                    perm.append(base + ch * n + a * ow + u)
        base += n * c
    return np.asarray(perm, np.int64)


# ------------------------------ model builder --------------------------------

def build_imgnet_spp(params, input_hw, spp_level=3, block_batch=8):
    """Precompute all constant matrices and return a jitted forward(x_nchw)."""
    H1, W1 = input_hw
    C0 = params["w1"].shape[2]
    C1, C2, C3 = _CONV_CH
    bt = block_batch

    Hp1, Wp1 = H1 + 2, W1 + 2
    H2, W2 = _pool_out(H1), _pool_out(W1)
    Hp2, Wp2 = H2 + 2, W2 + 2
    H3, W3 = _pool_out(H2), _pool_out(W2)
    Hp3, Wp3 = H3 + 2, W3 + 2
    L1, L2, L3 = bt * Hp1 - 2, bt * Hp2 - 2, bt * Hp3 - 2

    levels = _spp_geometry(H3, W3, spp_level)
    num_grids = sum(oh * ow for oh, ow, _ in levels)
    assert params["fw1"].shape == (num_grids * C3, _FC_HIDDEN)

    # ---- constants (built once, host side; exact 0/1 or copied weights) ----
    t1 = _conv_toeplitz(params["w1"], W1)
    t2 = _conv_toeplitz(params["w2"], W2)
    t3 = _conv_toeplitz(params["w3"], W3)
    b1r = jnp.asarray(np.tile(np.asarray(params["b1"], np.float32
                                         ).reshape(1, C1), (1, W1)))
    b2r = jnp.asarray(np.tile(np.asarray(params["b2"], np.float32
                                         ).reshape(1, C2), (1, W2)))
    b3r = jnp.asarray(np.tile(np.asarray(params["b3"], np.float32
                                         ).reshape(1, C3), (1, W3)))
    p1r = _pool_row_sel(bt, H1, Hp1, H2, Hp2)
    q1c = _pool_col_sel(W1, C1, W2, Wp2)
    p2r = _pool_row_sel(bt, H2, Hp2, H3, Hp3)
    q2c = _pool_col_sel(W2, C2, W3, Wp3)

    spp_cols, spp_rows, level_meta = [], [], []
    for lev in levels:
        sc, cw, ident = _spp_col_sel(lev, W3, C3)
        sr, chh = _spp_row_sel(lev, bt, Hp3)
        spp_cols.append(sc)
        spp_rows.append(sr)
        level_meta.append((lev[0], lev[1], cw, chh, ident))
    nlev = len(levels)

    # fc1 rows permuted ONCE from PyTorch flatten order to kernel order.
    fw1 = jnp.asarray(np.asarray(params["fw1"], np.float32)[_fc1_perm(levels, C3)])
    fb1 = jnp.asarray(np.asarray(params["fb1"], np.float32).reshape(1, _FC_HIDDEN))
    fw2_np = np.zeros((_FC_HIDDEN, _FC_OUT_PAD), np.float32)
    fw2_np[:, :_FC_OUT] = np.asarray(params["fw2"], np.float32)
    fb2_np = np.zeros((1, _FC_OUT_PAD), np.float32)
    fb2_np[0, :_FC_OUT] = np.asarray(params["fb2"], np.float32)
    fw2, fb2 = jnp.asarray(fw2_np), jnp.asarray(fb2_np)

    consts = ([t1, b1r, t2, b2r, t3, b3r, p1r, q1c, p2r, q2c]
              + spp_cols + spp_rows + [fw1, fb1, fw2, fb2])

    # ------------------------------- kernel ---------------------------------
    def kernel(*refs):
        (x_ref, t1_ref, b1_ref, t2_ref, b2_ref, t3_ref, b3_ref,
         p1_ref, q1_ref, p2_ref, q2_ref) = refs[:11]
        sc_refs = refs[11:11 + nlev]
        sr_refs = refs[11 + nlev:11 + 2 * nlev]
        fw1_ref, fb1_ref, fw2_ref, fb2_ref, out_ref = refs[11 + 2 * nlev:]

        def mm(a, b):
            return jnp.dot(a, b, preferred_element_type=jnp.float32)

        def conv3x3(x, t_ref, b_ref, rows):
            # 3 row-shifted Toeplitz dots; all (dx, cin) taps fused into K.
            return (mm(x[0:rows, :], t_ref[0])
                    + mm(x[1:1 + rows, :], t_ref[1])
                    + mm(x[2:2 + rows, :], t_ref[2])
                    + b_ref[...])

        def pool_relu_pad(o, q_ref, r_ref):
            # MaxPool2d(2, stride=2, pad=1) + ReLU + zero re-padding, all on
            # the MXU via 0/1 selection matrices.  Clipped phases give exact
            # 0s, harmless because ReLU follows the max.
            hp = jnp.maximum(mm(o, q_ref[0]), mm(o, q_ref[1]))
            v = jnp.maximum(mm(r_ref[0], hp), mm(r_ref[1], hp))
            return jnp.maximum(v, 0.0)

        x2 = pool_relu_pad(conv3x3(x_ref, t1_ref, b1_ref, L1), q1_ref, p1_ref)
        x3 = pool_relu_pad(conv3x3(x2, t2_ref, b2_ref, L2), q2_ref, p2_ref)
        c3m = jnp.maximum(conv3x3(x3, t3_ref, b3_ref, L3), 0.0)  # (L3, W3*C3)

        # SPP max pyramid + fc1, batched over the tile.  c3m >= 0, so clipped
        # selection phases (exact 0s) never change a cell max.
        hid = jnp.zeros((bt, _FC_HIDDEN), jnp.float32)
        row_off = 0
        for lv in range(nlev):
            oh, ow, cw, chh, ident = level_meta[lv]
            if ident:                       # finest level: cells are pixels
                hl = c3m
            else:
                sc = sc_refs[lv]
                hl = mm(c3m, sc[0])
                for d in range(1, cw):
                    hl = jnp.maximum(hl, mm(c3m, sc[d]))
            sr = sr_refs[lv]
            for a in range(oh):
                f = mm(sr[a * chh], hl)
                for d in range(1, chh):
                    f = jnp.maximum(f, mm(sr[a * chh + d], hl))
                hid = hid + mm(f, fw1_ref[row_off:row_off + ow * C3, :])
                row_off += ow * C3

        hid = jnp.maximum(hid + fb1_ref[...], 0.0)
        out_ref[...] = mm(hid, fw2_ref[...]) + fb2_ref[...]

    # ------------------------------ specs -----------------------------------
    in_specs = [pl.BlockSpec((None, bt * Hp1, Wp1 * C0), lambda g: (g, 0, 0))]
    for cst in consts:
        in_specs.append(pl.BlockSpec(cst.shape, lambda g, n=cst.ndim: (0,) * n))

    @jax.jit
    def forward(x_nchw):
        x = jnp.transpose(x_nchw, (0, 2, 3, 1)).astype(jnp.float32)   # NHWC
        B = x.shape[0]
        steps = (B + bt - 1) // bt
        bpad = steps * bt
        # zero-pad (batch tail + 3x3 conv halo) once in the wrapper.
        xp = jnp.pad(x, ((0, bpad - B), (1, 1), (1, 1), (0, 0)))
        xp = xp.reshape(steps, bt * Hp1, Wp1 * C0)
        out = pl.pallas_call(
            kernel,
            out_shape=jax.ShapeDtypeStruct((steps, bt, _FC_OUT_PAD),
                                           jnp.float32),
            grid=(steps,),
            in_specs=in_specs,
            out_specs=pl.BlockSpec((None, bt, _FC_OUT_PAD),
                                   lambda g: (g, 0, 0)),
            compiler_params=pltpu.CompilerParams(
                dimension_semantics=("parallel",)),
        )(xp, *consts)
        return out.reshape(bpad, _FC_OUT_PAD)[:B, :_FC_OUT]

    return forward


# ------------------------------- parameters ----------------------------------

def init_params(key, channel=3, spp_level=3, input_hw=(12, 12)):
    H, W = input_hw
    H3, W3 = _pool_out(_pool_out(H)), _pool_out(_pool_out(W))
    levels = _spp_geometry(H3, W3, spp_level)
    num_grids = sum(oh * ow for oh, ow, _ in levels)
    C1, C2, C3 = _CONV_CH
    ks = jax.random.split(key, 10)

    def conv_w(k, cin, cout):
        # NOTE: stored (kh, kw, cin, cout).  Real PyTorch Conv2d weights
        # (cout, cin, kh, kw) must be transposed with (2, 3, 1, 0) first.
        std = 1.0 / math.sqrt(cin * 9)
        return jax.random.normal(k, (3, 3, cin, cout), jnp.float32) * std

    def fc_w(k, fin, fout):
        return jax.random.normal(k, (fin, fout), jnp.float32) / math.sqrt(fin)

    return {
        "w1": conv_w(ks[0], channel, C1),
        "b1": jax.random.normal(ks[1], (C1,), jnp.float32) * 0.01,
        "w2": conv_w(ks[2], C1, C2),
        "b2": jax.random.normal(ks[3], (C2,), jnp.float32) * 0.01,
        "w3": conv_w(ks[4], C2, C3),
        "b3": jax.random.normal(ks[5], (C3,), jnp.float32) * 0.01,
        # fc1 weight stored input-major, rows in PyTorch SPP flatten order
        "fw1": fc_w(ks[6], num_grids * C3, _FC_HIDDEN),
        "fb1": jax.random.normal(ks[7], (_FC_HIDDEN,), jnp.float32) * 0.01,
        "fw2": fc_w(ks[8], _FC_HIDDEN, _FC_OUT),
        "fb2": jax.random.normal(ks[9], (_FC_OUT,), jnp.float32) * 0.01,
    }


# ------------------------- pure-JAX reference (XLA) ---------------------------

def reference_forward(x_nchw, params, spp_level=3):
    x = jnp.transpose(x_nchw, (0, 2, 3, 1)).astype(jnp.float32)

    def conv(y, w, b):
        y = jax.lax.conv_general_dilated(
            y, w, window_strides=(1, 1), padding=[(1, 1), (1, 1)],
            dimension_numbers=("NHWC", "HWIO", "NHWC"))
        return y + b.reshape(1, 1, 1, -1)

    def maxpool_2_1(y):
        return jax.lax.reduce_window(
            y, -jnp.inf, jax.lax.max, (1, 2, 2, 1), (1, 2, 2, 1),
            [(0, 0), (1, 1), (1, 1), (0, 0)])

    y = jax.nn.relu(maxpool_2_1(conv(x, params["w1"], params["b1"])))
    y = jax.nn.relu(maxpool_2_1(conv(y, params["w2"], params["b2"])))
    y = jax.nn.relu(conv(y, params["w3"], params["b3"]))

    b, h, w, _ = y.shape
    feats = []
    for i in range(spp_level):
        kh, kw = math.ceil(h / 2 ** i), math.ceil(w / 2 ** i)
        ph = math.floor((kh * 2 ** i - h + 1) / 2)
        pw = math.floor((kw * 2 ** i - w + 1) / 2)
        t = jax.lax.reduce_window(
            y, -jnp.inf, jax.lax.max, (1, kh, kw, 1), (1, kh, kw, 1),
            [(0, 0), (ph, ph), (pw, pw), (0, 0)])
        feats.append(jnp.transpose(t, (0, 3, 1, 2)).reshape(b, -1))
    f = jnp.concatenate(feats, axis=-1)
    hid = jax.nn.relu(f @ params["fw1"] + params["fb1"])
    return hid @ params["fw2"] + params["fb2"]


# ----------------------------------- demo -------------------------------------

if __name__ == "__main__":
    key = jax.random.PRNGKey(0)
    kx, kp = jax.random.split(key)
    # 12x12 -> pool 7x7 -> pool 4x4; SPP grids 1 + 4 + 16 = 21 -> 672 features
    B, H, W = 8, 12, 12
    x = jax.random.normal(kx, (B, 3, H, W), jnp.float32)          # NCHW
    params = init_params(kp, channel=3, spp_level=3, input_hw=(H, W))

    # block_batch=4 -> grid of 2 "parallel" steps with 4 images stacked along
    # the M dim per step (use 8-32 for larger batches).
    forward = build_imgnet_spp(params, (H, W), spp_level=3, block_batch=4)

    out = jax.block_until_ready(forward(x))
    assert out.shape == (B, _FC_OUT), out.shape
    assert bool(jnp.all(jnp.isfinite(out)))

    ref = reference_forward(x, params, spp_level=3)
    assert bool(jnp.allclose(out, ref, rtol=5e-2, atol=5e-2)), float(
        jnp.max(jnp.abs(out - ref)))
    print("KERNEL_OK")
</pallas_src>

<mosaic_0001>
module attributes {stable_mosaic.version = 11 : i64} {
  func.func @kernel(%arg0: i32, %arg1: memref<1x56x42xf32, #tpu.memory_space<vmem>>, %arg2: memref<3x42x96xf32, #tpu.memory_space<vmem>>, %arg3: memref<1x96xf32, #tpu.memory_space<vmem>>, %arg4: memref<3x72x112xf32, #tpu.memory_space<vmem>>, %arg5: memref<1x112xf32, #tpu.memory_space<vmem>>, %arg6: memref<3x96x128xf32, #tpu.memory_space<vmem>>, %arg7: memref<1x128xf32, #tpu.memory_space<vmem>>, %arg8: memref<2x36x54xf32, #tpu.memory_space<vmem>>, %arg9: memref<2x96x72xf32, #tpu.memory_space<vmem>>, %arg10: memref<2x24x34xf32, #tpu.memory_space<vmem>>, %arg11: memref<2x112x96xf32, #tpu.memory_space<vmem>>, %arg12: memref<4x128x32xf32, #tpu.memory_space<vmem>>, %arg13: memref<2x128x64xf32, #tpu.memory_space<vmem>>, %arg14: memref<1x128x128xf32, #tpu.memory_space<vmem>>, %arg15: memref<4x4x22xf32, #tpu.memory_space<vmem>>, %arg16: memref<4x4x22xf32, #tpu.memory_space<vmem>>, %arg17: memref<4x4x22xf32, #tpu.memory_space<vmem>>, %arg18: memref<672x64xf32, #tpu.memory_space<vmem>>, %arg19: memref<1x64xf32, #tpu.memory_space<vmem>>, %arg20: memref<64x128xf32, #tpu.memory_space<vmem>>, %arg21: memref<1x128xf32, #tpu.memory_space<vmem>>, %arg22: memref<1x4x128xf32, #tpu.memory_space<vmem>>) attributes {dimension_semantics = [#tpu.dimension_semantics<parallel>], iteration_bounds = array<i64: 2>, scalar_prefetch = 0 : i64, scratch_operands = 0 : i64, tpu.core_type = #tpu.core_type<tc>, window_params = [{transform_indices = @transform_0, window_bounds = array<i64: 1, 56, 42>}, {pipeline_mode = #tpu.pipeline_mode<synchronous>, transform_indices = @transform_1, window_bounds = array<i64: 3, 42, 96>}, {pipeline_mode = #tpu.pipeline_mode<synchronous>, transform_indices = @transform_2, window_bounds = array<i64: 1, 96>}, {pipeline_mode = #tpu.pipeline_mode<synchronous>, transform_indices = @transform_3, window_bounds = array<i64: 3, 72, 112>}, {pipeline_mode = #tpu.pipeline_mode<synchronous>, transform_indices = @transform_4, window_bounds = array<i64: 1, 112>}, {pipeline_mode = #tpu.pipeline_mode<synchronous>, transform_indices = @transform_5, window_bounds = array<i64: 3, 96, 128>}, {pipeline_mode = #tpu.pipeline_mode<synchronous>, transform_indices = @transform_6, window_bounds = array<i64: 1, 128>}, {pipeline_mode = #tpu.pipeline_mode<synchronous>, transform_indices = @transform_7, window_bounds = array<i64: 2, 36, 54>}, {pipeline_mode = #tpu.pipeline_mode<synchronous>, transform_indices = @transform_8, window_bounds = array<i64: 2, 96, 72>}, {pipeline_mode = #tpu.pipeline_mode<synchronous>, transform_indices = @transform_9, window_bounds = array<i64: 2, 24, 34>}, {pipeline_mode = #tpu.pipeline_mode<synchronous>, transform_indices = @transform_10, window_bounds = array<i64: 2, 112, 96>}, {pipeline_mode = #tpu.pipeline_mode<synchronous>, transform_indices = @transform_11, window_bounds = array<i64: 4, 128, 32>}, {pipeline_mode = #tpu.pipeline_mode<synchronous>, transform_indices = @transform_12, window_bounds = array<i64: 2, 128, 64>}, {pipeline_mode = #tpu.pipeline_mode<synchronous>, transform_indices = @transform_13, window_bounds = array<i64: 1, 128, 128>}, {pipeline_mode = #tpu.pipeline_mode<synchronous>, transform_indices = @transform_14, window_bounds = array<i64: 4, 4, 22>}, {pipeline_mode = #tpu.pipeline_mode<synchronous>, transform_indices = @transform_15, window_bounds = array<i64: 4, 4, 22>}, {pipeline_mode = #tpu.pipeline_mode<synchronous>, transform_indices = @transform_16, window_bounds = array<i64: 4, 4, 22>}, {pipeline_mode = #tpu.pipeline_mode<synchronous>, transform_indices = @transform_17, window_bounds = array<i64: 672, 64>}, {pipeline_mode = #tpu.pipeline_mode<synchronous>, transform_indices = @transform_18, window_bounds = array<i64: 1, 64>}, {pipeline_mode = #tpu.pipeline_mode<synchronous>, transform_indices = @transform_19, window_bounds = array<i64: 64, 128>}, {pipeline_mode = #tpu.pipeline_mode<synchronous>, transform_indices = @transform_20, window_bounds = array<i64: 1, 128>}, {transform_indices = @transform_21, window_bounds = array<i64: 1, 4, 128>}]} {
    %c0 = arith.constant 0 : index
    %c0_0 = arith.constant 0 : index
    %c0_1 = arith.constant 0 : index
    %0 = vector.load %arg1[%c0, %c0_0, %c0_1] : memref<1x56x42xf32, #tpu.memory_space<vmem>>, vector<1x54x42xf32>
    %1 = vector.shape_cast %0 : vector<1x54x42xf32> to vector<54x42xf32>
    %c0_2 = arith.constant 0 : index
    %c0_3 = arith.constant 0 : index
    %c0_4 = arith.constant 0 : index
    %2 = vector.load %arg2[%c0_2, %c0_3, %c0_4] : memref<3x42x96xf32, #tpu.memory_space<vmem>>, vector<1x42x96xf32>
    %3 = vector.shape_cast %2 : vector<1x42x96xf32> to vector<42x96xf32>
    %cst = arith.constant dense<0.000000e+00> : vector<54x96xf32>
    %4 = tpu.matmul %1, %3, %cst {dimension_numbers = #tpu.dot_dimension_numbers<[1], [0], [0], [1], [0, 0, 1, 1], [], []>} : vector<54x42xf32>, vector<42x96xf32>, vector<54x96xf32> -> vector<54x96xf32>
    %c0_5 = arith.constant 0 : index
    %c1 = arith.constant 1 : index
    %c0_6 = arith.constant 0 : index
    %5 = vector.load %arg1[%c0_5, %c1, %c0_6] : memref<1x56x42xf32, #tpu.memory_space<vmem>>, vector<1x54x42xf32>
    %6 = vector.shape_cast %5 : vector<1x54x42xf32> to vector<54x42xf32>
    %c1_7 = arith.constant 1 : index
    %c0_8 = arith.constant 0 : index
    %c0_9 = arith.constant 0 : index
    %7 = vector.load %arg2[%c1_7, %c0_8, %c0_9] : memref<3x42x96xf32, #tpu.memory_space<vmem>>, vector<1x42x96xf32>
    %8 = vector.shape_cast %7 : vector<1x42x96xf32> to vector<42x96xf32>
    %cst_10 = arith.constant dense<0.000000e+00> : vector<54x96xf32>
    %9 = tpu.matmul %6, %8, %cst_10 {dimension_numbers = #tpu.dot_dimension_numbers<[1], [0], [0], [1], [0, 0, 1, 1], [], []>} : vector<54x42xf32>, vector<42x96xf32>, vector<54x96xf32> -> vector<54x96xf32>
    %10 = arith.addf %4, %9 : vector<54x96xf32>
    %c0_11 = arith.constant 0 : index
    %c2 = arith.constant 2 : index
    %c0_12 = arith.constant 0 : index
    %11 = vector.load %arg1[%c0_11, %c2, %c0_12] : memref<1x56x42xf32, #tpu.memory_space<vmem>>, vector<1x54x42xf32>
    %12 = vector.shape_cast %11 : vector<1x54x42xf32> to vector<54x42xf32>
    %c2_13 = arith.constant 2 : index
    %c0_14 = arith.constant 0 : index
    %c0_15 = arith.constant 0 : index
    %13 = vector.load %arg2[%c2_13, %c0_14, %c0_15] : memref<3x42x96xf32, #tpu.memory_space<vmem>>, vector<1x42x96xf32>
    %14 = vector.shape_cast %13 : vector<1x42x96xf32> to vector<42x96xf32>
    %cst_16 = arith.constant dense<0.000000e+00> : vector<54x96xf32>
    %15 = tpu.matmul %12, %14, %cst_16 {dimension_numbers = #tpu.dot_dimension_numbers<[1], [0], [0], [1], [0, 0, 1, 1], [], []>} : vector<54x42xf32>, vector<42x96xf32>, vector<54x96xf32> -> vector<54x96xf32>
    %16 = arith.addf %10, %15 : vector<54x96xf32>
    %c0_17 = arith.constant 0 : index
    %c0_18 = arith.constant 0 : index
    %17 = vector.load %arg3[%c0_17, %c0_18] : memref<1x96xf32, #tpu.memory_space<vmem>>, vector<1x96xf32>
    %18 = vector.broadcast %17 : vector<1x96xf32> to vector<54x96xf32>
    %19 = arith.addf %16, %18 : vector<54x96xf32>
    %c0_19 = arith.constant 0 : index
    %c0_20 = arith.constant 0 : index
    %c0_21 = arith.constant 0 : index
    %20 = vector.load %arg9[%c0_19, %c0_20, %c0_21] : memref<2x96x72xf32, #tpu.memory_space<vmem>>, vector<1x96x72xf32>
    %21 = vector.shape_cast %20 : vector<1x96x72xf32> to vector<96x72xf32>
    %cst_22 = arith.constant dense<0.000000e+00> : vector<54x72xf32>
    %22 = tpu.matmul %19, %21, %cst_22 {dimension_numbers = #tpu.dot_dimension_numbers<[1], [0], [0], [1], [0, 0, 1, 1], [], []>} : vector<54x96xf32>, vector<96x72xf32>, vector<54x72xf32> -> vector<54x72xf32>
    %c1_23 = arith.constant 1 : index
    %c0_24 = arith.constant 0 : index
    %c0_25 = arith.constant 0 : index
    %23 = vector.load %arg9[%c1_23, %c0_24, %c0_25] : memref<2x96x72xf32, #tpu.memory_space<vmem>>, vector<1x96x72xf32>
    %24 = vector.shape_cast %23 : vector<1x96x72xf32> to vector<96x72xf32>
    %cst_26 = arith.constant dense<0.000000e+00> : vector<54x72xf32>
    %25 = tpu.matmul %19, %24, %cst_26 {dimension_numbers = #tpu.dot_dimension_numbers<[1], [0], [0], [1], [0, 0, 1, 1], [], []>} : vector<54x96xf32>, vector<96x72xf32>, vector<54x72xf32> -> vector<54x72xf32>
    %26 = arith.maximumf %22, %25 : vector<54x72xf32>
    %c0_27 = arith.constant 0 : index
    %c0_28 = arith.constant 0 : index
    %c0_29 = arith.constant 0 : index
    %27 = vector.load %arg8[%c0_27, %c0_28, %c0_29] : memref<2x36x54xf32, #tpu.memory_space<vmem>>, vector<1x36x54xf32>
    %28 = vector.shape_cast %27 : vector<1x36x54xf32> to vector<36x54xf32>
    %cst_30 = arith.constant dense<0.000000e+00> : vector<36x72xf32>
    %29 = tpu.matmul %28, %26, %cst_30 {dimension_numbers = #tpu.dot_dimension_numbers<[1], [0], [0], [1], [0, 0, 1, 1], [], []>} : vector<36x54xf32>, vector<54x72xf32>, vector<36x72xf32> -> vector<36x72xf32>
    %c1_31 = arith.constant 1 : index
    %c0_32 = arith.constant 0 : index
    %c0_33 = arith.constant 0 : index
    %30 = vector.load %arg8[%c1_31, %c0_32, %c0_33] : memref<2x36x54xf32, #tpu.memory_space<vmem>>, vector<1x36x54xf32>
    %31 = vector.shape_cast %30 : vector<1x36x54xf32> to vector<36x54xf32>
    %cst_34 = arith.constant dense<0.000000e+00> : vector<36x72xf32>
    %32 = tpu.matmul %31, %26, %cst_34 {dimension_numbers = #tpu.dot_dimension_numbers<[1], [0], [0], [1], [0, 0, 1, 1], [], []>} : vector<36x54xf32>, vector<54x72xf32>, vector<36x72xf32> -> vector<36x72xf32>
    %33 = arith.maximumf %29, %32 : vector<36x72xf32>
    %cst_35 = arith.constant 0.000000e+00 : f32
    %34 = vector.broadcast %cst_35 : f32 to vector<36x72xf32>
    %35 = arith.maximumf %33, %34 : vector<36x72xf32>
    %36 = vector.extract_strided_slice %35 {offsets = [0, 0], sizes = [34, 72], strides = [1, 1]} : vector<36x72xf32> to vector<34x72xf32>
    %c0_36 = arith.constant 0 : index
    %c0_37 = arith.constant 0 : index
    %c0_38 = arith.constant 0 : index
    %37 = vector.load %arg4[%c0_36, %c0_37, %c0_38] : memref<3x72x112xf32, #tpu.memory_space<vmem>>, vector<1x72x112xf32>
    %38 = vector.shape_cast %37 : vector<1x72x112xf32> to vector<72x112xf32>
    %cst_39 = arith.constant dense<0.000000e+00> : vector<34x112xf32>
    %39 = tpu.matmul %36, %38, %cst_39 {dimension_numbers = #tpu.dot_dimension_numbers<[1], [0], [0], [1], [0, 0, 1, 1], [], []>} : vector<34x72xf32>, vector<72x112xf32>, vector<34x112xf32> -> vector<34x112xf32>
    %40 = vector.extract_strided_slice %35 {offsets = [1, 0], sizes = [34, 72], strides = [1, 1]} : vector<36x72xf32> to vector<34x72xf32>
    %c1_40 = arith.constant 1 : index
    %c0_41 = arith.constant 0 : index
    %c0_42 = arith.constant 0 : index
    %41 = vector.load %arg4[%c1_40, %c0_41, %c0_42] : memref<3x72x112xf32, #tpu.memory_space<vmem>>, vector<1x72x112xf32>
    %42 = vector.shape_cast %41 : vector<1x72x112xf32> to vector<72x112xf32>
    %cst_43 = arith.constant dense<0.000000e+00> : vector<34x112xf32>
    %43 = tpu.matmul %40, %42, %cst_43 {dimension_numbers = #tpu.dot_dimension_numbers<[1], [0], [0], [1], [0, 0, 1, 1], [], []>} : vector<34x72xf32>, vector<72x112xf32>, vector<34x112xf32> -> vector<34x112xf32>
    %44 = arith.addf %39, %43 : vector<34x112xf32>
    %45 = vector.extract_strided_slice %35 {offsets = [2, 0], sizes = [34, 72], strides = [1, 1]} : vector<36x72xf32> to vector<34x72xf32>
    %c2_44 = arith.constant 2 : index
    %c0_45 = arith.constant 0 : index
    %c0_46 = arith.constant 0 : index
    %46 = vector.load %arg4[%c2_44, %c0_45, %c0_46] : memref<3x72x112xf32, #tpu.memory_space<vmem>>, vector<1x72x112xf32>
    %47 = vector.shape_cast %46 : vector<1x72x112xf32> to vector<72x112xf32>
    %cst_47 = arith.constant dense<0.000000e+00> : vector<34x112xf32>
    %48 = tpu.matmul %45, %47, %cst_47 {dimension_numbers = #tpu.dot_dimension_numbers<[1], [0], [0], [1], [0, 0, 1, 1], [], []>} : vector<34x72xf32>, vector<72x112xf32>, vector<34x112xf32> -> vector<34x112xf32>
    %49 = arith.addf %44, %48 : vector<34x112xf32>
    %c0_48 = arith.constant 0 : index
    %c0_49 = arith.constant 0 : index
    %50 = vector.load %arg5[%c0_48, %c0_49] : memref<1x112xf32, #tpu.memory_space<vmem>>, vector<1x112xf32>
    %51 = vector.broadcast %50 : vector<1x112xf32> to vector<34x112xf32>
    %52 = arith.addf %49, %51 : vector<34x112xf32>
    %c0_50 = arith.constant 0 : index
    %c0_51 = arith.constant 0 : index
    %c0_52 = arith.constant 0 : index
    %53 = vector.load %arg11[%c0_50, %c0_51, %c0_52] : memref<2x112x96xf32, #tpu.memory_space<vmem>>, vector<1x112x96xf32>
    %54 = vector.shape_cast %53 : vector<1x112x96xf32> to vector<112x96xf32>
    %cst_53 = arith.constant dense<0.000000e+00> : vector<34x96xf32>
    %55 = tpu.matmul %52, %54, %cst_53 {dimension_numbers = #tpu.dot_dimension_numbers<[1], [0], [0], [1], [0, 0, 1, 1], [], []>} : vector<34x112xf32>, vector<112x96xf32>, vector<34x96xf32> -> vector<34x96xf32>
    %c1_54 = arith.constant 1 : index
    %c0_55 = arith.constant 0 : index
    %c0_56 = arith.constant 0 : index
    %56 = vector.load %arg11[%c1_54, %c0_55, %c0_56] : memref<2x112x96xf32, #tpu.memory_space<vmem>>, vector<1x112x96xf32>
    %57 = vector.shape_cast %56 : vector<1x112x96xf32> to vector<112x96xf32>
    %cst_57 = arith.constant dense<0.000000e+00> : vector<34x96xf32>
    %58 = tpu.matmul %52, %57, %cst_57 {dimension_numbers = #tpu.dot_dimension_numbers<[1], [0], [0], [1], [0, 0, 1, 1], [], []>} : vector<34x112xf32>, vector<112x96xf32>, vector<34x96xf32> -> vector<34x96xf32>
    %59 = arith.maximumf %55, %58 : vector<34x96xf32>
    %c0_58 = arith.constant 0 : index
    %c0_59 = arith.constant 0 : index
    %c0_60 = arith.constant 0 : index
    %60 = vector.load %arg10[%c0_58, %c0_59, %c0_60] : memref<2x24x34xf32, #tpu.memory_space<vmem>>, vector<1x24x34xf32>
    %61 = vector.shape_cast %60 : vector<1x24x34xf32> to vector<24x34xf32>
    %cst_61 = arith.constant dense<0.000000e+00> : vector<24x96xf32>
    %62 = tpu.matmul %61, %59, %cst_61 {dimension_numbers = #tpu.dot_dimension_numbers<[1], [0], [0], [1], [0, 0, 1, 1], [], []>} : vector<24x34xf32>, vector<34x96xf32>, vector<24x96xf32> -> vector<24x96xf32>
    %c1_62 = arith.constant 1 : index
    %c0_63 = arith.constant 0 : index
    %c0_64 = arith.constant 0 : index
    %63 = vector.load %arg10[%c1_62, %c0_63, %c0_64] : memref<2x24x34xf32, #tpu.memory_space<vmem>>, vector<1x24x34xf32>
    %64 = vector.shape_cast %63 : vector<1x24x34xf32> to vector<24x34xf32>
    %cst_65 = arith.constant dense<0.000000e+00> : vector<24x96xf32>
    %65 = tpu.matmul %64, %59, %cst_65 {dimension_numbers = #tpu.dot_dimension_numbers<[1], [0], [0], [1], [0, 0, 1, 1], [], []>} : vector<24x34xf32>, vector<34x96xf32>, vector<24x96xf32> -> vector<24x96xf32>
    %66 = arith.maximumf %62, %65 : vector<24x96xf32>
    %cst_66 = arith.constant 0.000000e+00 : f32
    %67 = vector.broadcast %cst_66 : f32 to vector<24x96xf32>
    %68 = arith.maximumf %66, %67 : vector<24x96xf32>
    %69 = vector.extract_strided_slice %68 {offsets = [0, 0], sizes = [22, 96], strides = [1, 1]} : vector<24x96xf32> to vector<22x96xf32>
    %c0_67 = arith.constant 0 : index
    %c0_68 = arith.constant 0 : index
    %c0_69 = arith.constant 0 : index
    %70 = vector.load %arg6[%c0_67, %c0_68, %c0_69] : memref<3x96x128xf32, #tpu.memory_space<vmem>>, vector<1x96x128xf32>
    %71 = vector.shape_cast %70 : vector<1x96x128xf32> to vector<96x128xf32>
    %cst_70 = arith.constant dense<0.000000e+00> : vector<22x128xf32>
    %72 = tpu.matmul %69, %71, %cst_70 {dimension_numbers = #tpu.dot_dimension_numbers<[1], [0], [0], [1], [0, 0, 1, 1], [], []>} : vector<22x96xf32>, vector<96x128xf32>, vector<22x128xf32> -> vector<22x128xf32>
    %73 = vector.extract_strided_slice %68 {offsets = [1, 0], sizes = [22, 96], strides = [1, 1]} : vector<24x96xf32> to vector<22x96xf32>
    %c1_71 = arith.constant 1 : index
    %c0_72 = arith.constant 0 : index
    %c0_73 = arith.constant 0 : index
    %74 = vector.load %arg6[%c1_71, %c0_72, %c0_73] : memref<3x96x128xf32, #tpu.memory_space<vmem>>, vector<1x96x128xf32>
    %75 = vector.shape_cast %74 : vector<1x96x128xf32> to vector<96x128xf32>
    %cst_74 = arith.constant dense<0.000000e+00> : vector<22x128xf32>
    %76 = tpu.matmul %73, %75, %cst_74 {dimension_numbers = #tpu.dot_dimension_numbers<[1], [0], [0], [1], [0, 0, 1, 1], [], []>} : vector<22x96xf32>, vector<96x128xf32>, vector<22x128xf32> -> vector<22x128xf32>
    %77 = arith.addf %72, %76 : vector<22x128xf32>
    %78 = vector.extract_strided_slice %68 {offsets = [2, 0], sizes = [22, 96], strides = [1, 1]} : vector<24x96xf32> to vector<22x96xf32>
    %c2_75 = arith.constant 2 : index
    %c0_76 = arith.constant 0 : index
    %c0_77 = arith.constant 0 : index
    %79 = vector.load %arg6[%c2_75, %c0_76, %c0_77] : memref<3x96x128xf32, #tpu.memory_space<vmem>>, vector<1x96x128xf32>
    %80 = vector.shape_cast %79 : vector<1x96x128xf32> to vector<96x128xf32>
    %cst_78 = arith.constant dense<0.000000e+00> : vector<22x128xf32>
    %81 = tpu.matmul %78, %80, %cst_78 {dimension_numbers = #tpu.dot_dimension_numbers<[1], [0], [0], [1], [0, 0, 1, 1], [], []>} : vector<22x96xf32>, vector<96x128xf32>, vector<22x128xf32> -> vector<22x128xf32>
    %82 = arith.addf %77, %81 : vector<22x128xf32>
    %c0_79 = arith.constant 0 : index
    %c0_80 = arith.constant 0 : index
    %83 = vector.load %arg7[%c0_79, %c0_80] : memref<1x128xf32, #tpu.memory_space<vmem>>, vector<1x128xf32>
    %84 = vector.broadcast %83 : vector<1x128xf32> to vector<22x128xf32>
    %85 = arith.addf %82, %84 : vector<22x128xf32>
    %cst_81 = arith.constant 0.000000e+00 : f32
    %86 = vector.broadcast %cst_81 : f32 to vector<22x128xf32>
    %87 = arith.maximumf %85, %86 : vector<22x128xf32>
    %cst_82 = arith.constant 0.000000e+00 : f32
    %88 = vector.broadcast %cst_82 : f32 to vector<4x64xf32>
    %c0_83 = arith.constant 0 : index
    %c0_84 = arith.constant 0 : index
    %c0_85 = arith.constant 0 : index
    %89 = vector.load %arg12[%c0_83, %c0_84, %c0_85] : memref<4x128x32xf32, #tpu.memory_space<vmem>>, vector<1x128x32xf32>
    %90 = vector.shape_cast %89 : vector<1x128x32xf32> to vector<128x32xf32>
    %cst_86 = arith.constant dense<0.000000e+00> : vector<22x32xf32>
    %91 = tpu.matmul %87, %90, %cst_86 {dimension_numbers = #tpu.dot_dimension_numbers<[1], [0], [0], [1], [0, 0, 1, 1], [], []>} : vector<22x128xf32>, vector<128x32xf32>, vector<22x32xf32> -> vector<22x32xf32>
    %c1_87 = arith.constant 1 : index
    %c0_88 = arith.constant 0 : index
    %c0_89 = arith.constant 0 : index
    %92 = vector.load %arg12[%c1_87, %c0_88, %c0_89] : memref<4x128x32xf32, #tpu.memory_space<vmem>>, vector<1x128x32xf32>
    %93 = vector.shape_cast %92 : vector<1x128x32xf32> to vector<128x32xf32>
    %cst_90 = arith.constant dense<0.000000e+00> : vector<22x32xf32>
    %94 = tpu.matmul %87, %93, %cst_90 {dimension_numbers = #tpu.dot_dimension_numbers<[1], [0], [0], [1], [0, 0, 1, 1], [], []>} : vector<22x128xf32>, vector<128x32xf32>, vector<22x32xf32> -> vector<22x32xf32>
    %95 = arith.maximumf %91, %94 : vector<22x32xf32>
    %c2_91 = arith.constant 2 : index
    %c0_92 = arith.constant 0 : index
    %c0_93 = arith.constant 0 : index
    %96 = vector.load %arg12[%c2_91, %c0_92, %c0_93] : memref<4x128x32xf32, #tpu.memory_space<vmem>>, vector<1x128x32xf32>
    %97 = vector.shape_cast %96 : vector<1x128x32xf32> to vector<128x32xf32>
    %cst_94 = arith.constant dense<0.000000e+00> : vector<22x32xf32>
    %98 = tpu.matmul %87, %97, %cst_94 {dimension_numbers = #tpu.dot_dimension_numbers<[1], [0], [0], [1], [0, 0, 1, 1], [], []>} : vector<22x128xf32>, vector<128x32xf32>, vector<22x32xf32> -> vector<22x32xf32>
    %99 = arith.maximumf %95, %98 : vector<22x32xf32>
    %c3 = arith.constant 3 : index
    %c0_95 = arith.constant 0 : index
    %c0_96 = arith.constant 0 : index
    %100 = vector.load %arg12[%c3, %c0_95, %c0_96] : memref<4x128x32xf32, #tpu.memory_space<vmem>>, vector<1x128x32xf32>
    %101 = vector.shape_cast %100 : vector<1x128x32xf32> to vector<128x32xf32>
    %cst_97 = arith.constant dense<0.000000e+00> : vector<22x32xf32>
    %102 = tpu.matmul %87, %101, %cst_97 {dimension_numbers = #tpu.dot_dimension_numbers<[1], [0], [0], [1], [0, 0, 1, 1], [], []>} : vector<22x128xf32>, vector<128x32xf32>, vector<22x32xf32> -> vector<22x32xf32>
    %103 = arith.maximumf %99, %102 : vector<22x32xf32>
    %c0_98 = arith.constant 0 : index
    %c0_99 = arith.constant 0 : index
    %c0_100 = arith.constant 0 : index
    %104 = vector.load %arg15[%c0_98, %c0_99, %c0_100] : memref<4x4x22xf32, #tpu.memory_space<vmem>>, vector<1x4x22xf32>
    %105 = vector.shape_cast %104 : vector<1x4x22xf32> to vector<4x22xf32>
    %cst_101 = arith.constant dense<0.000000e+00> : vector<4x32xf32>
    %106 = tpu.matmul %105, %103, %cst_101 {dimension_numbers = #tpu.dot_dimension_numbers<[1], [0], [0], [1], [0, 0, 1, 1], [], []>} : vector<4x22xf32>, vector<22x32xf32>, vector<4x32xf32> -> vector<4x32xf32>
    %c1_102 = arith.constant 1 : index
    %c0_103 = arith.constant 0 : index
    %c0_104 = arith.constant 0 : index
    %107 = vector.load %arg15[%c1_102, %c0_103, %c0_104] : memref<4x4x22xf32, #tpu.memory_space<vmem>>, vector<1x4x22xf32>
    %108 = vector.shape_cast %107 : vector<1x4x22xf32> to vector<4x22xf32>
    %cst_105 = arith.constant dense<0.000000e+00> : vector<4x32xf32>
    %109 = tpu.matmul %108, %103, %cst_105 {dimension_numbers = #tpu.dot_dimension_numbers<[1], [0], [0], [1], [0, 0, 1, 1], [], []>} : vector<4x22xf32>, vector<22x32xf32>, vector<4x32xf32> -> vector<4x32xf32>
    %110 = arith.maximumf %106, %109 : vector<4x32xf32>
    %c2_106 = arith.constant 2 : index
    %c0_107 = arith.constant 0 : index
    %c0_108 = arith.constant 0 : index
    %111 = vector.load %arg15[%c2_106, %c0_107, %c0_108] : memref<4x4x22xf32, #tpu.memory_space<vmem>>, vector<1x4x22xf32>
    %112 = vector.shape_cast %111 : vector<1x4x22xf32> to vector<4x22xf32>
    %cst_109 = arith.constant dense<0.000000e+00> : vector<4x32xf32>
    %113 = tpu.matmul %112, %103, %cst_109 {dimension_numbers = #tpu.dot_dimension_numbers<[1], [0], [0], [1], [0, 0, 1, 1], [], []>} : vector<4x22xf32>, vector<22x32xf32>, vector<4x32xf32> -> vector<4x32xf32>
    %114 = arith.maximumf %110, %113 : vector<4x32xf32>
    %c3_110 = arith.constant 3 : index
    %c0_111 = arith.constant 0 : index
    %c0_112 = arith.constant 0 : index
    %115 = vector.load %arg15[%c3_110, %c0_111, %c0_112] : memref<4x4x22xf32, #tpu.memory_space<vmem>>, vector<1x4x22xf32>
    %116 = vector.shape_cast %115 : vector<1x4x22xf32> to vector<4x22xf32>
    %cst_113 = arith.constant dense<0.000000e+00> : vector<4x32xf32>
    %117 = tpu.matmul %116, %103, %cst_113 {dimension_numbers = #tpu.dot_dimension_numbers<[1], [0], [0], [1], [0, 0, 1, 1], [], []>} : vector<4x22xf32>, vector<22x32xf32>, vector<4x32xf32> -> vector<4x32xf32>
    %118 = arith.maximumf %114, %117 : vector<4x32xf32>
    %c0_114 = arith.constant 0 : index
    %c0_115 = arith.constant 0 : index
    %119 = vector.load %arg18[%c0_114, %c0_115] : memref<672x64xf32, #tpu.memory_space<vmem>>, vector<32x64xf32>
    %cst_116 = arith.constant dense<0.000000e+00> : vector<4x64xf32>
    %120 = tpu.matmul %118, %119, %cst_116 {dimension_numbers = #tpu.dot_dimension_numbers<[1], [0], [0], [1], [0, 0, 1, 1], [], []>} : vector<4x32xf32>, vector<32x64xf32>, vector<4x64xf32> -> vector<4x64xf32>
    %121 = arith.addf %88, %120 : vector<4x64xf32>
    %c0_117 = arith.constant 0 : index
    %c0_118 = arith.constant 0 : index
    %c0_119 = arith.constant 0 : index
    %122 = vector.load %arg13[%c0_117, %c0_118, %c0_119] : memref<2x128x64xf32, #tpu.memory_space<vmem>>, vector<1x128x64xf32>
    %123 = vector.shape_cast %122 : vector<1x128x64xf32> to vector<128x64xf32>
    %cst_120 = arith.constant dense<0.000000e+00> : vector<22x64xf32>
    %124 = tpu.matmul %87, %123, %cst_120 {dimension_numbers = #tpu.dot_dimension_numbers<[1], [0], [0], [1], [0, 0, 1, 1], [], []>} : vector<22x128xf32>, vector<128x64xf32>, vector<22x64xf32> -> vector<22x64xf32>
    %c1_121 = arith.constant 1 : index
    %c0_122 = arith.constant 0 : index
    %c0_123 = arith.constant 0 : index
    %125 = vector.load %arg13[%c1_121, %c0_122, %c0_123] : memref<2x128x64xf32, #tpu.memory_space<vmem>>, vector<1x128x64xf32>
    %126 = vector.shape_cast %125 : vector<1x128x64xf32> to vector<128x64xf32>
    %cst_124 = arith.constant dense<0.000000e+00> : vector<22x64xf32>
    %127 = tpu.matmul %87, %126, %cst_124 {dimension_numbers = #tpu.dot_dimension_numbers<[1], [0], [0], [1], [0, 0, 1, 1], [], []>} : vector<22x128xf32>, vector<128x64xf32>, vector<22x64xf32> -> vector<22x64xf32>
    %128 = arith.maximumf %124, %127 : vector<22x64xf32>
    %c0_125 = arith.constant 0 : index
    %c0_126 = arith.constant 0 : index
    %c0_127 = arith.constant 0 : index
    %129 = vector.load %arg16[%c0_125, %c0_126, %c0_127] : memref<4x4x22xf32, #tpu.memory_space<vmem>>, vector<1x4x22xf32>
    %130 = vector.shape_cast %129 : vector<1x4x22xf32> to vector<4x22xf32>
    %cst_128 = arith.constant dense<0.000000e+00> : vector<4x64xf32>
    %131 = tpu.matmul %130, %128, %cst_128 {dimension_numbers = #tpu.dot_dimension_numbers<[1], [0], [0], [1], [0, 0, 1, 1], [], []>} : vector<4x22xf32>, vector<22x64xf32>, vector<4x64xf32> -> vector<4x64xf32>
    %c1_129 = arith.constant 1 : index
    %c0_130 = arith.constant 0 : index
    %c0_131 = arith.constant 0 : index
    %132 = vector.load %arg16[%c1_129, %c0_130, %c0_131] : memref<4x4x22xf32, #tpu.memory_space<vmem>>, vector<1x4x22xf32>
    %133 = vector.shape_cast %132 : vector<1x4x22xf32> to vector<4x22xf32>
    %cst_132 = arith.constant dense<0.000000e+00> : vector<4x64xf32>
    %134 = tpu.matmul %133, %128, %cst_132 {dimension_numbers = #tpu.dot_dimension_numbers<[1], [0], [0], [1], [0, 0, 1, 1], [], []>} : vector<4x22xf32>, vector<22x64xf32>, vector<4x64xf32> -> vector<4x64xf32>
    %135 = arith.maximumf %131, %134 : vector<4x64xf32>
    %c32 = arith.constant 32 : index
    %c0_133 = arith.constant 0 : index
    %136 = vector.load %arg18[%c32, %c0_133] : memref<672x64xf32, #tpu.memory_space<vmem>>, vector<64x64xf32>
    %cst_134 = arith.constant dense<0.000000e+00> : vector<4x64xf32>
    %137 = tpu.matmul %135, %136, %cst_134 {dimension_numbers = #tpu.dot_dimension_numbers<[1], [0], [0], [1], [0, 0, 1, 1], [], []>} : vector<4x64xf32>, vector<64x64xf32>, vector<4x64xf32> -> vector<4x64xf32>
    %138 = arith.addf %121, %137 : vector<4x64xf32>
    %c2_135 = arith.constant 2 : index
    %c0_136 = arith.constant 0 : index
    %c0_137 = arith.constant 0 : index
    %139 = vector.load %arg16[%c2_135, %c0_136, %c0_137] : memref<4x4x22xf32, #tpu.memory_space<vmem>>, vector<1x4x22xf32>
    %140 = vector.shape_cast %139 : vector<1x4x22xf32> to vector<4x22xf32>
    %cst_138 = arith.constant dense<0.000000e+00> : vector<4x64xf32>
    %141 = tpu.matmul %140, %128, %cst_138 {dimension_numbers = #tpu.dot_dimension_numbers<[1], [0], [0], [1], [0, 0, 1, 1], [], []>} : vector<4x22xf32>, vector<22x64xf32>, vector<4x64xf32> -> vector<4x64xf32>
    %c3_139 = arith.constant 3 : index
    %c0_140 = arith.constant 0 : index
    %c0_141 = arith.constant 0 : index
    %142 = vector.load %arg16[%c3_139, %c0_140, %c0_141] : memref<4x4x22xf32, #tpu.memory_space<vmem>>, vector<1x4x22xf32>
    %143 = vector.shape_cast %142 : vector<1x4x22xf32> to vector<4x22xf32>
    %cst_142 = arith.constant dense<0.000000e+00> : vector<4x64xf32>
    %144 = tpu.matmul %143, %128, %cst_142 {dimension_numbers = #tpu.dot_dimension_numbers<[1], [0], [0], [1], [0, 0, 1, 1], [], []>} : vector<4x22xf32>, vector<22x64xf32>, vector<4x64xf32> -> vector<4x64xf32>
    %145 = arith.maximumf %141, %144 : vector<4x64xf32>
    %c96 = arith.constant 96 : index
    %c0_143 = arith.constant 0 : index
    %146 = vector.load %arg18[%c96, %c0_143] : memref<672x64xf32, #tpu.memory_space<vmem>>, vector<64x64xf32>
    %cst_144 = arith.constant dense<0.000000e+00> : vector<4x64xf32>
    %147 = tpu.matmul %145, %146, %cst_144 {dimension_numbers = #tpu.dot_dimension_numbers<[1], [0], [0], [1], [0, 0, 1, 1], [], []>} : vector<4x64xf32>, vector<64x64xf32>, vector<4x64xf32> -> vector<4x64xf32>
    %148 = arith.addf %138, %147 : vector<4x64xf32>
    %c0_145 = arith.constant 0 : index
    %c0_146 = arith.constant 0 : index
    %c0_147 = arith.constant 0 : index
    %149 = vector.load %arg17[%c0_145, %c0_146, %c0_147] : memref<4x4x22xf32, #tpu.memory_space<vmem>>, vector<1x4x22xf32>
    %150 = vector.shape_cast %149 : vector<1x4x22xf32> to vector<4x22xf32>
    %cst_148 = arith.constant dense<0.000000e+00> : vector<4x128xf32>
    %151 = tpu.matmul %150, %87, %cst_148 {dimension_numbers = #tpu.dot_dimension_numbers<[1], [0], [0], [1], [0, 0, 1, 1], [], []>} : vector<4x22xf32>, vector<22x128xf32>, vector<4x128xf32> -> vector<4x128xf32>
    %c160 = arith.constant 160 : index
    %c0_149 = arith.constant 0 : index
    %152 = vector.load %arg18[%c160, %c0_149] : memref<672x64xf32, #tpu.memory_space<vmem>>, vector<128x64xf32>
    %cst_150 = arith.constant dense<0.000000e+00> : vector<4x64xf32>
    %153 = tpu.matmul %151, %152, %cst_150 {dimension_numbers = #tpu.dot_dimension_numbers<[1], [0], [0], [1], [0, 0, 1, 1], [], []>} : vector<4x128xf32>, vector<128x64xf32>, vector<4x64xf32> -> vector<4x64xf32>
    %154 = arith.addf %148, %153 : vector<4x64xf32>
    %c1_151 = arith.constant 1 : index
    %c0_152 = arith.constant 0 : index
    %c0_153 = arith.constant 0 : index
    %155 = vector.load %arg17[%c1_151, %c0_152, %c0_153] : memref<4x4x22xf32, #tpu.memory_space<vmem>>, vector<1x4x22xf32>
    %156 = vector.shape_cast %155 : vector<1x4x22xf32> to vector<4x22xf32>
    %cst_154 = arith.constant dense<0.000000e+00> : vector<4x128xf32>
    %157 = tpu.matmul %156, %87, %cst_154 {dimension_numbers = #tpu.dot_dimension_numbers<[1], [0], [0], [1], [0, 0, 1, 1], [], []>} : vector<4x22xf32>, vector<22x128xf32>, vector<4x128xf32> -> vector<4x128xf32>
    %c288 = arith.constant 288 : index
    %c0_155 = arith.constant 0 : index
    %158 = vector.load %arg18[%c288, %c0_155] : memref<672x64xf32, #tpu.memory_space<vmem>>, vector<128x64xf32>
    %cst_156 = arith.constant dense<0.000000e+00> : vector<4x64xf32>
    %159 = tpu.matmul %157, %158, %cst_156 {dimension_numbers = #tpu.dot_dimension_numbers<[1], [0], [0], [1], [0, 0, 1, 1], [], []>} : vector<4x128xf32>, vector<128x64xf32>, vector<4x64xf32> -> vector<4x64xf32>
    %160 = arith.addf %154, %159 : vector<4x64xf32>
    %c2_157 = arith.constant 2 : index
    %c0_158 = arith.constant 0 : index
    %c0_159 = arith.constant 0 : index
    %161 = vector.load %arg17[%c2_157, %c0_158, %c0_159] : memref<4x4x22xf32, #tpu.memory_space<vmem>>, vector<1x4x22xf32>
    %162 = vector.shape_cast %161 : vector<1x4x22xf32> to vector<4x22xf32>
    %cst_160 = arith.constant dense<0.000000e+00> : vector<4x128xf32>
    %163 = tpu.matmul %162, %87, %cst_160 {dimension_numbers = #tpu.dot_dimension_numbers<[1], [0], [0], [1], [0, 0, 1, 1], [], []>} : vector<4x22xf32>, vector<22x128xf32>, vector<4x128xf32> -> vector<4x128xf32>
    %c416 = arith.constant 416 : index
    %c0_161 = arith.constant 0 : index
    %164 = vector.load %arg18[%c416, %c0_161] : memref<672x64xf32, #tpu.memory_space<vmem>>, vector<128x64xf32>
    %cst_162 = arith.constant dense<0.000000e+00> : vector<4x64xf32>
    %165 = tpu.matmul %163, %164, %cst_162 {dimension_numbers = #tpu.dot_dimension_numbers<[1], [0], [0], [1], [0, 0, 1, 1], [], []>} : vector<4x128xf32>, vector<128x64xf32>, vector<4x64xf32> -> vector<4x64xf32>
    %166 = arith.addf %160, %165 : vector<4x64xf32>
    %c3_163 = arith.constant 3 : index
    %c0_164 = arith.constant 0 : index
    %c0_165 = arith.constant 0 : index
    %167 = vector.load %arg17[%c3_163, %c0_164, %c0_165] : memref<4x4x22xf32, #tpu.memory_space<vmem>>, vector<1x4x22xf32>
    %168 = vector.shape_cast %167 : vector<1x4x22xf32> to vector<4x22xf32>
    %cst_166 = arith.constant dense<0.000000e+00> : vector<4x128xf32>
    %169 = tpu.matmul %168, %87, %cst_166 {dimension_numbers = #tpu.dot_dimension_numbers<[1], [0], [0], [1], [0, 0, 1, 1], [], []>} : vector<4x22xf32>, vector<22x128xf32>, vector<4x128xf32> -> vector<4x128xf32>
    %c544 = arith.constant 544 : index
    %c0_167 = arith.constant 0 : index
    %170 = vector.load %arg18[%c544, %c0_167] : memref<672x64xf32, #tpu.memory_space<vmem>>, vector<128x64xf32>
    %cst_168 = arith.constant dense<0.000000e+00> : vector<4x64xf32>
    %171 = tpu.matmul %169, %170, %cst_168 {dimension_numbers = #tpu.dot_dimension_numbers<[1], [0], [0], [1], [0, 0, 1, 1], [], []>} : vector<4x128xf32>, vector<128x64xf32>, vector<4x64xf32> -> vector<4x64xf32>
    %172 = arith.addf %166, %171 : vector<4x64xf32>
    %c0_169 = arith.constant 0 : index
    %c0_170 = arith.constant 0 : index
    %173 = vector.load %arg19[%c0_169, %c0_170] : memref<1x64xf32, #tpu.memory_space<vmem>>, vector<1x64xf32>
    %174 = vector.broadcast %173 : vector<1x64xf32> to vector<4x64xf32>
    %175 = arith.addf %172, %174 : vector<4x64xf32>
    %cst_171 = arith.constant 0.000000e+00 : f32
    %176 = vector.broadcast %cst_171 : f32 to vector<4x64xf32>
    %177 = arith.maximumf %175, %176 : vector<4x64xf32>
    %c0_172 = arith.constant 0 : index
    %c0_173 = arith.constant 0 : index
    %178 = vector.load %arg20[%c0_172, %c0_173] : memref<64x128xf32, #tpu.memory_space<vmem>>, vector<64x128xf32>
    %cst_174 = arith.constant dense<0.000000e+00> : vector<4x128xf32>
    %179 = tpu.matmul %177, %178, %cst_174 {dimension_numbers = #tpu.dot_dimension_numbers<[1], [0], [0], [1], [0, 0, 1, 1], [], []>} : vector<4x64xf32>, vector<64x128xf32>, vector<4x128xf32> -> vector<4x128xf32>
    %c0_175 = arith.constant 0 : index
    %c0_176 = arith.constant 0 : index
    %180 = vector.load %arg21[%c0_175, %c0_176] : memref<1x128xf32, #tpu.memory_space<vmem>>, vector<1x128xf32>
    %181 = vector.broadcast %180 : vector<1x128xf32> to vector<4x128xf32>
    %182 = arith.addf %179, %181 : vector<4x128xf32>
    %c0_177 = arith.constant 0 : index
    %c0_178 = arith.constant 0 : index
    %c0_179 = arith.constant 0 : index
    %183 = vector.load %arg22[%c0_177, %c0_178, %c0_179] : memref<1x4x128xf32, #tpu.memory_space<vmem>>, vector<1x4x128xf32>
    %184 = vector.shape_cast %183 : vector<1x4x128xf32> to vector<4x128xf32>
    %185 = vector.shape_cast %182 : vector<4x128xf32> to vector<1x4x128xf32>
    tpu.vector_store %arg22[%c0_177, %c0_178, %c0_179], %185 {strides = array<i32>} : memref<1x4x128xf32, #tpu.memory_space<vmem>>, vector<1x4x128xf32>,
    return
  }
  func.func @transform_0(%arg0: i32) -> (i32, i32, i32) {
    %c0_i32 = arith.constant 0 : i32
    %c0_i32_0 = arith.constant 0 : i32
    %c0_i32_1 = arith.constant 0 : i32
    return %arg0, %c0_i32, %c0_i32_0 : i32, i32, i32
  }
  func.func @transform_1(%arg0: i32) -> (i32, i32, i32) {
    %c0_i32 = arith.constant 0 : i32
    %c0_i32_0 = arith.constant 0 : i32
    %c0_i32_1 = arith.constant 0 : i32
    %c0_i32_2 = arith.constant 0 : i32
    return %c0_i32, %c0_i32_0, %c0_i32_1 : i32, i32, i32
  }
  func.func @transform_2(%arg0: i32) -> (i32, i32) {
    %c0_i32 = arith.constant 0 : i32
    %c0_i32_0 = arith.constant 0 : i32
    %c0_i32_1 = arith.constant 0 : i32
    return %c0_i32, %c0_i32_0 : i32, i32
  }
  func.func @transform_3(%arg0: i32) -> (i32, i32, i32) {
    %c0_i32 = arith.constant 0 : i32
    %c0_i32_0 = arith.constant 0 : i32
    %c0_i32_1 = arith.constant 0 : i32
    %c0_i32_2 = arith.constant 0 : i32
    return %c0_i32, %c0_i32_0, %c0_i32_1 : i32, i32, i32
  }
  func.func @transform_4(%arg0: i32) -> (i32, i32) {
    %c0_i32 = arith.constant 0 : i32
    %c0_i32_0 = arith.constant 0 : i32
    %c0_i32_1 = arith.constant 0 : i32
    return %c0_i32, %c0_i32_0 : i32, i32
  }
  func.func @transform_5(%arg0: i32) -> (i32, i32, i32) {
    %c0_i32 = arith.constant 0 : i32
    %c0_i32_0 = arith.constant 0 : i32
    %c0_i32_1 = arith.constant 0 : i32
    %c0_i32_2 = arith.constant 0 : i32
    return %c0_i32, %c0_i32_0, %c0_i32_1 : i32, i32, i32
  }
  func.func @transform_6(%arg0: i32) -> (i32, i32) {
    %c0_i32 = arith.constant 0 : i32
    %c0_i32_0 = arith.constant 0 : i32
    %c0_i32_1 = arith.constant 0 : i32
    return %c0_i32, %c0_i32_0 : i32, i32
  }
  func.func @transform_7(%arg0: i32) -> (i32, i32, i32) {
    %c0_i32 = arith.constant 0 : i32
    %c0_i32_0 = arith.constant 0 : i32
    %c0_i32_1 = arith.constant 0 : i32
    %c0_i32_2 = arith.constant 0 : i32
    return %c0_i32, %c0_i32_0, %c0_i32_1 : i32, i32, i32
  }
  func.func @transform_8(%arg0: i32) -> (i32, i32, i32) {
    %c0_i32 = arith.constant 0 : i32
    %c0_i32_0 = arith.constant 0 : i32
    %c0_i32_1 = arith.constant 0 : i32
    %c0_i32_2 = arith.constant 0 : i32
    return %c0_i32, %c0_i32_0, %c0_i32_1 : i32, i32, i32
  }
  func.func @transform_9(%arg0: i32) -> (i32, i32, i32) {
    %c0_i32 = arith.constant 0 : i32
    %c0_i32_0 = arith.constant 0 : i32
    %c0_i32_1 = arith.constant 0 : i32
    %c0_i32_2 = arith.constant 0 : i32
    return %c0_i32, %c0_i32_0, %c0_i32_1 : i32, i32, i32
  }
  func.func @transform_10(%arg0: i32) -> (i32, i32, i32) {
    %c0_i32 = arith.constant 0 : i32
    %c0_i32_0 = arith.constant 0 : i32
    %c0_i32_1 = arith.constant 0 : i32
    %c0_i32_2 = arith.constant 0 : i32
    return %c0_i32, %c0_i32_0, %c0_i32_1 : i32, i32, i32
  }
  func.func @transform_11(%arg0: i32) -> (i32, i32, i32) {
    %c0_i32 = arith.constant 0 : i32
    %c0_i32_0 = arith.constant 0 : i32
    %c0_i32_1 = arith.constant 0 : i32
    %c0_i32_2 = arith.constant 0 : i32
    return %c0_i32, %c0_i32_0, %c0_i32_1 : i32, i32, i32
  }
  func.func @transform_12(%arg0: i32) -> (i32, i32, i32) {
    %c0_i32 = arith.constant 0 : i32
    %c0_i32_0 = arith.constant 0 : i32
    %c0_i32_1 = arith.constant 0 : i32
    %c0_i32_2 = arith.constant 0 : i32
    return %c0_i32, %c0_i32_0, %c0_i32_1 : i32, i32, i32
  }
  func.func @transform_13(%arg0: i32) -> (i32, i32, i32) {
    %c0_i32 = arith.constant 0 : i32
    %c0_i32_0 = arith.constant 0 : i32
    %c0_i32_1 = arith.constant 0 : i32
    %c0_i32_2 = arith.constant 0 : i32
    return %c0_i32, %c0_i32_0, %c0_i32_1 : i32, i32, i32
  }
  func.func @transform_14(%arg0: i32) -> (i32, i32, i32) {
    %c0_i32 = arith.constant 0 : i32
    %c0_i32_0 = arith.constant 0 : i32
    %c0_i32_1 = arith.constant 0 : i32
    %c0_i32_2 = arith.constant 0 : i32
    return %c0_i32, %c0_i32_0, %c0_i32_1 : i32, i32, i32
  }
  func.func @transform_15(%arg0: i32) -> (i32, i32, i32) {
    %c0_i32 = arith.constant 0 : i32
    %c0_i32_0 = arith.constant 0 : i32
    %c0_i32_1 = arith.constant 0 : i32
    %c0_i32_2 = arith.constant 0 : i32
    return %c0_i32, %c0_i32_0, %c0_i32_1 : i32, i32, i32
  }
  func.func @transform_16(%arg0: i32) -> (i32, i32, i32) {
    %c0_i32 = arith.constant 0 : i32
    %c0_i32_0 = arith.constant 0 : i32
    %c0_i32_1 = arith.constant 0 : i32
    %c0_i32_2 = arith.constant 0 : i32
    return %c0_i32, %c0_i32_0, %c0_i32_1 : i32, i32, i32
  }
  func.func @transform_17(%arg0: i32) -> (i32, i32) {
    %c0_i32 = arith.constant 0 : i32
    %c0_i32_0 = arith.constant 0 : i32
    %c0_i32_1 = arith.constant 0 : i32
    return %c0_i32, %c0_i32_0 : i32, i32
  }
  func.func @transform_18(%arg0: i32) -> (i32, i32) {
    %c0_i32 = arith.constant 0 : i32
    %c0_i32_0 = arith.constant 0 : i32
    %c0_i32_1 = arith.constant 0 : i32
    return %c0_i32, %c0_i32_0 : i32, i32
  }
  func.func @transform_19(%arg0: i32) -> (i32, i32) {
    %c0_i32 = arith.constant 0 : i32
    %c0_i32_0 = arith.constant 0 : i32
    %c0_i32_1 = arith.constant 0 : i32
    return %c0_i32, %c0_i32_0 : i32, i32
  }
  func.func @transform_20(%arg0: i32) -> (i32, i32) {
    %c0_i32 = arith.constant 0 : i32
    %c0_i32_0 = arith.constant 0 : i32
    %c0_i32_1 = arith.constant 0 : i32
    return %c0_i32, %c0_i32_0 : i32, i32
  }
  func.func @transform_21(%arg0: i32) -> (i32, i32, i32) {
    %c0_i32 = arith.constant 0 : i32
    %c0_i32_0 = arith.constant 0 : i32
    %c0_i32_1 = arith.constant 0 : i32
    return %arg0, %c0_i32, %c0_i32_0 : i32, i32, i32
  }
}

</mosaic_0001>

<llo_original>
// kernel: forward.1
$region0: #{forward.1}
  #allocation0 [shape = 'u32[]', space=smem, size = 0x4, offset = 0x4, fixed_abs, tag = 'smem constant byte address 0x4 - core index']
  #allocation1 [shape = 'u32[72,128]{1,0:T(1,128)}', space=vmem, size = 0x9000, scoped, tag = 'internal scratch']
  %s0 = inlined_call_operand.vmem [shape: f32[2,56,42], index: 0, kind: input, shape index: {}]
  %s1 = inlined_call_operand.hbm [shape: f32[3,42,96], index: 1, kind: input, shape index: {}]
  %s2 = inlined_call_operand.vmem [shape: f32[1,96], index: 2, kind: input, shape index: {}]
  %s3 = inlined_call_operand.hbm [shape: f32[3,72,112], index: 3, kind: input, shape index: {}]
  %s4 = inlined_call_operand.vmem [shape: f32[1,112], index: 4, kind: input, shape index: {}]
  %s5 = inlined_call_operand.vmem [shape: f32[3,96,128], index: 5, kind: input, shape index: {}]
  %s6 = inlined_call_operand.vmem [shape: f32[1,128], index: 6, kind: input, shape index: {}]
  %s7 = inlined_call_operand.vmem [shape: f32[2,36,54], index: 7, kind: input, shape index: {}]
  %s8 = inlined_call_operand.hbm [shape: f32[2,96,72], index: 8, kind: input, shape index: {}]
  %s9 = inlined_call_operand.hbm [shape: f32[2,24,34], index: 9, kind: input, shape index: {}]
  %s10 = inlined_call_operand.hbm [shape: f32[2,112,96], index: 10, kind: input, shape index: {}]
  %s11 = inlined_call_operand.vmem [shape: f32[4,128,32], index: 11, kind: input, shape index: {}]
  %s12 = inlined_call_operand.vmem [shape: f32[2,128,64], index: 12, kind: input, shape index: {}]
  %s13 = inlined_call_operand.hbm [shape: f32[1,128,128], index: 13, kind: input, shape index: {}]
  %s14 = inlined_call_operand.hbm [shape: f32[4,4,22], index: 14, kind: input, shape index: {}, may-alias: {14,15,16}]
  %s15 = inlined_call_operand.hbm [shape: f32[4,4,22], index: 15, kind: input, shape index: {}, may-alias: {14,15,16}]
  %s16 = inlined_call_operand.hbm [shape: f32[4,4,22], index: 16, kind: input, shape index: {}, may-alias: {14,15,16}]
  %s17 = inlined_call_operand.vmem [shape: f32[672,64], index: 17, kind: input, shape index: {}]
  %s18 = inlined_call_operand.vmem [shape: f32[1,64], index: 18, kind: input, shape index: {}]
  %s19 = inlined_call_operand.hbm [shape: f32[64,128], index: 19, kind: input, shape index: {}]
  %s20 = inlined_call_operand.vmem [shape: f32[1,128], index: 20, kind: input, shape index: {}]
  %s21 = inlined_call_operand.hbm [shape: f32[2,4,128], index: 21, kind: output, shape index: {}]
  %s22 = sld [smem:[#allocation0]]
  $region157: #{forward.1} parent=0
    _
  %s24 = ssub.s32 1, %s22
  %s25 = scalar_select 0, %s24, %s22
  $region1: #{forward.1} parent=0
    #allocation2 [shape = 'u8[73728]{0}', space=vmem, size = 0x12000, scoped, tag = 'input window, operand 1, single buffered']
    #allocation3 [shape = 's32[2]{0}', space=sflag, size = 0x8, scoped, tag = 'scoped memory for forward.1']
    #allocation4 [shape = 's32[2]{0}', space=sflag, size = 0x8, scoped, tag = 'scoped memory for forward.1']
    #allocation5 [shape = 'u8[110592]{0}', space=vmem, size = 0x1b000, scoped, tag = 'input window, operand 3, single buffered']
    #allocation6 [shape = 's32[1]{0}', space=sflag, size = 0x4, scoped, tag = 'scoped memory for forward.1']
    #allocation7 [shape = 'u8[98304]{0}', space=vmem, size = 0x18000, scoped, tag = 'input window, operand 8, single buffered']
    #allocation8 [shape = 'u8[24576]{0}', space=vmem, size = 0x6000, scoped, tag = 'input window, operand 9, single buffered']
    #allocation9 [shape = 's32[1]{0}', space=sflag, size = 0x4, scoped, tag = 'scoped memory for forward.1']
    #allocation10 [shape = 'u8[114688]{0}', space=vmem, size = 0x1c000, scoped, tag = 'input window, operand 10, single buffered']
    #allocation11 [shape = 'u8[65536]{0}', space=vmem, size = 0x10000, scoped, tag = 'input window, operand 13, single buffered']
    #allocation12 [shape = 's32[1]{0}', space=sflag, size = 0x4, scoped, tag = 'scoped memory for forward.1']
    #allocation13 [shape = 'u8[8192]{0}', space=vmem, size = 0x2000, scoped, tag = 'input window, operand 14, single buffered']
    #allocation14 [shape = 'u8[8192]{0}', space=vmem, size = 0x2000, scoped, tag = 'input window, operand 15, single buffered']
    #allocation15 [shape = 's32[1]{0}', space=sflag, size = 0x4, scoped, tag = 'scoped memory for forward.1']
    #allocation16 [shape = 'u8[8192]{0}', space=vmem, size = 0x2000, scoped, tag = 'input window, operand 16, single buffered']
    #allocation17 [shape = 'u8[32768]{0}', space=vmem, size = 0x8000, scoped, tag = 'input window, operand 19, single buffered']
    #allocation18 [shape = 's32[1]{0}', space=sflag, size = 0x4, scoped, tag = 'scoped memory for forward.1']
    #allocation19 [shape = 'u8[4096]{0}', space=vmem, size = 0x1000, scoped, tag = 'output window, operand 0']
    %26 = vsyncpa [#allocation3], 0
    %27 = vsyncpa [#allocation6], 0
    %28 = vsyncpa [#allocation9], 0
    %29 = vsyncpa [#allocation12], 0
    %30 = vsyncpa [#allocation15], 0
    %31 = vsyncpa [#allocation18], 0
    %32 = vsyncpa [#allocation4], 0
    %s33 = scalar_lea.sflag [#allocation4], 1
    %34 = vsyncpa %s33, 0
    loop: start=0, step=1, limit=4
    $region2: #{forward.1} parent=1 // loop_pre_header
      _
    $region3: #{forward.1} parent=1 // loop_header
      %s36 = sphi 0, %s40
      %p37 = scmp.ge.s32.totalorder %s36, 4
      %s46 = sphi 0, %s48
      %s49 = sphi 0, %s46
      %s50 = sphi 0, %s49
      %s66 = sphi 0, %s50
      %s70 = sphi 0, %s70
      %s72 = sphi 0, %s70
      %s73 = sphi 0, %s72
      %s87 = sphi 0, %s73
      %s91 = sphi 0, %s91
      %s93 = sphi 0, %s91
      %s94 = sphi 0, %s93
      %s108 = sphi 0, %s94
      %s112 = sphi 0, %s112
      %s114 = sphi 0, %s112
      %s115 = sphi 0, %s114
      %s129 = sphi 0, %s115
      %s133 = sphi 0, %s133
      %s135 = sphi 0, %s133
      %s136 = sphi 0, %s135
      %s150 = sphi 0, %s136
      %s154 = sphi 0, %s154
      %s156 = sphi 0, %s154
      %s157 = sphi 0, %s156
      %s171 = sphi 0, %s157
      %s175 = sphi 0, %s175
      %s177 = sphi 0, %s175
      %s178 = sphi 0, %s177
      %s192 = sphi 0, %s178
      %s196 = sphi 0, %s196
      %s198 = sphi 0, %s196
      %s199 = sphi 0, %s198
      %s213 = sphi 0, %s199
      %s217 = sphi 0, %s217
      %s219 = sphi 0, %s217
      %s220 = sphi 0, %s219
      %s234 = sphi 0, %s220
      %s238 = sphi 0, %s238
      %s240 = sphi 0, %s238
      %s241 = sphi 0, %s240
      %s255 = sphi 0, %s241
      %s259 = sphi 0, %s259
      %s261 = sphi 0, %s259
      %s262 = sphi 0, %s261
      %s276 = sphi 0, %s262
      %s280 = sphi 0, %s280
      %s282 = sphi 0, %s280
      %s283 = sphi 0, %s282
      %s297 = sphi 0, %s283
      %s301 = sphi 0, %s301
      %s303 = sphi 0, %s301
      %s304 = sphi 0, %s303
      %s318 = sphi 0, %s304
      %s322 = sphi 0, %s322
      %s324 = sphi 0, %s322
      %s325 = sphi 0, %s324
      %s339 = sphi 0, %s325
      %s343 = sphi 0, %s343
      %s345 = sphi 0, %s343
      %s346 = sphi 0, %s345
      %s360 = sphi 0, %s346
      %s364 = sphi 0, %s364
      %s366 = sphi 0, %s364
      %s367 = sphi 0, %s366
      %s381 = sphi 0, %s367
      %s385 = sphi 0, %s385
      %s387 = sphi 0, %s385
      %s388 = sphi 0, %s387
      %s402 = sphi 0, %s388
      %s406 = sphi 0, %s406
      %s408 = sphi 0, %s406
      %s409 = sphi 0, %s408
      %s423 = sphi 0, %s409
      %s427 = sphi 0, %s427
      %s429 = sphi 0, %s427
      %s430 = sphi 0, %s429
      %s444 = sphi 0, %s430
      %s448 = sphi 0, %s448
      %s450 = sphi 0, %s448
      %s451 = sphi 0, %s450
      %s465 = sphi 0, %s451
      %s469 = sphi 0, %s469
      %s471 = sphi 0, %s469
      %s472 = sphi 0, %s471
      %s486 = sphi 0, %s472
      %s492 = sphi 0, %s494
      %s495 = sphi 0, %s492
      %s496 = sphi 0, %s495
      %s512 = sphi 0, %s496
    $region4: #{forward.1} parent=1 // loop_header_branch
      %39 = sbr.rel (%p37) target = $region8
    $region5: #{forward.1} parent=1 // loop_body
      %s41 = ssub.s32 %s36, 1
      %s42 = ssub.s32 %s36, 2
      %s43 = sadd.s32 %s36, 1
      %s44 = ssub.s32 %s36, %s43
      %p45 = scmp.eq.s32.totalorder %s44, 0
      %s47 = sadd.s32 %s46, 1
      %s48 = scalar_select %p45, %s46, %s47
      %p51 = pneg %p45
      %p52 = scmp.eq.s32.totalorder %s36, 1
      %p53 = por %p51, %p52
      %p54 = scmp.ne.s32.totalorder %s46, %s49
      %p55 = scmp.eq.s32.totalorder %s36, 0
      %p56 = por %p54, %p55
      %p57 = scmp.ne.s32.totalorder %s46, %s49
      %p58 = scmp.eq.s32.totalorder %s41, 1
      %p59 = por %p57, %p58
      %p60 = scmp.ne.s32.totalorder %s49, %s50
      %p61 = scmp.eq.s32.totalorder %s41, 0
      %p62 = por %p60, %p61
      %p63 = scmp.ne.s32.totalorder %s49, %s50
      %p64 = scmp.eq.s32.totalorder %s42, 1
      %p65 = por %p63, %p64
      %p67 = scmp.ne.s32.totalorder %s50, %s66
      %p68 = scmp.eq.s32.totalorder %s42, 0
      %p69 = por %p67, %p68
      %s71 = sadd.s32 %s70, 1
      %p74 = scmp.eq.s32.totalorder %s36, 1
      %p75 = scmp.ne.s32.totalorder %s70, %s72
      %p76 = scmp.eq.s32.totalorder %s36, 0
      %p77 = por %p75, %p76
      %p78 = scmp.ne.s32.totalorder %s70, %s72
      %p79 = scmp.eq.s32.totalorder %s41, 1
      %p80 = por %p78, %p79
      %p81 = scmp.ne.s32.totalorder %s72, %s73
      %p82 = scmp.eq.s32.totalorder %s41, 0
      %p83 = por %p81, %p82
      %p84 = scmp.ne.s32.totalorder %s72, %s73
      %p85 = scmp.eq.s32.totalorder %s42, 1
      %p86 = por %p84, %p85
      %p88 = scmp.ne.s32.totalorder %s73, %s87
      %p89 = scmp.eq.s32.totalorder %s42, 0
      %p90 = por %p88, %p89
      %s92 = sadd.s32 %s91, 1
      %p95 = scmp.eq.s32.totalorder %s36, 1
      %p96 = scmp.ne.s32.totalorder %s91, %s93
      %p97 = scmp.eq.s32.totalorder %s36, 0
      %p98 = por %p96, %p97
      %p99 = scmp.ne.s32.totalorder %s91, %s93
      %p100 = scmp.eq.s32.totalorder %s41, 1
      %p101 = por %p99, %p100
      %p102 = scmp.ne.s32.totalorder %s93, %s94
      %p103 = scmp.eq.s32.totalorder %s41, 0
      %p104 = por %p102, %p103
      %p105 = scmp.ne.s32.totalorder %s93, %s94
      %p106 = scmp.eq.s32.totalorder %s42, 1
      %p107 = por %p105, %p106
      %p109 = scmp.ne.s32.totalorder %s94, %s108
      %p110 = scmp.eq.s32.totalorder %s42, 0
      %p111 = por %p109, %p110
      %s113 = sadd.s32 %s112, 1
      %p116 = scmp.eq.s32.totalorder %s36, 1
      %p117 = scmp.ne.s32.totalorder %s112, %s114
      %p118 = scmp.eq.s32.totalorder %s36, 0
      %p119 = por %p117, %p118
      %p120 = scmp.ne.s32.totalorder %s112, %s114
      %p121 = scmp.eq.s32.totalorder %s41, 1
      %p122 = por %p120, %p121
      %p123 = scmp.ne.s32.totalorder %s114, %s115
      %p124 = scmp.eq.s32.totalorder %s41, 0
      %p125 = por %p123, %p124
      %p126 = scmp.ne.s32.totalorder %s114, %s115
      %p127 = scmp.eq.s32.totalorder %s42, 1
      %p128 = por %p126, %p127
      %p130 = scmp.ne.s32.totalorder %s115, %s129
      %p131 = scmp.eq.s32.totalorder %s42, 0
      %p132 = por %p130, %p131
      %s134 = sadd.s32 %s133, 1
      %p137 = scmp.eq.s32.totalorder %s36, 1
      %p138 = scmp.ne.s32.totalorder %s133, %s135
      %p139 = scmp.eq.s32.totalorder %s36, 0
      %p140 = por %p138, %p139
      %p141 = scmp.ne.s32.totalorder %s133, %s135
      %p142 = scmp.eq.s32.totalorder %s41, 1
      %p143 = por %p141, %p142
      %p144 = scmp.ne.s32.totalorder %s135, %s136
      %p145 = scmp.eq.s32.totalorder %s41, 0
      %p146 = por %p144, %p145
      %p147 = scmp.ne.s32.totalorder %s135, %s136
      %p148 = scmp.eq.s32.totalorder %s42, 1
      %p149 = por %p147, %p148
      %p151 = scmp.ne.s32.totalorder %s136, %s150
      %p152 = scmp.eq.s32.totalorder %s42, 0
      %p153 = por %p151, %p152
      %s155 = sadd.s32 %s154, 1
      %p158 = scmp.eq.s32.totalorder %s36, 1
      %p159 = scmp.ne.s32.totalorder %s154, %s156
      %p160 = scmp.eq.s32.totalorder %s36, 0
      %p161 = por %p159, %p160
      %p162 = scmp.ne.s32.totalorder %s154, %s156
      %p163 = scmp.eq.s32.totalorder %s41, 1
      %p164 = por %p162, %p163
      %p165 = scmp.ne.s32.totalorder %s156, %s157
      %p166 = scmp.eq.s32.totalorder %s41, 0
      %p167 = por %p165, %p166
      %p168 = scmp.ne.s32.totalorder %s156, %s157
      %p169 = scmp.eq.s32.totalorder %s42, 1
      %p170 = por %p168, %p169
      %p172 = scmp.ne.s32.totalorder %s157, %s171
      %p173 = scmp.eq.s32.totalorder %s42, 0
      %p174 = por %p172, %p173
      %s176 = sadd.s32 %s175, 1
      %p179 = scmp.eq.s32.totalorder %s36, 1
      %p180 = scmp.ne.s32.totalorder %s175, %s177
      %p181 = scmp.eq.s32.totalorder %s36, 0
      %p182 = por %p180, %p181
      %p183 = scmp.ne.s32.totalorder %s175, %s177
      %p184 = scmp.eq.s32.totalorder %s41, 1
      %p185 = por %p183, %p184
      %p186 = scmp.ne.s32.totalorder %s177, %s178
      %p187 = scmp.eq.s32.totalorder %s41, 0
      %p188 = por %p186, %p187
      %p189 = scmp.ne.s32.totalorder %s177, %s178
      %p190 = scmp.eq.s32.totalorder %s42, 1
      %p191 = por %p189, %p190
      %p193 = scmp.ne.s32.totalorder %s178, %s192
      %p194 = scmp.eq.s32.totalorder %s42, 0
      %p195 = por %p193, %p194
      %s197 = sadd.s32 %s196, 1
      %p200 = scmp.eq.s32.totalorder %s36, 1
      %p201 = scmp.ne.s32.totalorder %s196, %s198
      %p202 = scmp.eq.s32.totalorder %s36, 0
      %p203 = por %p201, %p202
      %p204 = scmp.ne.s32.totalorder %s196, %s198
      %p205 = scmp.eq.s32.totalorder %s41, 1
      %p206 = por %p204, %p205
      %p207 = scmp.ne.s32.totalorder %s198, %s199
      %p208 = scmp.eq.s32.totalorder %s41, 0
      %p209 = por %p207, %p208
      %p210 = scmp.ne.s32.totalorder %s198, %s199
      %p211 = scmp.eq.s32.totalorder %s42, 1
      %p212 = por %p210, %p211
      %p214 = scmp.ne.s32.totalorder %s199, %s213
      %p215 = scmp.eq.s32.totalorder %s42, 0
      %p216 = por %p214, %p215
      %s218 = sadd.s32 %s217, 1
      %p221 = scmp.eq.s32.totalorder %s36, 1
      %p222 = scmp.ne.s32.totalorder %s217, %s219
      %p223 = scmp.eq.s32.totalorder %s36, 0
      %p224 = por %p222, %p223
      %p225 = scmp.ne.s32.totalorder %s217, %s219
      %p226 = scmp.eq.s32.totalorder %s41, 1
      %p227 = por %p225, %p226
      %p228 = scmp.ne.s32.totalorder %s219, %s220
      %p229 = scmp.eq.s32.totalorder %s41, 0
      %p230 = por %p228, %p229
      %p231 = scmp.ne.s32.totalorder %s219, %s220
      %p232 = scmp.eq.s32.totalorder %s42, 1
      %p233 = por %p231, %p232
      %p235 = scmp.ne.s32.totalorder %s220, %s234
      %p236 = scmp.eq.s32.totalorder %s42, 0
      %p237 = por %p235, %p236
      %s239 = sadd.s32 %s238, 1
      %p242 = scmp.eq.s32.totalorder %s36, 1
      %p243 = scmp.ne.s32.totalorder %s238, %s240
      %p244 = scmp.eq.s32.totalorder %s36, 0
      %p245 = por %p243, %p244
      %p246 = scmp.ne.s32.totalorder %s238, %s240
      %p247 = scmp.eq.s32.totalorder %s41, 1
      %p248 = por %p246, %p247
      %p249 = scmp.ne.s32.totalorder %s240, %s241
      %p250 = scmp.eq.s32.totalorder %s41, 0
      %p251 = por %p249, %p250
      %p252 = scmp.ne.s32.totalorder %s240, %s241
      %p253 = scmp.eq.s32.totalorder %s42, 1
      %p254 = por %p252, %p253
      %p256 = scmp.ne.s32.totalorder %s241, %s255
      %p257 = scmp.eq.s32.totalorder %s42, 0
      %p258 = por %p256, %p257
      %s260 = sadd.s32 %s259, 1
      %p263 = scmp.eq.s32.totalorder %s36, 1
      %p264 = scmp.ne.s32.totalorder %s259, %s261
      %p265 = scmp.eq.s32.totalorder %s36, 0
      %p266 = por %p264, %p265
      %p267 = scmp.ne.s32.totalorder %s259, %s261
      %p268 = scmp.eq.s32.totalorder %s41, 1
      %p269 = por %p267, %p268
      %p270 = scmp.ne.s32.totalorder %s261, %s262
      %p271 = scmp.eq.s32.totalorder %s41, 0
      %p272 = por %p270, %p271
      %p273 = scmp.ne.s32.totalorder %s261, %s262
      %p274 = scmp.eq.s32.totalorder %s42, 1
      %p275 = por %p273, %p274
      %p277 = scmp.ne.s32.totalorder %s262, %s276
      %p278 = scmp.eq.s32.totalorder %s42, 0
      %p279 = por %p277, %p278
      %s281 = sadd.s32 %s280, 1
      %p284 = scmp.eq.s32.totalorder %s36, 1
      %p285 = scmp.ne.s32.totalorder %s280, %s282
      %p286 = scmp.eq.s32.totalorder %s36, 0
      %p287 = por %p285, %p286
      %p288 = scmp.ne.s32.totalorder %s280, %s282
      %p289 = scmp.eq.s32.totalorder %s41, 1
      %p290 = por %p288, %p289
      %p291 = scmp.ne.s32.totalorder %s282, %s283
      %p292 = scmp.eq.s32.totalorder %s41, 0
      %p293 = por %p291, %p292
      %p294 = scmp.ne.s32.totalorder %s282, %s283
      %p295 = scmp.eq.s32.totalorder %s42, 1
      %p296 = por %p294, %p295
      %p298 = scmp.ne.s32.totalorder %s283, %s297
      %p299 = scmp.eq.s32.totalorder %s42, 0
      %p300 = por %p298, %p299
      %s302 = sadd.s32 %s301, 1
      %p305 = scmp.eq.s32.totalorder %s36, 1
      %p306 = scmp.ne.s32.totalorder %s301, %s303
      %p307 = scmp.eq.s32.totalorder %s36, 0
      %p308 = por %p306, %p307
      %p309 = scmp.ne.s32.totalorder %s301, %s303
      %p310 = scmp.eq.s32.totalorder %s41, 1
      %p311 = por %p309, %p310
      %p312 = scmp.ne.s32.totalorder %s303, %s304
      %p313 = scmp.eq.s32.totalorder %s41, 0
      %p314 = por %p312, %p313
      %p315 = scmp.ne.s32.totalorder %s303, %s304
      %p316 = scmp.eq.s32.totalorder %s42, 1
      %p317 = por %p315, %p316
      %p319 = scmp.ne.s32.totalorder %s304, %s318
      %p320 = scmp.eq.s32.totalorder %s42, 0
      %p321 = por %p319, %p320
      %s323 = sadd.s32 %s322, 1
      %p326 = scmp.eq.s32.totalorder %s36, 1
      %p327 = scmp.ne.s32.totalorder %s322, %s324
      %p328 = scmp.eq.s32.totalorder %s36, 0
      %p329 = por %p327, %p328
      %p330 = scmp.ne.s32.totalorder %s322, %s324
      %p331 = scmp.eq.s32.totalorder %s41, 1
      %p332 = por %p330, %p331
      %p333 = scmp.ne.s32.totalorder %s324, %s325
      %p334 = scmp.eq.s32.totalorder %s41, 0
      %p335 = por %p333, %p334
      %p336 = scmp.ne.s32.totalorder %s324, %s325
      %p337 = scmp.eq.s32.totalorder %s42, 1
      %p338 = por %p336, %p337
      %p340 = scmp.ne.s32.totalorder %s325, %s339
      %p341 = scmp.eq.s32.totalorder %s42, 0
      %p342 = por %p340, %p341
      %s344 = sadd.s32 %s343, 1
      %p347 = scmp.eq.s32.totalorder %s36, 1
      %p348 = scmp.ne.s32.totalorder %s343, %s345
      %p349 = scmp.eq.s32.totalorder %s36, 0
      %p350 = por %p348, %p349
      %p351 = scmp.ne.s32.totalorder %s343, %s345
      %p352 = scmp.eq.s32.totalorder %s41, 1
      %p353 = por %p351, %p352
      %p354 = scmp.ne.s32.totalorder %s345, %s346
      %p355 = scmp.eq.s32.totalorder %s41, 0
      %p356 = por %p354, %p355
      %p357 = scmp.ne.s32.totalorder %s345, %s346
      %p358 = scmp.eq.s32.totalorder %s42, 1
      %p359 = por %p357, %p358
      %p361 = scmp.ne.s32.totalorder %s346, %s360
      %p362 = scmp.eq.s32.totalorder %s42, 0
      %p363 = por %p361, %p362
      %s365 = sadd.s32 %s364, 1
      %p368 = scmp.eq.s32.totalorder %s36, 1
      %p369 = scmp.ne.s32.totalorder %s364, %s366
      %p370 = scmp.eq.s32.totalorder %s36, 0
      %p371 = por %p369, %p370
      %p372 = scmp.ne.s32.totalorder %s364, %s366
      %p373 = scmp.eq.s32.totalorder %s41, 1
      %p374 = por %p372, %p373
      %p375 = scmp.ne.s32.totalorder %s366, %s367
      %p376 = scmp.eq.s32.totalorder %s41, 0
      %p377 = por %p375, %p376
      %p378 = scmp.ne.s32.totalorder %s366, %s367
      %p379 = scmp.eq.s32.totalorder %s42, 1
      %p380 = por %p378, %p379
      %p382 = scmp.ne.s32.totalorder %s367, %s381
      %p383 = scmp.eq.s32.totalorder %s42, 0
      %p384 = por %p382, %p383
      %s386 = sadd.s32 %s385, 1
      %p389 = scmp.eq.s32.totalorder %s36, 1
      %p390 = scmp.ne.s32.totalorder %s385, %s387
      %p391 = scmp.eq.s32.totalorder %s36, 0
      %p392 = por %p390, %p391
      %p393 = scmp.ne.s32.totalorder %s385, %s387
      %p394 = scmp.eq.s32.totalorder %s41, 1
      %p395 = por %p393, %p394
      %p396 = scmp.ne.s32.totalorder %s387, %s388
      %p397 = scmp.eq.s32.totalorder %s41, 0
      %p398 = por %p396, %p397
      %p399 = scmp.ne.s32.totalorder %s387, %s388
      %p400 = scmp.eq.s32.totalorder %s42, 1
      %p401 = por %p399, %p400
      %p403 = scmp.ne.s32.totalorder %s388, %s402
      %p404 = scmp.eq.s32.totalorder %s42, 0
      %p405 = por %p403, %p404
      %s407 = sadd.s32 %s406, 1
      %p410 = scmp.eq.s32.totalorder %s36, 1
      %p411 = scmp.ne.s32.totalorder %s406, %s408
      %p412 = scmp.eq.s32.totalorder %s36, 0
      %p413 = por %p411, %p412
      %p414 = scmp.ne.s32.totalorder %s406, %s408
      %p415 = scmp.eq.s32.totalorder %s41, 1
      %p416 = por %p414, %p415
      %p417 = scmp.ne.s32.totalorder %s408, %s409
      %p418 = scmp.eq.s32.totalorder %s41, 0
      %p419 = por %p417, %p418
      %p420 = scmp.ne.s32.totalorder %s408, %s409
      %p421 = scmp.eq.s32.totalorder %s42, 1
      %p422 = por %p420, %p421
      %p424 = scmp.ne.s32.totalorder %s409, %s423
      %p425 = scmp.eq.s32.totalorder %s42, 0
      %p426 = por %p424, %p425
      %s428 = sadd.s32 %s427, 1
      %p431 = scmp.eq.s32.totalorder %s36, 1
      %p432 = scmp.ne.s32.totalorder %s427, %s429
      %p433 = scmp.eq.s32.totalorder %s36, 0
      %p434 = por %p432, %p433
      %p435 = scmp.ne.s32.totalorder %s427, %s429
      %p436 = scmp.eq.s32.totalorder %s41, 1
      %p437 = por %p435, %p436
      %p438 = scmp.ne.s32.totalorder %s429, %s430
      %p439 = scmp.eq.s32.totalorder %s41, 0
      %p440 = por %p438, %p439
      %p441 = scmp.ne.s32.totalorder %s429, %s430
      %p442 = scmp.eq.s32.totalorder %s42, 1
      %p443 = por %p441, %p442
      %p445 = scmp.ne.s32.totalorder %s430, %s444
      %p446 = scmp.eq.s32.totalorder %s42, 0
      %p447 = por %p445, %p446
      %s449 = sadd.s32 %s448, 1
      %p452 = scmp.eq.s32.totalorder %s36, 1
      %p453 = scmp.ne.s32.totalorder %s448, %s450
      %p454 = scmp.eq.s32.totalorder %s36, 0
      %p455 = por %p453, %p454
      %p456 = scmp.ne.s32.totalorder %s448, %s450
      %p457 = scmp.eq.s32.totalorder %s41, 1
      %p458 = por %p456, %p457
      %p459 = scmp.ne.s32.totalorder %s450, %s451
      %p460 = scmp.eq.s32.totalorder %s41, 0
      %p461 = por %p459, %p460
      %p462 = scmp.ne.s32.totalorder %s450, %s451
      %p463 = scmp.eq.s32.totalorder %s42, 1
      %p464 = por %p462, %p463
      %p466 = scmp.ne.s32.totalorder %s451, %s465
      %p467 = scmp.eq.s32.totalorder %s42, 0
      %p468 = por %p466, %p467
      %s470 = sadd.s32 %s469, 1
      %p473 = scmp.eq.s32.totalorder %s36, 1
      %p474 = scmp.ne.s32.totalorder %s469, %s471
      %p475 = scmp.eq.s32.totalorder %s36, 0
      %p476 = por %p474, %p475
      %p477 = scmp.ne.s32.totalorder %s469, %s471
      %p478 = scmp.eq.s32.totalorder %s41, 1
      %p479 = por %p477, %p478
      %p480 = scmp.ne.s32.totalorder %s471, %s472
      %p481 = scmp.eq.s32.totalorder %s41, 0
      %p482 = por %p480, %p481
      %p483 = scmp.ne.s32.totalorder %s471, %s472
      %p484 = scmp.eq.s32.totalorder %s42, 1
      %p485 = por %p483, %p484
      %p487 = scmp.ne.s32.totalorder %s472, %s486
      %p488 = scmp.eq.s32.totalorder %s42, 0
      %p489 = por %p487, %p488
      %s490 = ssub.s32 %s36, %s43
      %p491 = scmp.eq.s32.totalorder %s490, 0
      %s493 = sadd.s32 %s492, 1
      %s494 = scalar_select %p491, %s492, %s493
      %p497 = pneg %p491
      %p498 = scmp.eq.s32.totalorder %s36, 1
      %p499 = por %p497, %p498
      %p500 = scmp.ne.s32.totalorder %s492, %s495
      %p501 = scmp.eq.s32.totalorder %s36, 0
      %p502 = por %p500, %p501
      %p503 = scmp.ne.s32.totalorder %s492, %s495
      %p504 = scmp.eq.s32.totalorder %s41, 1
      %p505 = por %p503, %p504
      %p506 = scmp.ne.s32.totalorder %s495, %s496
      %p507 = scmp.eq.s32.totalorder %s41, 0
      %p508 = por %p506, %p507
      %p509 = scmp.ne.s32.totalorder %s495, %s496
      %p510 = scmp.eq.s32.totalorder %s42, 1
      %p511 = por %p509, %p510
      %p513 = scmp.ne.s32.totalorder %s496, %s512
      %p514 = scmp.eq.s32.totalorder %s42, 0
      %p515 = por %p513, %p514
      %p516 = scmp.le.s32.totalorder 1, %s36
      %p517 = scmp.lt.s32.totalorder %s36, 3
      %p518 = pnand %p516, %p517
      %p519 = pneg %p518
      // Predicated region
      $region9: #{forward.1} parent=5 // pred_check
        _
      $region10: #{forward.1} parent=5 // pred_check_branch
        %521 = sbr.rel (%p518) target = $region12
      $region11: #{forward.1} parent=5 // pred_region
        %s522 = ssub.s32 %s36, 1
        // Predicated region
        $region13: #{forward.1} parent=11 // pred_check
          %p523 = pneg %p83
        $region14: #{forward.1} parent=11 // pred_check_branch
          %525 = sbr.rel (%p523) target = $region16
        $region15: #{forward.1} parent=11 // pred_region
          %527 = vsyncadd [#allocation3], 0
          %s528 = sshll.u32 %s1, 4
          %s529 = int_to_ptr.hbm [resolvable:$true] %s528
          %s530 = sshll.u32 [#allocation2], 4
          %s531 = int_to_ptr.vmem [resolvable:$true] %s530
          %536 = dma.hbm_to_vmem [thread:$0]  %s529, 2304, %s531, [#allocation3], 128, 128, 8
        $region16: #{forward.1} parent=11 // pred_fallthru
          _
        // Predicated region
        $region17: #{forward.1} parent=11 // pred_check
          %p537 = pneg %p104
        $region18: #{forward.1} parent=11 // pred_check_branch
          %539 = sbr.rel (%p537) target = $region20
        $region19: #{forward.1} parent=11 // pred_region
          _
        $region20: #{forward.1} parent=11 // pred_fallthru
          _
        // Predicated region
        $region21: #{forward.1} parent=11 // pred_check
          %p540 = pneg %p125
        $region22: #{forward.1} parent=11 // pred_check_branch
          %542 = sbr.rel (%p540) target = $region24
        $region23: #{forward.1} parent=11 // pred_region
          %544 = vsyncadd [#allocation6], 0
          %s545 = sshll.u32 %s3, 4
          %s546 = int_to_ptr.hbm [resolvable:$true] %s545
          %s547 = sshll.u32 [#allocation5], 4
          %s548 = int_to_ptr.vmem [resolvable:$true] %s547
          %553 = dma.hbm_to_vmem [thread:$0]  %s546, 3456, %s548, [#allocation6], 128, 128, 8
        $region24: #{forward.1} parent=11 // pred_fallthru
          _
        // Predicated region
        $region25: #{forward.1} parent=11 // pred_check
          %p554 = pneg %p146
        $region26: #{forward.1} parent=11 // pred_check_branch
          %556 = sbr.rel (%p554) target = $region28
        $region27: #{forward.1} parent=11 // pred_region
          _
        $region28: #{forward.1} parent=11 // pred_fallthru
          _
        // Predicated region
        $region29: #{forward.1} parent=11 // pred_check
          %p557 = pneg %p167
        $region30: #{forward.1} parent=11 // pred_check_branch
          %559 = sbr.rel (%p557) target = $region32
        $region31: #{forward.1} parent=11 // pred_region
          _
        $region32: #{forward.1} parent=11 // pred_fallthru
          _
        // Predicated region
        $region33: #{forward.1} parent=11 // pred_check
          %p560 = pneg %p188
        $region34: #{forward.1} parent=11 // pred_check_branch
          %562 = sbr.rel (%p560) target = $region36
        $region35: #{forward.1} parent=11 // pred_region
          _
        $region36: #{forward.1} parent=11 // pred_fallthru
          _
        // Predicated region
        $region37: #{forward.1} parent=11 // pred_check
          %p563 = pneg %p209
        $region38: #{forward.1} parent=11 // pred_check_branch
          %565 = sbr.rel (%p563) target = $region40
        $region39: #{forward.1} parent=11 // pred_region
          _
        $region40: #{forward.1} parent=11 // pred_fallthru
          _
        // Predicated region
        $region41: #{forward.1} parent=11 // pred_check
          %p566 = pneg %p230
        $region42: #{forward.1} parent=11 // pred_check_branch
          %568 = sbr.rel (%p566) target = $region44
        $region43: #{forward.1} parent=11 // pred_region
          %570 = vsyncadd [#allocation6], 0
          %s571 = sshll.u32 %s8, 4
          %s572 = int_to_ptr.hbm [resolvable:$true] %s571
          %s573 = sshll.u32 [#allocation7], 4
          %s574 = int_to_ptr.vmem [resolvable:$true] %s573
          %579 = dma.hbm_to_vmem [thread:$0]  %s572, 3072, %s574, [#allocation6], 128, 128, 8
        $region44: #{forward.1} parent=11 // pred_fallthru
          _
        // Predicated region
        $region45: #{forward.1} parent=11 // pred_check
          %p580 = pneg %p251
        $region46: #{forward.1} parent=11 // pred_check_branch
          %582 = sbr.rel (%p580) target = $region48
        $region47: #{forward.1} parent=11 // pred_region
          %584 = vsyncadd [#allocation9], 0
          %s585 = sshll.u32 %s9, 4
          %s586 = int_to_ptr.hbm [resolvable:$true] %s585
          %s587 = sshll.u32 [#allocation8], 4
          %s588 = int_to_ptr.vmem [resolvable:$true] %s587
          %593 = dma.hbm_to_vmem [thread:$0]  %s586, 768, %s588, [#allocation9], 128, 128, 8
        $region48: #{forward.1} parent=11 // pred_fallthru
          _
        // Predicated region
        $region49: #{forward.1} parent=11 // pred_check
          %p594 = pneg %p272
        $region50: #{forward.1} parent=11 // pred_check_branch
          %596 = sbr.rel (%p594) target = $region52
        $region51: #{forward.1} parent=11 // pred_region
          %598 = vsyncadd [#allocation9], 0
          %s599 = sshll.u32 %s10, 4
          %s600 = int_to_ptr.hbm [resolvable:$true] %s599
          %s601 = sshll.u32 [#allocation10], 4
          %s602 = int_to_ptr.vmem [resolvable:$true] %s601
          %607 = dma.hbm_to_vmem [thread:$0]  %s600, 3584, %s602, [#allocation9], 128, 128, 8
        $region52: #{forward.1} parent=11 // pred_fallthru
          _
        // Predicated region
        $region53: #{forward.1} parent=11 // pred_check
          %p608 = pneg %p293
        $region54: #{forward.1} parent=11 // pred_check_branch
          %610 = sbr.rel (%p608) target = $region56
        $region55: #{forward.1} parent=11 // pred_region
          _
        $region56: #{forward.1} parent=11 // pred_fallthru
          _
        // Predicated region
        $region57: #{forward.1} parent=11 // pred_check
          %p611 = pneg %p314
        $region58: #{forward.1} parent=11 // pred_check_branch
          %613 = sbr.rel (%p611) target = $region60
        $region59: #{forward.1} parent=11 // pred_region
          _
        $region60: #{forward.1} parent=11 // pred_fallthru
          _
        // Predicated region
        $region61: #{forward.1} parent=11 // pred_check
          %p614 = pneg %p335
        $region62: #{forward.1} parent=11 // pred_check_branch
          %616 = sbr.rel (%p614) target = $region64
        $region63: #{forward.1} parent=11 // pred_region
          %618 = vsyncadd [#allocation12], 0
          %s619 = sshll.u32 %s13, 4
          %s620 = int_to_ptr.hbm [resolvable:$true] %s619
          %s621 = sshll.u32 [#allocation11], 4
          %s622 = int_to_ptr.vmem [resolvable:$true] %s621
          %627 = dma.hbm_to_vmem [thread:$0]  %s620, 2048, %s622, [#allocation12], 128, 128, 8
        $region64: #{forward.1} parent=11 // pred_fallthru
          _
        // Predicated region
        $region65: #{forward.1} parent=11 // pred_check
          %p628 = pneg %p356
        $region66: #{forward.1} parent=11 // pred_check_branch
          %630 = sbr.rel (%p628) target = $region68
        $region67: #{forward.1} parent=11 // pred_region
          %632 = vsyncadd [#allocation12], 0
          %s633 = sshll.u32 %s14, 4
          %s634 = int_to_ptr.hbm [resolvable:$true] %s633
          %s635 = sshll.u32 [#allocation13], 4
          %s636 = int_to_ptr.vmem [resolvable:$true] %s635
          %641 = dma.hbm_to_vmem [thread:$0]  %s634, 256, %s636, [#allocation12], 64, 64, 4
        $region68: #{forward.1} parent=11 // pred_fallthru
          _
        // Predicated region
        $region69: #{forward.1} parent=11 // pred_check
          %p642 = pneg %p377
        $region70: #{forward.1} parent=11 // pred_check_branch
          %644 = sbr.rel (%p642) target = $region72
        $region71: #{forward.1} parent=11 // pred_region
          %646 = vsyncadd [#allocation15], 0
          %s647 = sshll.u32 %s15, 4
          %s648 = int_to_ptr.hbm [resolvable:$true] %s647
          %s649 = sshll.u32 [#allocation14], 4
          %s650 = int_to_ptr.vmem [resolvable:$true] %s649
          %655 = dma.hbm_to_vmem [thread:$0]  %s648, 256, %s650, [#allocation15], 64, 64, 4
        $region72: #{forward.1} parent=11 // pred_fallthru
          _
        // Predicated region
        $region73: #{forward.1} parent=11 // pred_check
          %p656 = pneg %p398
        $region74: #{forward.1} parent=11 // pred_check_branch
          %658 = sbr.rel (%p656) target = $region76
        $region75: #{forward.1} parent=11 // pred_region
          %660 = vsyncadd [#allocation15], 0
          %s661 = sshll.u32 %s16, 4
          %s662 = int_to_ptr.hbm [resolvable:$true] %s661
          %s663 = sshll.u32 [#allocation16], 4
          %s664 = int_to_ptr.vmem [resolvable:$true] %s663
          %669 = dma.hbm_to_vmem [thread:$0]  %s662, 256, %s664, [#allocation15], 64, 64, 4
        $region76: #{forward.1} parent=11 // pred_fallthru
          _
        // Predicated region
        $region77: #{forward.1} parent=11 // pred_check
          %p670 = pneg %p419
        $region78: #{forward.1} parent=11 // pred_check_branch
          %672 = sbr.rel (%p670) target = $region80
        $region79: #{forward.1} parent=11 // pred_region
          _
        $region80: #{forward.1} parent=11 // pred_fallthru
          _
        // Predicated region
        $region81: #{forward.1} parent=11 // pred_check
          %p673 = pneg %p440
        $region82: #{forward.1} parent=11 // pred_check_branch
          %675 = sbr.rel (%p673) target = $region84
        $region83: #{forward.1} parent=11 // pred_region
          _
        $region84: #{forward.1} parent=11 // pred_fallthru
          _
        // Predicated region
        $region85: #{forward.1} parent=11 // pred_check
          %p676 = pneg %p461
        $region86: #{forward.1} parent=11 // pred_check_branch
          %678 = sbr.rel (%p676) target = $region88
        $region87: #{forward.1} parent=11 // pred_region
          %680 = vsyncadd [#allocation18], 0
          %s681 = sshll.u32 %s19, 4
          %s682 = int_to_ptr.hbm [resolvable:$true] %s681
          %s683 = sshll.u32 [#allocation17], 4
          %s684 = int_to_ptr.vmem [resolvable:$true] %s683
          %689 = dma.hbm_to_vmem [thread:$0]  %s682, 1024, %s684, [#allocation18], 128, 128, 8
        $region88: #{forward.1} parent=11 // pred_fallthru
          _
        // Predicated region
        $region89: #{forward.1} parent=11 // pred_check
          %p690 = pneg %p482
        $region90: #{forward.1} parent=11 // pred_check_branch
          %692 = sbr.rel (%p690) target = $region92
        $region91: #{forward.1} parent=11 // pred_region
          _
        $region92: #{forward.1} parent=11 // pred_fallthru
          _
      $region12: #{forward.1} parent=5 // pred_fallthru
        _
      %p693 = scmp.lt.s32.totalorder %s36, 2
      // Predicated region
      $region93: #{forward.1} parent=5 // pred_check
        %p694 = pneg %p693
      $region94: #{forward.1} parent=5 // pred_check_branch
        %696 = sbr.rel (%p694) target = $region96
      $region95: #{forward.1} parent=5 // pred_region
        // Predicated region
        $region97: #{forward.1} parent=95 // pred_check
          %p697 = pneg %p56
        $region98: #{forward.1} parent=95 // pred_check_branch
          %699 = sbr.rel (%p697) target = $region100
        $region99: #{forward.1} parent=95 // pred_region
          %p700 = scmp.lt.s32.totalorder %s36, 1
          %s701 = scalar_select %p700, %s36, 1
          %s702 = smul.addr %s701, 7
          %s703 = smul.addr %s702, 8
          %s704 = scalar_lea.vmem %s0, %s703
        $region100: #{forward.1} parent=95 // pred_fallthru
          _
      $region96: #{forward.1} parent=5 // pred_fallthru
        _
      %p705 = scmp.le.s32.totalorder 1, %s36
      %p706 = scmp.lt.s32.totalorder %s36, 3
      %p707 = pnand %p705, %p706
      %p708 = pneg %p707
      // Predicated region
      $region101: #{forward.1} parent=5 // pred_check
        _
      $region102: #{forward.1} parent=5 // pred_check_branch
        %710 = sbr.rel (%p707) target = $region104
      $region103: #{forward.1} parent=5 // pred_region
        %s711 = ssub.s32 %s36, 1
        // Predicated region
        $region105: #{forward.1} parent=103 // pred_check
          %p712 = pneg %p83
        $region106: #{forward.1} parent=103 // pred_check_branch
          %714 = sbr.rel (%p712) target = $region108
        $region107: #{forward.1} parent=103 // pred_region
          %716 = dma.done [#allocation3], 2304
        $region108: #{forward.1} parent=103 // pred_fallthru
          _
        // Predicated region
        $region109: #{forward.1} parent=103 // pred_check
          %p717 = pneg %p125
        $region110: #{forward.1} parent=103 // pred_check_branch
          %719 = sbr.rel (%p717) target = $region112
        $region111: #{forward.1} parent=103 // pred_region
          %721 = dma.done [#allocation6], 3456
        $region112: #{forward.1} parent=103 // pred_fallthru
          _
        // Predicated region
        $region113: #{forward.1} parent=103 // pred_check
          %p722 = pneg %p230
        $region114: #{forward.1} parent=103 // pred_check_branch
          %724 = sbr.rel (%p722) target = $region116
        $region115: #{forward.1} parent=103 // pred_region
          %726 = dma.done [#allocation6], 3072
        $region116: #{forward.1} parent=103 // pred_fallthru
          _
        // Predicated region
        $region117: #{forward.1} parent=103 // pred_check
          %p727 = pneg %p251
        $region118: #{forward.1} parent=103 // pred_check_branch
          %729 = sbr.rel (%p727) target = $region120
        $region119: #{forward.1} parent=103 // pred_region
          %731 = dma.done [#allocation9], 768
        $region120: #{forward.1} parent=103 // pred_fallthru
          _
        // Predicated region
        $region121: #{forward.1} parent=103 // pred_check
          %p732 = pneg %p272
        $region122: #{forward.1} parent=103 // pred_check_branch
          %734 = sbr.rel (%p732) target = $region124
        $region123: #{forward.1} parent=103 // pred_region
          %736 = dma.done [#allocation9], 3584
        $region124: #{forward.1} parent=103 // pred_fallthru
          _
        // Predicated region
        $region125: #{forward.1} parent=103 // pred_check
          %p737 = pneg %p335
        $region126: #{forward.1} parent=103 // pred_check_branch
          %739 = sbr.rel (%p737) target = $region128
        $region127: #{forward.1} parent=103 // pred_region
          %741 = dma.done [#allocation12], 2048
        $region128: #{forward.1} parent=103 // pred_fallthru
          _
        // Predicated region
        $region129: #{forward.1} parent=103 // pred_check
          %p742 = pneg %p356
        $region130: #{forward.1} parent=103 // pred_check_branch
          %744 = sbr.rel (%p742) target = $region132
        $region131: #{forward.1} parent=103 // pred_region
          %746 = dma.done [#allocation12], 256
        $region132: #{forward.1} parent=103 // pred_fallthru
          _
        // Predicated region
        $region133: #{forward.1} parent=103 // pred_check
          %p747 = pneg %p377
        $region134: #{forward.1} parent=103 // pred_check_branch
          %749 = sbr.rel (%p747) target = $region136
        $region135: #{forward.1} parent=103 // pred_region
          %751 = dma.done [#allocation15], 256
        $region136: #{forward.1} parent=103 // pred_fallthru
          _
        // Predicated region
        $region137: #{forward.1} parent=103 // pred_check
          %p752 = pneg %p398
        $region138: #{forward.1} parent=103 // pred_check_branch
          %754 = sbr.rel (%p752) target = $region140
        $region139: #{forward.1} parent=103 // pred_region
          %756 = dma.done [#allocation15], 256
        $region140: #{forward.1} parent=103 // pred_fallthru
          _
        // Predicated region
        $region141: #{forward.1} parent=103 // pred_check
          %p757 = pneg %p461
        $region142: #{forward.1} parent=103 // pred_check_branch
          %759 = sbr.rel (%p757) target = $region144
        $region143: #{forward.1} parent=103 // pred_region
          %761 = dma.done [#allocation18], 1024
        $region144: #{forward.1} parent=103 // pred_fallthru
          _
        %p762 = scmp.lt.s32.totalorder %s41, 1
        %s763 = scalar_select %p762, %s41, 1
        %s764 = smul.addr %s763, 7
        %s765 = smul.addr %s764, 8
        %s766 = scalar_lea.vmem %s0, %s765
        %p767 = pneg %p62
        %p768 = pneg %p59
        %p769 = pneg %p83
        %p770 = pneg %p80
        %p771 = pneg %p104
        %p772 = pneg %p101
        %p773 = pneg %p125
        %p774 = pneg %p122
        %p775 = pneg %p146
        %p776 = pneg %p143
        %p777 = pneg %p167
        %p778 = pneg %p164
        %p779 = pneg %p188
        %p780 = pneg %p185
        %p781 = pneg %p209
        %p782 = pneg %p206
        %p783 = pneg %p230
        %p784 = pneg %p227
        %p785 = pneg %p251
        %p786 = pneg %p248
        %p787 = pneg %p272
        %p788 = pneg %p269
        %p789 = pneg %p293
        %p790 = pneg %p290
        %p791 = pneg %p314
        %p792 = pneg %p311
        %p793 = pneg %p335
        %p794 = pneg %p332
        %p795 = pneg %p356
        %p796 = pneg %p353
        %p797 = pneg %p377
        %p798 = pneg %p374
        %p799 = pneg %p398
        %p800 = pneg %p395
        %p801 = pneg %p419
        %p802 = pneg %p416
        %p803 = pneg %p440
        %p804 = pneg %p437
        %p805 = pneg %p461
        %p806 = pneg %p458
        %p807 = pneg %p482
        %p808 = pneg %p479
        %p809 = pneg %p508
        %p810 = pneg %p505
        %s811 = sand.u32 %s495, 1
        %s812 = scalar_lea.sflag [#allocation4], %s811
        %s813 = sand.u32 %s495, 1
        %s814 = smul.addr %s813, 4
        %s815 = scalar_lea.vmem [#allocation19], %s814
        %p816 = scmp.lt.s32.totalorder %s41, 1
        %s817 = scalar_select %p816, %s41, 1
        %s818 = smul.addr %s817, 7
        %s819 = smul.addr %s818, 8
        %s820 = scalar_lea.vmem %s0, %s819
        %v821 = vld [vmem:[%s820] sm:$0xff]
        %v822 = vld [vmem:[%s820 + $0x8] sm:$0xff]
        %v823 = vld [vmem:[%s820 + $0x10] sm:$0xff]
        %v824 = vld [vmem:[%s820 + $0x18] sm:$0xff]
        %v825 = vld [vmem:[%s820 + $0x20] sm:$0xff]
        %v826 = vld [vmem:[%s820 + $0x28] sm:$0xff]
        %v827 = vld [vmem:[%s820 + $0x30] sm:$0x3f]
        %v828 = vld [vmem:[#allocation2] sm:$0xff]
        %v829 = vld [vmem:[#allocation2 + $0x8] sm:$0xff]
        %v830 = vld [vmem:[#allocation2 + $0x10] sm:$0xff]
        %v831 = vld [vmem:[#allocation2 + $0x18] sm:$0xff]
        %v832 = vld [vmem:[#allocation2 + $0x20] sm:$0xff]
        %v833 = vld [vmem:[#allocation2 + $0x28] sm:$0x3]
        %v834 = vld [vmem:[%s820 + $0x1] sm:$0xff]
        %v835 = vld [vmem:[%s820 + $0x9] sm:$0xff]
        %v836 = vld [vmem:[%s820 + $0x11] sm:$0xff]
        %v837 = vld [vmem:[%s820 + $0x19] sm:$0xff]
        %v838 = vld [vmem:[%s820 + $0x21] sm:$0xff]
        %v839 = vld [vmem:[%s820 + $0x29] sm:$0xff]
        %v840 = vld [vmem:[%s820 + $0x31] sm:$0x3f]
        %s841 = scalar_lea.vmem [#allocation2], 48
        %v842 = vld [vmem:[%s841] sm:$0xff]
        %v843 = vld [vmem:[%s841 + $0x8] sm:$0xff]
        %v844 = vld [vmem:[%s841 + $0x10] sm:$0xff]
        %v845 = vld [vmem:[%s841 + $0x18] sm:$0xff]
        %v846 = vld [vmem:[%s841 + $0x20] sm:$0xff]
        %v847 = vld [vmem:[%s841 + $0x28] sm:$0x3]
        %vm848 = vcmask 343040
        %v850 = vsel %vm848, %v834, 0
        %v853 = vsel %vm848, %v835, 0
        %v856 = vsel %vm848, %v836, 0
        %v859 = vsel %vm848, %v837, 0
        %v862 = vsel %vm848, %v838, 0
        %v865 = vsel %vm848, %v839, 0
        %v868 = vsel %vm848, %v840, 0
        %vm870 = vcmask 1041408
        %v872 = vsel %vm870, %v847, 0
        %874 = vmatpush.msra.mxu0 0.0
        %875 = vmatpush.msra.mxu0 0.0
        %876 = vmatpush.msra.mxu0 0.0
        %877 = vmatpush.msra.mxu0 0.0
        %878 = vmatpush.msra.mxu0 0.0
        %879 = vmatpush.msra.mxu0 0.0
        %880 = vmatpush.msra.mxu0 0.0
        %881 = vmatpush.msra.mxu0 0.0
        %882 = vmatpush.msra.mxu0 0.0
        %883 = vmatpush.msra.mxu0 0.0
        %884 = vmatpush.msra.mxu0 %v872
        %885 = vmatpush.msra.mxu0 %v846
        %886 = vmatpush.msra.mxu0 %v845
        %887 = vmatpush.msra.mxu0 %v844
        %888 = vmatpush.msra.mxu0 %v843
        %889 = vmatpush.msra.mxu0 %v842
        %890 = vmatmul.f32.gmra.mxu0 %v850
        %v891 = vpop.f32.mrf.mxu0
        %v892 = vadd.f32 0.0, %v891
        %893 = vmatmul.f32.gmra.mxu0 %v853
        %v894 = vpop.f32.mrf.mxu0
        %v895 = vadd.f32 0.0, %v894
        %896 = vmatmul.f32.gmra.mxu0 %v856
        %v897 = vpop.f32.mrf.mxu0
        %v898 = vadd.f32 0.0, %v897
        %899 = vmatmul.f32.gmra.mxu0 %v859
        %v900 = vpop.f32.mrf.mxu0
        %v901 = vadd.f32 0.0, %v900
        %902 = vmatmul.f32.gmra.mxu0 %v862
        %v903 = vpop.f32.mrf.mxu0
        %v904 = vadd.f32 0.0, %v903
        %905 = vmatmul.f32.gmra.mxu0 %v865
        %v906 = vpop.f32.mrf.mxu0
        %v907 = vadd.f32 0.0, %v906
        %908 = vmatmul.f32.gmra.mxu0 %v868
        %v909 = vpop.f32.mrf.mxu0
        %v910 = vadd.f32 0.0, %v909
        %911 = vdwg.mxu0
        %v913 = vsel %vm848, %v821, 0
        %v916 = vsel %vm848, %v822, 0
        %v919 = vsel %vm848, %v823, 0
        %v922 = vsel %vm848, %v824, 0
        %v925 = vsel %vm848, %v825, 0
        %v928 = vsel %vm848, %v826, 0
        %v931 = vsel %vm848, %v827, 0
        %v934 = vsel %vm870, %v833, 0
        %936 = vmatpush.msra.mxu0 0.0
        %937 = vmatpush.msra.mxu0 0.0
        %938 = vmatpush.msra.mxu0 0.0
        %939 = vmatpush.msra.mxu0 0.0
        %940 = vmatpush.msra.mxu0 0.0
        %941 = vmatpush.msra.mxu0 0.0
        %942 = vmatpush.msra.mxu0 0.0
        %943 = vmatpush.msra.mxu0 0.0
        %944 = vmatpush.msra.mxu0 0.0
        %945 = vmatpush.msra.mxu0 0.0
        %946 = vmatpush.msra.mxu0 %v934
        %947 = vmatpush.msra.mxu0 %v832
        %948 = vmatpush.msra.mxu0 %v831
        %949 = vmatpush.msra.mxu0 %v830
        %950 = vmatpush.msra.mxu0 %v829
        %951 = vmatpush.msra.mxu0 %v828
        %952 = vmatmul.f32.gmra.mxu0 %v913
        %v953 = vpop.f32.mrf.mxu0
        %v954 = vadd.f32 %v892, %v953
        %955 = vmatmul.f32.gmra.mxu0 %v916
        %v956 = vpop.f32.mrf.mxu0
        %v957 = vadd.f32 %v895, %v956
        %958 = vmatmul.f32.gmra.mxu0 %v919
        %v959 = vpop.f32.mrf.mxu0
        %v960 = vadd.f32 %v898, %v959
        %961 = vmatmul.f32.gmra.mxu0 %v922
        %v962 = vpop.f32.mrf.mxu0
        %v963 = vadd.f32 %v901, %v962
        %964 = vmatmul.f32.gmra.mxu0 %v925
        %v965 = vpop.f32.mrf.mxu0
        %v966 = vadd.f32 %v904, %v965
        %967 = vmatmul.f32.gmra.mxu0 %v928
        %v968 = vpop.f32.mrf.mxu0
        %v969 = vadd.f32 %v907, %v968
        %970 = vmatmul.f32.gmra.mxu0 %v931
        %v971 = vpop.f32.mrf.mxu0
        %v972 = vadd.f32 %v910, %v971
        %973 = vdwg.mxu0
        %v974 = vld [vmem:[%s820 + $0x2] sm:$0xff]
        %v975 = vld [vmem:[%s820 + $0xa] sm:$0xff]
        %v976 = vld [vmem:[%s820 + $0x12] sm:$0xff]
        %v977 = vld [vmem:[%s820 + $0x1a] sm:$0xff]
        %v978 = vld [vmem:[%s820 + $0x22] sm:$0xff]
        %v979 = vld [vmem:[%s820 + $0x2a] sm:$0xff]
        %v980 = vld [vmem:[%s820 + $0x32] sm:$0x3f]
        %s981 = scalar_lea.vmem [#allocation2], 96
        %v982 = vld [vmem:[%s981] sm:$0xff]
        %v983 = vld [vmem:[%s981 + $0x8] sm:$0xff]
        %v984 = vld [vmem:[%s981 + $0x10] sm:$0xff]
        %v985 = vld [vmem:[%s981 + $0x18] sm:$0xff]
        %v986 = vld [vmem:[%s981 + $0x20] sm:$0xff]
        %v987 = vld [vmem:[%s981 + $0x28] sm:$0x3]
        %v989 = vsel %vm848, %v974, 0
        %v992 = vsel %vm848, %v975, 0
        %v995 = vsel %vm848, %v976, 0
        %v998 = vsel %vm848, %v977, 0
        %v1001 = vsel %vm848, %v978, 0
        %v1004 = vsel %vm848, %v979, 0
        %v1007 = vsel %vm848, %v980, 0
        %v1010 = vsel %vm870, %v987, 0
        %1012 = vmatpush.msra.mxu0 0.0
        %1013 = vmatpush.msra.mxu0 0.0
        %1014 = vmatpush.msra.mxu0 0.0
        %1015 = vmatpush.msra.mxu0 0.0
        %1016 = vmatpush.msra.mxu0 0.0
        %1017 = vmatpush.msra.mxu0 0.0
        %1018 = vmatpush.msra.mxu0 0.0
        %1019 = vmatpush.msra.mxu0 0.0
        %1020 = vmatpush.msra.mxu0 0.0
        %1021 = vmatpush.msra.mxu0 0.0
        %1022 = vmatpush.msra.mxu0 %v1010
        %1023 = vmatpush.msra.mxu0 %v986
        %1024 = vmatpush.msra.mxu0 %v985
        %1025 = vmatpush.msra.mxu0 %v984
        %1026 = vmatpush.msra.mxu0 %v983
        %1027 = vmatpush.msra.mxu0 %v982
        %1028 = vmatmul.f32.gmra.mxu0 %v989
        %v1029 = vpop.f32.mrf.mxu0
        %v1030 = vadd.f32 0.0, %v1029
        %1031 = vmatmul.f32.gmra.mxu0 %v992
        %v1032 = vpop.f32.mrf.mxu0
        %v1033 = vadd.f32 0.0, %v1032
        %1034 = vmatmul.f32.gmra.mxu0 %v995
        %v1035 = vpop.f32.mrf.mxu0
        %v1036 = vadd.f32 0.0, %v1035
        %1037 = vmatmul.f32.gmra.mxu0 %v998
        %v1038 = vpop.f32.mrf.mxu0
        %v1039 = vadd.f32 0.0, %v1038
        %1040 = vmatmul.f32.gmra.mxu0 %v1001
        %v1041 = vpop.f32.mrf.mxu0
        %v1042 = vadd.f32 0.0, %v1041
        %1043 = vmatmul.f32.gmra.mxu0 %v1004
        %v1044 = vpop.f32.mrf.mxu0
        %v1045 = vadd.f32 0.0, %v1044
        %1046 = vmatmul.f32.gmra.mxu0 %v1007
        %v1047 = vpop.f32.mrf.mxu0
        %v1048 = vadd.f32 0.0, %v1047
        %1049 = vdwg.mxu0
        %v1050 = vadd.f32 %v954, %v1030
        %v1051 = vadd.f32 %v957, %v1033
        %v1052 = vadd.f32 %v960, %v1036
        %v1053 = vadd.f32 %v963, %v1039
        %v1054 = vadd.f32 %v966, %v1042
        %v1055 = vadd.f32 %v969, %v1045
        %v1056 = vadd.f32 %v972, %v1048
        %v1057 = vld [vmem:[%s2] sm:$0x1]
        %v1059 = vperm.slane %v1057, 0
        %v1061 = vadd.f32 %v1050, %v1059
        %v1062 = vadd.f32 %v1051, %v1059
        %v1063 = vadd.f32 %v1052, %v1059
        %v1064 = vadd.f32 %v1053, %v1059
        %v1065 = vadd.f32 %v1054, %v1059
        %v1066 = vadd.f32 %v1055, %v1059
        %v1067 = vadd.f32 %v1056, %v1059
        %v1068 = vld [vmem:[#allocation7] sm:$0xff]
        %v1069 = vld [vmem:[#allocation7 + $0x8] sm:$0xff]
        %v1070 = vld [vmem:[#allocation7 + $0x10] sm:$0xff]
        %v1071 = vld [vmem:[#allocation7 + $0x18] sm:$0xff]
        %v1072 = vld [vmem:[#allocation7 + $0x20] sm:$0xff]
        %v1073 = vld [vmem:[#allocation7 + $0x28] sm:$0xff]
        %v1074 = vld [vmem:[#allocation7 + $0x30] sm:$0xff]
        %v1075 = vld [vmem:[#allocation7 + $0x38] sm:$0xff]
        %v1076 = vld [vmem:[#allocation7 + $0x40] sm:$0xff]
        %v1077 = vld [vmem:[#allocation7 + $0x48] sm:$0xff]
        %v1078 = vld [vmem:[#allocation7 + $0x50] sm:$0xff]
        %v1079 = vld [vmem:[#allocation7 + $0x58] sm:$0xff]
        %vm1080 = vcmask 785408
        %v1082 = vsel %vm1080, %v1061, 0
        %v1085 = vsel %vm1080, %v1062, 0
        %v1088 = vsel %vm1080, %v1063, 0
        %v1091 = vsel %vm1080, %v1064, 0
        %v1094 = vsel %vm1080, %v1065, 0
        %v1097 = vsel %vm1080, %v1066, 0
        %v1100 = vsel %vm1080, %v1067, 0
        %1102 = vmatpush.msra.mxu0 0.0
        %1103 = vmatpush.msra.mxu0 0.0
        %1104 = vmatpush.msra.mxu0 0.0
        %1105 = vmatpush.msra.mxu0 0.0
        %1106 = vmatpush.msra.mxu0 %v1079
        %1107 = vmatpush.msra.mxu0 %v1078
        %1108 = vmatpush.msra.mxu0 %v1077
        %1109 = vmatpush.msra.mxu0 %v1076
        %1110 = vmatpush.msra.mxu0 %v1075
        %1111 = vmatpush.msra.mxu0 %v1074
        %1112 = vmatpush.msra.mxu0 %v1073
        %1113 = vmatpush.msra.mxu0 %v1072
        %1114 = vmatpush.msra.mxu0 %v1071
        %1115 = vmatpush.msra.mxu0 %v1070
        %1116 = vmatpush.msra.mxu0 %v1069
        %1117 = vmatpush.msra.mxu0 %v1068
        %1118 = vmatmul.f32.gmra.mxu0 %v1082
        %v1119 = vpop.f32.mrf.mxu0
        %v1120 = vadd.f32 0.0, %v1119
        %1121 = vmatmul.f32.gmra.mxu0 %v1085
        %v1122 = vpop.f32.mrf.mxu0
        %v1123 = vadd.f32 0.0, %v1122
        %1124 = vmatmul.f32.gmra.mxu0 %v1088
        %v1125 = vpop.f32.mrf.mxu0
        %v1126 = vadd.f32 0.0, %v1125
        %1127 = vmatmul.f32.gmra.mxu0 %v1091
        %v1128 = vpop.f32.mrf.mxu0
        %v1129 = vadd.f32 0.0, %v1128
        %1130 = vmatmul.f32.gmra.mxu0 %v1094
        %v1131 = vpop.f32.mrf.mxu0
        %v1132 = vadd.f32 0.0, %v1131
        %1133 = vmatmul.f32.gmra.mxu0 %v1097
        %v1134 = vpop.f32.mrf.mxu0
        %v1135 = vadd.f32 0.0, %v1134
        %1136 = vmatmul.f32.gmra.mxu0 %v1100
        %v1137 = vpop.f32.mrf.mxu0
        %v1138 = vadd.f32 0.0, %v1137
        %1139 = vdwg.mxu0
        %s1140 = scalar_lea.vmem [#allocation7], 96
        %v1141 = vld [vmem:[%s1140] sm:$0xff]
        %v1142 = vld [vmem:[%s1140 + $0x8] sm:$0xff]
        %v1143 = vld [vmem:[%s1140 + $0x10] sm:$0xff]
        %v1144 = vld [vmem:[%s1140 + $0x18] sm:$0xff]
        %v1145 = vld [vmem:[%s1140 + $0x20] sm:$0xff]
        %v1146 = vld [vmem:[%s1140 + $0x28] sm:$0xff]
        %v1147 = vld [vmem:[%s1140 + $0x30] sm:$0xff]
        %v1148 = vld [vmem:[%s1140 + $0x38] sm:$0xff]
        %v1149 = vld [vmem:[%s1140 + $0x40] sm:$0xff]
        %v1150 = vld [vmem:[%s1140 + $0x48] sm:$0xff]
        %v1151 = vld [vmem:[%s1140 + $0x50] sm:$0xff]
        %v1152 = vld [vmem:[%s1140 + $0x58] sm:$0xff]
        %1153 = vmatpush.msra.mxu0 0.0
        %1154 = vmatpush.msra.mxu0 0.0
        %1155 = vmatpush.msra.mxu0 0.0
        %1156 = vmatpush.msra.mxu0 0.0
        %1157 = vmatpush.msra.mxu0 %v1152
        %1158 = vmatpush.msra.mxu0 %v1151
        %1159 = vmatpush.msra.mxu0 %v1150
        %1160 = vmatpush.msra.mxu0 %v1149
        %1161 = vmatpush.msra.mxu0 %v1148
        %1162 = vmatpush.msra.mxu0 %v1147
        %1163 = vmatpush.msra.mxu0 %v1146
        %1164 = vmatpush.msra.mxu0 %v1145
        %1165 = vmatpush.msra.mxu0 %v1144
        %1166 = vmatpush.msra.mxu0 %v1143
        %1167 = vmatpush.msra.mxu0 %v1142
        %1168 = vmatpush.msra.mxu0 %v1141
        %1169 = vmatmul.f32.gmra.mxu0 %v1082
        %v1170 = vpop.f32.mrf.mxu0
        %v1171 = vadd.f32 0.0, %v1170
        %1172 = vmatmul.f32.gmra.mxu0 %v1085
        %v1173 = vpop.f32.mrf.mxu0
        %v1174 = vadd.f32 0.0, %v1173
        %1175 = vmatmul.f32.gmra.mxu0 %v1088
        %v1176 = vpop.f32.mrf.mxu0
        %v1177 = vadd.f32 0.0, %v1176
        %1178 = vmatmul.f32.gmra.mxu0 %v1091
        %v1179 = vpop.f32.mrf.mxu0
        %v1180 = vadd.f32 0.0, %v1179
        %1181 = vmatmul.f32.gmra.mxu0 %v1094
        %v1182 = vpop.f32.mrf.mxu0
        %v1183 = vadd.f32 0.0, %v1182
        %1184 = vmatmul.f32.gmra.mxu0 %v1097
        %v1185 = vpop.f32.mrf.mxu0
        %v1186 = vadd.f32 0.0, %v1185
        %1187 = vmatmul.f32.gmra.mxu0 %v1100
        %v1188 = vpop.f32.mrf.mxu0
        %v1189 = vadd.f32 0.0, %v1188
        %1190 = vdwg.mxu0
        %v1191 = vmax.f32 %v1120, %v1171
        %v1192 = vmax.f32 %v1123, %v1174
        %v1193 = vmax.f32 %v1126, %v1177
        %v1194 = vmax.f32 %v1129, %v1180
        %v1195 = vmax.f32 %v1132, %v1183
        %v1196 = vmax.f32 %v1135, %v1186
        %v1197 = vmax.f32 %v1138, %v1189
        %v1198 = vld [vmem:[%s7] sm:$0xff]
        %v1199 = vld [vmem:[%s7 + $0x8] sm:$0xff]
        %v1200 = vld [vmem:[%s7 + $0x10] sm:$0xff]
        %v1201 = vld [vmem:[%s7 + $0x18] sm:$0xff]
        %v1202 = vld [vmem:[%s7 + $0x20] sm:$0xf]
        %vm1203 = vcmask 441344
        %v1205 = vsel %vm1203, %v1198, 0
        %v1208 = vsel %vm1203, %v1199, 0
        %v1211 = vsel %vm1203, %v1200, 0
        %v1214 = vsel %vm1203, %v1201, 0
        %v1217 = vsel %vm1203, %v1202, 0
        %vm1219 = vcmask 1045504
        %v1221 = vsel %vm1219, %v1197, 0
        %1223 = vmatpush.msra.mxu0 0.0
        %1224 = vmatpush.msra.mxu0 0.0
        %1225 = vmatpush.msra.mxu0 0.0
        %1226 = vmatpush.msra.mxu0 0.0
        %1227 = vmatpush.msra.mxu0 0.0
        %1228 = vmatpush.msra.mxu0 0.0
        %1229 = vmatpush.msra.mxu0 0.0
        %1230 = vmatpush.msra.mxu0 0.0
        %1231 = vmatpush.msra.mxu0 0.0
        %1232 = vmatpush.msra.mxu0 %v1221
        %1233 = vmatpush.msra.mxu0 %v1196
        %1234 = vmatpush.msra.mxu0 %v1195
        %1235 = vmatpush.msra.mxu0 %v1194
        %1236 = vmatpush.msra.mxu0 %v1193
        %1237 = vmatpush.msra.mxu0 %v1192
        %1238 = vmatpush.msra.mxu0 %v1191
        %1239 = vmatmul.f32.gmra.mxu0 %v1205
        %v1240 = vpop.f32.mrf.mxu0
        %v1241 = vadd.f32 0.0, %v1240
        %1242 = vmatmul.f32.gmra.mxu0 %v1208
        %v1243 = vpop.f32.mrf.mxu0
        %v1244 = vadd.f32 0.0, %v1243
        %1245 = vmatmul.f32.gmra.mxu0 %v1211
        %v1246 = vpop.f32.mrf.mxu0
        %v1247 = vadd.f32 0.0, %v1246
        %1248 = vmatmul.f32.gmra.mxu0 %v1214
        %v1249 = vpop.f32.mrf.mxu0
        %v1250 = vadd.f32 0.0, %v1249
        %1251 = vmatmul.f32.gmra.mxu0 %v1217
        %v1252 = vpop.f32.mrf.mxu0
        %v1253 = vadd.f32 0.0, %v1252
        %1254 = vdwg.mxu0
        %s1255 = scalar_lea.vmem %s7, 40
        %v1256 = vld [vmem:[%s1255] sm:$0xff]
        %v1257 = vld [vmem:[%s1255 + $0x8] sm:$0xff]
        %v1258 = vld [vmem:[%s1255 + $0x10] sm:$0xff]
        %v1259 = vld [vmem:[%s1255 + $0x18] sm:$0xff]
        %v1260 = vld [vmem:[%s1255 + $0x20] sm:$0xf]
        %v1262 = vsel %vm1203, %v1256, 0
        %v1265 = vsel %vm1203, %v1257, 0
        %v1268 = vsel %vm1203, %v1258, 0
        %v1271 = vsel %vm1203, %v1259, 0
        %v1274 = vsel %vm1203, %v1260, 0
        %1276 = vmatpush.msra.mxu0 0.0
        %1277 = vmatpush.msra.mxu0 0.0
        %1278 = vmatpush.msra.mxu0 0.0
        %1279 = vmatpush.msra.mxu0 0.0
        %1280 = vmatpush.msra.mxu0 0.0
        %1281 = vmatpush.msra.mxu0 0.0
        %1282 = vmatpush.msra.mxu0 0.0
        %1283 = vmatpush.msra.mxu0 0.0
        %1284 = vmatpush.msra.mxu0 0.0
        %1285 = vmatpush.msra.mxu0 %v1221
        %1286 = vmatpush.msra.mxu0 %v1196
        %1287 = vmatpush.msra.mxu0 %v1195
        %1288 = vmatpush.msra.mxu0 %v1194
        %1289 = vmatpush.msra.mxu0 %v1193
        %1290 = vmatpush.msra.mxu0 %v1192
        %1291 = vmatpush.msra.mxu0 %v1191
        %1292 = vmatmul.f32.gmra.mxu0 %v1262
        %v1293 = vpop.f32.mrf.mxu0
        %v1294 = vadd.f32 0.0, %v1293
        %1295 = vmatmul.f32.gmra.mxu0 %v1265
        %v1296 = vpop.f32.mrf.mxu0
        %v1297 = vadd.f32 0.0, %v1296
        %1298 = vmatmul.f32.gmra.mxu0 %v1268
        %v1299 = vpop.f32.mrf.mxu0
        %v1300 = vadd.f32 0.0, %v1299
        %1301 = vmatmul.f32.gmra.mxu0 %v1271
        %v1302 = vpop.f32.mrf.mxu0
        %v1303 = vadd.f32 0.0, %v1302
        %1304 = vmatmul.f32.gmra.mxu0 %v1274
        %v1305 = vpop.f32.mrf.mxu0
        %v1306 = vadd.f32 0.0, %v1305
        %1307 = vdwg.mxu0
        %v1308 = vmax.f32 %v1241, %v1294
        %v1309 = vmax.f32 %v1244, %v1297
        %v1310 = vmax.f32 %v1247, %v1300
        %v1311 = vmax.f32 %v1250, %v1303
        %v1312 = vmax.f32 %v1253, %v1306
        %v1313 = vmax.f32 %v1308, 0.0
        %v1314 = vmax.f32 %v1309, 0.0
        %v1315 = vmax.f32 %v1310, 0.0
        %v1316 = vmax.f32 %v1311, 0.0
        %v1317 = vmax.f32 %v1312, 0.0
        %v1318 = vld [vmem:[#allocation5] sm:$0xff]
        %v1319 = vld [vmem:[#allocation5 + $0x8] sm:$0xff]
        %v1320 = vld [vmem:[#allocation5 + $0x10] sm:$0xff]
        %v1321 = vld [vmem:[#allocation5 + $0x18] sm:$0xff]
        %v1322 = vld [vmem:[#allocation5 + $0x20] sm:$0xff]
        %v1323 = vld [vmem:[#allocation5 + $0x28] sm:$0xff]
        %v1324 = vld [vmem:[#allocation5 + $0x30] sm:$0xff]
        %v1325 = vld [vmem:[#allocation5 + $0x38] sm:$0xff]
        %v1326 = vld [vmem:[#allocation5 + $0x40] sm:$0xff]
        %s1327 = scalar_lea.vmem [#allocation5], 72
        %v1328 = vld [vmem:[%s1327] sm:$0xff]
        %v1329 = vld [vmem:[%s1327 + $0x8] sm:$0xff]
        %v1330 = vld [vmem:[%s1327 + $0x10] sm:$0xff]
        %v1331 = vld [vmem:[%s1327 + $0x18] sm:$0xff]
        %v1332 = vld [vmem:[%s1327 + $0x20] sm:$0xff]
        %v1333 = vld [vmem:[%s1327 + $0x28] sm:$0xff]
        %v1334 = vld [vmem:[%s1327 + $0x30] sm:$0xff]
        %v1335 = vld [vmem:[%s1327 + $0x38] sm:$0xff]
        %v1336 = vld [vmem:[%s1327 + $0x40] sm:$0xff]
        %vm1342 = vcmask 1046528
        %v1343 = vrot.slane %v1313, 1
        %v1344 = vrot.slane %v1314, 1
        %v1345 = vsel %vm1342, %v1343, %v1344
        %v1346 = vrot.slane %v1315, 1
        %v1347 = vsel %vm1342, %v1344, %v1346
        %v1348 = vrot.slane %v1316, 1
        %v1349 = vsel %vm1342, %v1346, %v1348
        %v1350 = vrot.slane %v1317, 1
        %v1351 = vsel %vm1342, %v1348, %v1350
        %vm1352 = vcmask 588800
        %v1353 = vsel %vm1352, %v1345, 0
        %v1355 = vsel %vm1352, %v1347, 0
        %v1357 = vsel %vm1352, %v1349, 0
        %v1359 = vsel %vm1352, %v1351, 0
        %v1361 = vsel %vm1352, %v1350, 0
        %1363 = vmatpush.msra.mxu0 0.0
        %1364 = vmatpush.msra.mxu0 0.0
        %1365 = vmatpush.msra.mxu0 0.0
        %1366 = vmatpush.msra.mxu0 0.0
        %1367 = vmatpush.msra.mxu0 0.0
        %1368 = vmatpush.msra.mxu0 0.0
        %1369 = vmatpush.msra.mxu0 0.0
        %1370 = vmatpush.msra.mxu0 %v1336
        %1371 = vmatpush.msra.mxu0 %v1335
        %1372 = vmatpush.msra.mxu0 %v1334
        %1373 = vmatpush.msra.mxu0 %v1333
        %1374 = vmatpush.msra.mxu0 %v1332
        %1375 = vmatpush.msra.mxu0 %v1331
        %1376 = vmatpush.msra.mxu0 %v1330
        %1377 = vmatpush.msra.mxu0 %v1329
        %1378 = vmatpush.msra.mxu0 %v1328
        %1379 = vmatmul.f32.gmra.mxu0 %v1353
        %v1380 = vpop.f32.mrf.mxu0
        %v1381 = vadd.f32 0.0, %v1380
        %1382 = vmatmul.f32.gmra.mxu0 %v1355
        %v1383 = vpop.f32.mrf.mxu0
        %v1384 = vadd.f32 0.0, %v1383
        %1385 = vmatmul.f32.gmra.mxu0 %v1357
        %v1386 = vpop.f32.mrf.mxu0
        %v1387 = vadd.f32 0.0, %v1386
        %1388 = vmatmul.f32.gmra.mxu0 %v1359
        %v1389 = vpop.f32.mrf.mxu0
        %v1390 = vadd.f32 0.0, %v1389
        %1391 = vmatmul.f32.gmra.mxu0 %v1361
        %v1392 = vpop.f32.mrf.mxu0
        %v1393 = vadd.f32 0.0, %v1392
        %1394 = vdwg.mxu0
        %v1395 = vsel %vm1352, %v1313, 0
        %v1397 = vsel %vm1352, %v1314, 0
        %v1399 = vsel %vm1352, %v1315, 0
        %v1401 = vsel %vm1352, %v1316, 0
        %v1403 = vsel %vm1352, %v1317, 0
        %1405 = vmatpush.msra.mxu0 0.0
        %1406 = vmatpush.msra.mxu0 0.0
        %1407 = vmatpush.msra.mxu0 0.0
        %1408 = vmatpush.msra.mxu0 0.0
        %1409 = vmatpush.msra.mxu0 0.0
        %1410 = vmatpush.msra.mxu0 0.0
        %1411 = vmatpush.msra.mxu0 0.0
        %1412 = vmatpush.msra.mxu0 %v1326
        %1413 = vmatpush.msra.mxu0 %v1325
        %1414 = vmatpush.msra.mxu0 %v1324
        %1415 = vmatpush.msra.mxu0 %v1323
        %1416 = vmatpush.msra.mxu0 %v1322
        %1417 = vmatpush.msra.mxu0 %v1321
        %1418 = vmatpush.msra.mxu0 %v1320
        %1419 = vmatpush.msra.mxu0 %v1319
        %1420 = vmatpush.msra.mxu0 %v1318
        %1421 = vmatmul.f32.gmra.mxu0 %v1395
        %v1422 = vpop.f32.mrf.mxu0
        %v1423 = vadd.f32 %v1381, %v1422
        %1424 = vmatmul.f32.gmra.mxu0 %v1397
        %v1425 = vpop.f32.mrf.mxu0
        %v1426 = vadd.f32 %v1384, %v1425
        %1427 = vmatmul.f32.gmra.mxu0 %v1399
        %v1428 = vpop.f32.mrf.mxu0
        %v1429 = vadd.f32 %v1387, %v1428
        %1430 = vmatmul.f32.gmra.mxu0 %v1401
        %v1431 = vpop.f32.mrf.mxu0
        %v1432 = vadd.f32 %v1390, %v1431
        %1433 = vmatmul.f32.gmra.mxu0 %v1403
        %v1434 = vpop.f32.mrf.mxu0
        %v1435 = vadd.f32 %v1393, %v1434
        %1436 = vdwg.mxu0
        %s1437 = scalar_lea.vmem [#allocation5], 144
        %v1438 = vld [vmem:[%s1437] sm:$0xff]
        %v1439 = vld [vmem:[%s1437 + $0x8] sm:$0xff]
        %v1440 = vld [vmem:[%s1437 + $0x10] sm:$0xff]
        %v1441 = vld [vmem:[%s1437 + $0x18] sm:$0xff]
        %v1442 = vld [vmem:[%s1437 + $0x20] sm:$0xff]
        %v1443 = vld [vmem:[%s1437 + $0x28] sm:$0xff]
        %v1444 = vld [vmem:[%s1437 + $0x30] sm:$0xff]
        %v1445 = vld [vmem:[%s1437 + $0x38] sm:$0xff]
        %v1446 = vld [vmem:[%s1437 + $0x40] sm:$0xff]
        %v1447 = vrot.slane %v1313, 2
        %v1448 = vrot.slane %v1314, 2
        %v1449 = vsel %vm1219, %v1447, %v1448
        %v1450 = vrot.slane %v1315, 2
        %v1451 = vsel %vm1219, %v1448, %v1450
        %v1452 = vrot.slane %v1316, 2
        %v1453 = vsel %vm1219, %v1450, %v1452
        %v1454 = vrot.slane %v1317, 2
        %v1455 = vsel %vm1219, %v1452, %v1454
        %v1456 = vsel %vm1352, %v1449, 0
        %v1458 = vsel %vm1352, %v1451, 0
        %v1460 = vsel %vm1352, %v1453, 0
        %v1462 = vsel %vm1352, %v1455, 0
        %v1464 = vsel %vm1352, %v1454, 0
        %1466 = vmatpush.msra.mxu0 0.0
        %1467 = vmatpush.msra.mxu0 0.0
        %1468 = vmatpush.msra.mxu0 0.0
        %1469 = vmatpush.msra.mxu0 0.0
        %1470 = vmatpush.msra.mxu0 0.0
        %1471 = vmatpush.msra.mxu0 0.0
        %1472 = vmatpush.msra.mxu0 0.0
        %1473 = vmatpush.msra.mxu0 %v1446
        %1474 = vmatpush.msra.mxu0 %v1445
        %1475 = vmatpush.msra.mxu0 %v1444
        %1476 = vmatpush.msra.mxu0 %v1443
        %1477 = vmatpush.msra.mxu0 %v1442
        %1478 = vmatpush.msra.mxu0 %v1441
        %1479 = vmatpush.msra.mxu0 %v1440
        %1480 = vmatpush.msra.mxu0 %v1439
        %1481 = vmatpush.msra.mxu0 %v1438
        %1482 = vmatmul.f32.gmra.mxu0 %v1456
        %v1483 = vpop.f32.mrf.mxu0
        %v1484 = vadd.f32 0.0, %v1483
        %1485 = vmatmul.f32.gmra.mxu0 %v1458
        %v1486 = vpop.f32.mrf.mxu0
        %v1487 = vadd.f32 0.0, %v1486
        %1488 = vmatmul.f32.gmra.mxu0 %v1460
        %v1489 = vpop.f32.mrf.mxu0
        %v1490 = vadd.f32 0.0, %v1489
        %1491 = vmatmul.f32.gmra.mxu0 %v1462
        %v1492 = vpop.f32.mrf.mxu0
        %v1493 = vadd.f32 0.0, %v1492
        %1494 = vmatmul.f32.gmra.mxu0 %v1464
        %v1495 = vpop.f32.mrf.mxu0
        %v1496 = vadd.f32 0.0, %v1495
        %1497 = vdwg.mxu0
        %v1498 = vadd.f32 %v1423, %v1484
        %v1499 = vadd.f32 %v1426, %v1487
        %v1500 = vadd.f32 %v1429, %v1490
        %v1501 = vadd.f32 %v1432, %v1493
        %v1502 = vadd.f32 %v1435, %v1496
        %v1503 = vld [vmem:[%s4] sm:$0x1]
        %v1505 = vperm.slane %v1503, 0
        %v1507 = vadd.f32 %v1498, %v1505
        %v1508 = vadd.f32 %v1499, %v1505
        %v1509 = vadd.f32 %v1500, %v1505
        %v1510 = vadd.f32 %v1501, %v1505
        %v1511 = vadd.f32 %v1502, %v1505
        %v1512 = vld [vmem:[#allocation10] sm:$0xff]
        %v1513 = vld [vmem:[#allocation10 + $0x8] sm:$0xff]
        %v1514 = vld [vmem:[#allocation10 + $0x10] sm:$0xff]
        %v1515 = vld [vmem:[#allocation10 + $0x18] sm:$0xff]
        %v1516 = vld [vmem:[#allocation10 + $0x20] sm:$0xff]
        %v1517 = vld [vmem:[#allocation10 + $0x28] sm:$0xff]
        %v1518 = vld [vmem:[#allocation10 + $0x30] sm:$0xff]
        %v1519 = vld [vmem:[#allocation10 + $0x38] sm:$0xff]
        %v1520 = vld [vmem:[#allocation10 + $0x40] sm:$0xff]
        %v1521 = vld [vmem:[#allocation10 + $0x48] sm:$0xff]
        %v1522 = vld [vmem:[#allocation10 + $0x50] sm:$0xff]
        %v1523 = vld [vmem:[#allocation10 + $0x58] sm:$0xff]
        %v1524 = vld [vmem:[#allocation10 + $0x60] sm:$0xff]
        %v1525 = vld [vmem:[#allocation10 + $0x68] sm:$0xff]
        %vm1526 = vcmask 916480
        %v1528 = vsel %vm1526, %v1507, 0
        %v1531 = vsel %vm1526, %v1508, 0
        %v1534 = vsel %vm1526, %v1509, 0
        %v1537 = vsel %vm1526, %v1510, 0
        %v1540 = vsel %vm1526, %v1511, 0
        %1542 = vmatpush.msra.mxu0 0.0
        %1543 = vmatpush.msra.mxu0 0.0
        %1544 = vmatpush.msra.mxu0 %v1525
        %1545 = vmatpush.msra.mxu0 %v1524
        %1546 = vmatpush.msra.mxu0 %v1523
        %1547 = vmatpush.msra.mxu0 %v1522
        %1548 = vmatpush.msra.mxu0 %v1521
        %1549 = vmatpush.msra.mxu0 %v1520
        %1550 = vmatpush.msra.mxu0 %v1519
        %1551 = vmatpush.msra.mxu0 %v1518
        %1552 = vmatpush.msra.mxu0 %v1517
        %1553 = vmatpush.msra.mxu0 %v1516
        %1554 = vmatpush.msra.mxu0 %v1515
        %1555 = vmatpush.msra.mxu0 %v1514
        %1556 = vmatpush.msra.mxu0 %v1513
        %1557 = vmatpush.msra.mxu0 %v1512
        %1558 = vmatmul.f32.gmra.mxu0 %v1528
        %v1559 = vpop.f32.mrf.mxu0
        %v1560 = vadd.f32 0.0, %v1559
        %1561 = vmatmul.f32.gmra.mxu0 %v1531
        %v1562 = vpop.f32.mrf.mxu0
        %v1563 = vadd.f32 0.0, %v1562
        %1564 = vmatmul.f32.gmra.mxu0 %v1534
        %v1565 = vpop.f32.mrf.mxu0
        %v1566 = vadd.f32 0.0, %v1565
        %1567 = vmatmul.f32.gmra.mxu0 %v1537
        %v1568 = vpop.f32.mrf.mxu0
        %v1569 = vadd.f32 0.0, %v1568
        %1570 = vmatmul.f32.gmra.mxu0 %v1540
        %v1571 = vpop.f32.mrf.mxu0
        %v1572 = vadd.f32 0.0, %v1571
        %1573 = vdwg.mxu0
        %s1574 = scalar_lea.vmem [#allocation10], 112
        %v1575 = vld [vmem:[%s1574] sm:$0xff]
        %v1576 = vld [vmem:[%s1574 + $0x8] sm:$0xff]
        %v1577 = vld [vmem:[%s1574 + $0x10] sm:$0xff]
        %v1578 = vld [vmem:[%s1574 + $0x18] sm:$0xff]
        %v1579 = vld [vmem:[%s1574 + $0x20] sm:$0xff]
        %v1580 = vld [vmem:[%s1574 + $0x28] sm:$0xff]
        %v1581 = vld [vmem:[%s1574 + $0x30] sm:$0xff]
        %v1582 = vld [vmem:[%s1574 + $0x38] sm:$0xff]
        %v1583 = vld [vmem:[%s1574 + $0x40] sm:$0xff]
        %v1584 = vld [vmem:[%s1574 + $0x48] sm:$0xff]
        %v1585 = vld [vmem:[%s1574 + $0x50] sm:$0xff]
        %v1586 = vld [vmem:[%s1574 + $0x58] sm:$0xff]
        %v1587 = vld [vmem:[%s1574 + $0x60] sm:$0xff]
        %v1588 = vld [vmem:[%s1574 + $0x68] sm:$0xff]
        %1589 = vmatpush.msra.mxu0 0.0
        %1590 = vmatpush.msra.mxu0 0.0
        %1591 = vmatpush.msra.mxu0 %v1588
        %1592 = vmatpush.msra.mxu0 %v1587
        %1593 = vmatpush.msra.mxu0 %v1586
        %1594 = vmatpush.msra.mxu0 %v1585
        %1595 = vmatpush.msra.mxu0 %v1584
        %1596 = vmatpush.msra.mxu0 %v1583
        %1597 = vmatpush.msra.mxu0 %v1582
        %1598 = vmatpush.msra.mxu0 %v1581
        %1599 = vmatpush.msra.mxu0 %v1580
        %1600 = vmatpush.msra.mxu0 %v1579
        %1601 = vmatpush.msra.mxu0 %v1578
        %1602 = vmatpush.msra.mxu0 %v1577
        %1603 = vmatpush.msra.mxu0 %v1576
        %1604 = vmatpush.msra.mxu0 %v1575
        %1605 = vmatmul.f32.gmra.mxu0 %v1528
        %v1606 = vpop.f32.mrf.mxu0
        %v1607 = vadd.f32 0.0, %v1606
        %1608 = vmatmul.f32.gmra.mxu0 %v1531
        %v1609 = vpop.f32.mrf.mxu0
        %v1610 = vadd.f32 0.0, %v1609
        %1611 = vmatmul.f32.gmra.mxu0 %v1534
        %v1612 = vpop.f32.mrf.mxu0
        %v1613 = vadd.f32 0.0, %v1612
        %1614 = vmatmul.f32.gmra.mxu0 %v1537
        %v1615 = vpop.f32.mrf.mxu0
        %v1616 = vadd.f32 0.0, %v1615
        %1617 = vmatmul.f32.gmra.mxu0 %v1540
        %v1618 = vpop.f32.mrf.mxu0
        %v1619 = vadd.f32 0.0, %v1618
        %1620 = vdwg.mxu0
        %v1621 = vmax.f32 %v1560, %v1607
        %v1622 = vmax.f32 %v1563, %v1610
        %v1623 = vmax.f32 %v1566, %v1613
        %v1624 = vmax.f32 %v1569, %v1616
        %v1625 = vmax.f32 %v1572, %v1619
        %v1626 = vld [vmem:[#allocation8] sm:$0xff]
        %v1627 = vld [vmem:[#allocation8 + $0x8] sm:$0xff]
        %v1628 = vld [vmem:[#allocation8 + $0x10] sm:$0xff]
        %vm1629 = vcmask 277504
        %v1631 = vsel %vm1629, %v1626, 0
        %v1634 = vsel %vm1629, %v1627, 0
        %v1637 = vsel %vm1629, %v1628, 0
        %v1640 = vsel %vm870, %v1625, 0
        %1642 = vmatpush.msra.mxu0 0.0
        %1643 = vmatpush.msra.mxu0 0.0
        %1644 = vmatpush.msra.mxu0 0.0
        %1645 = vmatpush.msra.mxu0 0.0
        %1646 = vmatpush.msra.mxu0 0.0
        %1647 = vmatpush.msra.mxu0 0.0
        %1648 = vmatpush.msra.mxu0 0.0
        %1649 = vmatpush.msra.mxu0 0.0
        %1650 = vmatpush.msra.mxu0 0.0
        %1651 = vmatpush.msra.mxu0 0.0
        %1652 = vmatpush.msra.mxu0 0.0
        %1653 = vmatpush.msra.mxu0 %v1640
        %1654 = vmatpush.msra.mxu0 %v1624
        %1655 = vmatpush.msra.mxu0 %v1623
        %1656 = vmatpush.msra.mxu0 %v1622
        %1657 = vmatpush.msra.mxu0 %v1621
        %1658 = vmatmul.f32.gmra.mxu0 %v1631
        %v1659 = vpop.f32.mrf.mxu0
        %v1660 = vadd.f32 0.0, %v1659
        %1661 = vmatmul.f32.gmra.mxu0 %v1634
        %v1662 = vpop.f32.mrf.mxu0
        %v1663 = vadd.f32 0.0, %v1662
        %1664 = vmatmul.f32.gmra.mxu0 %v1637
        %v1665 = vpop.f32.mrf.mxu0
        %v1666 = vadd.f32 0.0, %v1665
        %1667 = vdwg.mxu0
        %s1668 = scalar_lea.vmem [#allocation8], 24
        %v1669 = vld [vmem:[%s1668] sm:$0xff]
        %v1670 = vld [vmem:[%s1668 + $0x8] sm:$0xff]
        %v1671 = vld [vmem:[%s1668 + $0x10] sm:$0xff]
        %v1673 = vsel %vm1629, %v1669, 0
        %v1676 = vsel %vm1629, %v1670, 0
        %v1679 = vsel %vm1629, %v1671, 0
        %1681 = vmatpush.msra.mxu0 0.0
        %1682 = vmatpush.msra.mxu0 0.0
        %1683 = vmatpush.msra.mxu0 0.0
        %1684 = vmatpush.msra.mxu0 0.0
        %1685 = vmatpush.msra.mxu0 0.0
        %1686 = vmatpush.msra.mxu0 0.0
        %1687 = vmatpush.msra.mxu0 0.0
        %1688 = vmatpush.msra.mxu0 0.0
        %1689 = vmatpush.msra.mxu0 0.0
        %1690 = vmatpush.msra.mxu0 0.0
        %1691 = vmatpush.msra.mxu0 0.0
        %1692 = vmatpush.msra.mxu0 %v1640
        %1693 = vmatpush.msra.mxu0 %v1624
        %1694 = vmatpush.msra.mxu0 %v1623
        %1695 = vmatpush.msra.mxu0 %v1622
        %1696 = vmatpush.msra.mxu0 %v1621
        %1697 = vmatmul.f32.gmra.mxu0 %v1673
        %v1698 = vpop.f32.mrf.mxu0
        %v1699 = vadd.f32 0.0, %v1698
        %1700 = vmatmul.f32.gmra.mxu0 %v1676
        %v1701 = vpop.f32.mrf.mxu0
        %v1702 = vadd.f32 0.0, %v1701
        %1703 = vmatmul.f32.gmra.mxu0 %v1679
        %v1704 = vpop.f32.mrf.mxu0
        %v1705 = vadd.f32 0.0, %v1704
        %1706 = vdwg.mxu0
        %v1707 = vmax.f32 %v1660, %v1699
        %v1708 = vmax.f32 %v1663, %v1702
        %v1709 = vmax.f32 %v1666, %v1705
        %v1710 = vmax.f32 %v1707, 0.0
        %v1711 = vmax.f32 %v1708, 0.0
        %v1712 = vmax.f32 %v1709, 0.0
        %v1713 = vld [vmem:[%s5] sm:$0xff]
        %v1714 = vld [vmem:[%s5 + $0x8] sm:$0xff]
        %v1715 = vld [vmem:[%s5 + $0x10] sm:$0xff]
        %v1716 = vld [vmem:[%s5 + $0x18] sm:$0xff]
        %v1717 = vld [vmem:[%s5 + $0x20] sm:$0xff]
        %v1718 = vld [vmem:[%s5 + $0x28] sm:$0xff]
        %v1719 = vld [vmem:[%s5 + $0x30] sm:$0xff]
        %v1720 = vld [vmem:[%s5 + $0x38] sm:$0xff]
        %v1721 = vld [vmem:[%s5 + $0x40] sm:$0xff]
        %v1722 = vld [vmem:[%s5 + $0x48] sm:$0xff]
        %v1723 = vld [vmem:[%s5 + $0x50] sm:$0xff]
        %v1724 = vld [vmem:[%s5 + $0x58] sm:$0xff]
        %s1725 = scalar_lea.vmem %s5, 96
        %v1726 = vld [vmem:[%s1725] sm:$0xff]
        %v1727 = vld [vmem:[%s1725 + $0x8] sm:$0xff]
        %v1728 = vld [vmem:[%s1725 + $0x10] sm:$0xff]
        %v1729 = vld [vmem:[%s1725 + $0x18] sm:$0xff]
        %v1730 = vld [vmem:[%s1725 + $0x20] sm:$0xff]
        %v1731 = vld [vmem:[%s1725 + $0x28] sm:$0xff]
        %v1732 = vld [vmem:[%s1725 + $0x30] sm:$0xff]
        %v1733 = vld [vmem:[%s1725 + $0x38] sm:$0xff]
        %v1734 = vld [vmem:[%s1725 + $0x40] sm:$0xff]
        %v1735 = vld [vmem:[%s1725 + $0x48] sm:$0xff]
        %v1736 = vld [vmem:[%s1725 + $0x50] sm:$0xff]
        %v1737 = vld [vmem:[%s1725 + $0x58] sm:$0xff]
        %v1741 = vrot.slane %v1710, 1
        %v1742 = vrot.slane %v1711, 1
        %v1743 = vsel %vm1342, %v1741, %v1742
        %v1744 = vrot.slane %v1712, 1
        %v1745 = vsel %vm1342, %v1742, %v1744
        %v1746 = vsel %vm1080, %v1743, 0
        %v1748 = vsel %vm1080, %v1745, 0
        %v1750 = vsel %vm1080, %v1744, 0
        %1752 = vmatpush.msra.mxu0 0.0
        %1753 = vmatpush.msra.mxu0 0.0
        %1754 = vmatpush.msra.mxu0 0.0
        %1755 = vmatpush.msra.mxu0 0.0
        %1756 = vmatpush.msra.mxu0 %v1737
        %1757 = vmatpush.msra.mxu0 %v1736
        %1758 = vmatpush.msra.mxu0 %v1735
        %1759 = vmatpush.msra.mxu0 %v1734
        %1760 = vmatpush.msra.mxu0 %v1733
        %1761 = vmatpush.msra.mxu0 %v1732
        %1762 = vmatpush.msra.mxu0 %v1731
        %1763 = vmatpush.msra.mxu0 %v1730
        %1764 = vmatpush.msra.mxu0 %v1729
        %1765 = vmatpush.msra.mxu0 %v1728
        %1766 = vmatpush.msra.mxu0 %v1727
        %1767 = vmatpush.msra.mxu0 %v1726
        %1768 = vmatmul.f32.gmra.mxu0 %v1746
        %v1769 = vpop.f32.mrf.mxu0
        %v1770 = vadd.f32 0.0, %v1769
        %1771 = vmatmul.f32.gmra.mxu0 %v1748
        %v1772 = vpop.f32.mrf.mxu0
        %v1773 = vadd.f32 0.0, %v1772
        %1774 = vmatmul.f32.gmra.mxu0 %v1750
        %v1775 = vpop.f32.mrf.mxu0
        %v1776 = vadd.f32 0.0, %v1775
        %1777 = vdwg.mxu0
        %v1778 = vsel %vm1080, %v1710, 0
        %v1780 = vsel %vm1080, %v1711, 0
        %v1782 = vsel %vm1080, %v1712, 0
        %1784 = vmatpush.msra.mxu0 0.0
        %1785 = vmatpush.msra.mxu0 0.0
        %1786 = vmatpush.msra.mxu0 0.0
        %1787 = vmatpush.msra.mxu0 0.0
        %1788 = vmatpush.msra.mxu0 %v1724
        %1789 = vmatpush.msra.mxu0 %v1723
        %1790 = vmatpush.msra.mxu0 %v1722
        %1791 = vmatpush.msra.mxu0 %v1721
        %1792 = vmatpush.msra.mxu0 %v1720
        %1793 = vmatpush.msra.mxu0 %v1719
        %1794 = vmatpush.msra.mxu0 %v1718
        %1795 = vmatpush.msra.mxu0 %v1717
        %1796 = vmatpush.msra.mxu0 %v1716
        %1797 = vmatpush.msra.mxu0 %v1715
        %1798 = vmatpush.msra.mxu0 %v1714
        %1799 = vmatpush.msra.mxu0 %v1713
        %1800 = vmatmul.f32.gmra.mxu0 %v1778
        %v1801 = vpop.f32.mrf.mxu0
        %v1802 = vadd.f32 %v1770, %v1801
        %1803 = vmatmul.f32.gmra.mxu0 %v1780
        %v1804 = vpop.f32.mrf.mxu0
        %v1805 = vadd.f32 %v1773, %v1804
        %1806 = vmatmul.f32.gmra.mxu0 %v1782
        %v1807 = vpop.f32.mrf.mxu0
        %v1808 = vadd.f32 %v1776, %v1807
        %1809 = vdwg.mxu0
        %s1810 = scalar_lea.vmem %s5, 192
        %v1811 = vld [vmem:[%s1810] sm:$0xff]
        %v1812 = vld [vmem:[%s1810 + $0x8] sm:$0xff]
        %v1813 = vld [vmem:[%s1810 + $0x10] sm:$0xff]
        %v1814 = vld [vmem:[%s1810 + $0x18] sm:$0xff]
        %v1815 = vld [vmem:[%s1810 + $0x20] sm:$0xff]
        %v1816 = vld [vmem:[%s1810 + $0x28] sm:$0xff]
        %v1817 = vld [vmem:[%s1810 + $0x30] sm:$0xff]
        %v1818 = vld [vmem:[%s1810 + $0x38] sm:$0xff]
        %v1819 = vld [vmem:[%s1810 + $0x40] sm:$0xff]
        %v1820 = vld [vmem:[%s1810 + $0x48] sm:$0xff]
        %v1821 = vld [vmem:[%s1810 + $0x50] sm:$0xff]
        %v1822 = vld [vmem:[%s1810 + $0x58] sm:$0xff]
        %v1823 = vrot.slane %v1710, 2
        %v1824 = vrot.slane %v1711, 2
        %v1825 = vsel %vm1219, %v1823, %v1824
        %v1826 = vrot.slane %v1712, 2
        %v1827 = vsel %vm1219, %v1824, %v1826
        %v1828 = vsel %vm1080, %v1825, 0
        %v1830 = vsel %vm1080, %v1827, 0
        %v1832 = vsel %vm1080, %v1826, 0
        %1834 = vmatpush.msra.mxu0 0.0
        %1835 = vmatpush.msra.mxu0 0.0
        %1836 = vmatpush.msra.mxu0 0.0
        %1837 = vmatpush.msra.mxu0 0.0
        %1838 = vmatpush.msra.mxu0 %v1822
        %1839 = vmatpush.msra.mxu0 %v1821
        %1840 = vmatpush.msra.mxu0 %v1820
        %1841 = vmatpush.msra.mxu0 %v1819
        %1842 = vmatpush.msra.mxu0 %v1818
        %1843 = vmatpush.msra.mxu0 %v1817
        %1844 = vmatpush.msra.mxu0 %v1816
        %1845 = vmatpush.msra.mxu0 %v1815
        %1846 = vmatpush.msra.mxu0 %v1814
        %1847 = vmatpush.msra.mxu0 %v1813
        %1848 = vmatpush.msra.mxu0 %v1812
        %1849 = vmatpush.msra.mxu0 %v1811
        %1850 = vmatmul.f32.gmra.mxu0 %v1828
        %v1851 = vpop.f32.mrf.mxu0
        %v1852 = vadd.f32 0.0, %v1851
        %1853 = vmatmul.f32.gmra.mxu0 %v1830
        %v1854 = vpop.f32.mrf.mxu0
        %v1855 = vadd.f32 0.0, %v1854
        %1856 = vmatmul.f32.gmra.mxu0 %v1832
        %v1857 = vpop.f32.mrf.mxu0
        %v1858 = vadd.f32 0.0, %v1857
        %1859 = vdwg.mxu0
        %v1860 = vadd.f32 %v1802, %v1852
        %v1861 = vadd.f32 %v1805, %v1855
        %v1862 = vadd.f32 %v1808, %v1858
        %v1863 = vld [vmem:[%s6] sm:$0x1]
        %v1865 = vperm.slane %v1863, 0
        %v1867 = vadd.f32 %v1860, %v1865
        %v1868 = vadd.f32 %v1861, %v1865
        %v1869 = vadd.f32 %v1862, %v1865
        %v1870 = vmax.f32 %v1867, 0.0
        %v1871 = vmax.f32 %v1868, 0.0
        %v1872 = vmax.f32 %v1869, 0.0
        %v1873 = vld [vmem:[%s11] sm:$0xff]
        %v1874 = vld [vmem:[%s11 + $0x8] sm:$0xff]
        %v1875 = vld [vmem:[%s11 + $0x10] sm:$0xff]
        %v1876 = vld [vmem:[%s11 + $0x18] sm:$0xff]
        %v1877 = vld [vmem:[%s11 + $0x20] sm:$0xff]
        %v1878 = vld [vmem:[%s11 + $0x28] sm:$0xff]
        %v1879 = vld [vmem:[%s11 + $0x30] sm:$0xff]
        %v1880 = vld [vmem:[%s11 + $0x38] sm:$0xff]
        %v1881 = vld [vmem:[%s11 + $0x40] sm:$0xff]
        %v1882 = vld [vmem:[%s11 + $0x48] sm:$0xff]
        %v1883 = vld [vmem:[%s11 + $0x50] sm:$0xff]
        %v1884 = vld [vmem:[%s11 + $0x58] sm:$0xff]
        %v1885 = vld [vmem:[%s11 + $0x60] sm:$0xff]
        %v1886 = vld [vmem:[%s11 + $0x68] sm:$0xff]
        %v1887 = vld [vmem:[%s11 + $0x70] sm:$0xff]
        %v1888 = vld [vmem:[%s11 + $0x78] sm:$0xff]
        %1889 = vmatpush.msra.mxu0 %v1888
        %1890 = vmatpush.msra.mxu0 %v1887
        %1891 = vmatpush.msra.mxu0 %v1886
        %1892 = vmatpush.msra.mxu0 %v1885
        %1893 = vmatpush.msra.mxu0 %v1884
        %1894 = vmatpush.msra.mxu0 %v1883
        %1895 = vmatpush.msra.mxu0 %v1882
        %1896 = vmatpush.msra.mxu0 %v1881
        %1897 = vmatpush.msra.mxu0 %v1880
        %1898 = vmatpush.msra.mxu0 %v1879
        %1899 = vmatpush.msra.mxu0 %v1878
        %1900 = vmatpush.msra.mxu0 %v1877
        %1901 = vmatpush.msra.mxu0 %v1876
        %1902 = vmatpush.msra.mxu0 %v1875
        %1903 = vmatpush.msra.mxu0 %v1874
        %1904 = vmatpush.msra.mxu0 %v1873
        %1905 = vmatmul.f32.gmra.mxu0 %v1870
        %v1906 = vpop.f32.mrf.mxu0
        %v1907 = vadd.f32 0.0, %v1906
        %1908 = vmatmul.f32.gmra.mxu0 %v1871
        %v1909 = vpop.f32.mrf.mxu0
        %v1910 = vadd.f32 0.0, %v1909
        %1911 = vmatmul.f32.gmra.mxu0 %v1872
        %v1912 = vpop.f32.mrf.mxu0
        %v1913 = vadd.f32 0.0, %v1912
        %1914 = vdwg.mxu0
        %s1915 = scalar_lea.vmem %s11, 128
        %v1916 = vld [vmem:[%s1915] sm:$0xff]
        %v1917 = vld [vmem:[%s1915 + $0x8] sm:$0xff]
        %v1918 = vld [vmem:[%s1915 + $0x10] sm:$0xff]
        %v1919 = vld [vmem:[%s1915 + $0x18] sm:$0xff]
        %v1920 = vld [vmem:[%s1915 + $0x20] sm:$0xff]
        %v1921 = vld [vmem:[%s1915 + $0x28] sm:$0xff]
        %v1922 = vld [vmem:[%s1915 + $0x30] sm:$0xff]
        %v1923 = vld [vmem:[%s1915 + $0x38] sm:$0xff]
        %v1924 = vld [vmem:[%s1915 + $0x40] sm:$0xff]
        %v1925 = vld [vmem:[%s1915 + $0x48] sm:$0xff]
        %v1926 = vld [vmem:[%s1915 + $0x50] sm:$0xff]
        %v1927 = vld [vmem:[%s1915 + $0x58] sm:$0xff]
        %v1928 = vld [vmem:[%s1915 + $0x60] sm:$0xff]
        %v1929 = vld [vmem:[%s1915 + $0x68] sm:$0xff]
        %v1930 = vld [vmem:[%s1915 + $0x70] sm:$0xff]
        %v1931 = vld [vmem:[%s1915 + $0x78] sm:$0xff]
        %1932 = vmatpush.msra.mxu0 %v1931
        %1933 = vmatpush.msra.mxu0 %v1930
        %1934 = vmatpush.msra.mxu0 %v1929
        %1935 = vmatpush.msra.mxu0 %v1928
        %1936 = vmatpush.msra.mxu0 %v1927
        %1937 = vmatpush.msra.mxu0 %v1926
        %1938 = vmatpush.msra.mxu0 %v1925
        %1939 = vmatpush.msra.mxu0 %v1924
        %1940 = vmatpush.msra.mxu0 %v1923
        %1941 = vmatpush.msra.mxu0 %v1922
        %1942 = vmatpush.msra.mxu0 %v1921
        %1943 = vmatpush.msra.mxu0 %v1920
        %1944 = vmatpush.msra.mxu0 %v1919
        %1945 = vmatpush.msra.mxu0 %v1918
        %1946 = vmatpush.msra.mxu0 %v1917
        %1947 = vmatpush.msra.mxu0 %v1916
        %1948 = vmatmul.f32.gmra.mxu0 %v1870
        %v1949 = vpop.f32.mrf.mxu0
        %v1950 = vadd.f32 0.0, %v1949
        %1951 = vmatmul.f32.gmra.mxu0 %v1871
        %v1952 = vpop.f32.mrf.mxu0
        %v1953 = vadd.f32 0.0, %v1952
        %1954 = vmatmul.f32.gmra.mxu0 %v1872
        %v1955 = vpop.f32.mrf.mxu0
        %v1956 = vadd.f32 0.0, %v1955
        %1957 = vdwg.mxu0
        %v1958 = vmax.f32 %v1907, %v1950
        %v1959 = vmax.f32 %v1910, %v1953
        %v1960 = vmax.f32 %v1913, %v1956
        %s1961 = scalar_lea.vmem %s11, 256
        %v1962 = vld [vmem:[%s1961] sm:$0xff]
        %v1963 = vld [vmem:[%s1961 + $0x8] sm:$0xff]
        %v1964 = vld [vmem:[%s1961 + $0x10] sm:$0xff]
        %v1965 = vld [vmem:[%s1961 + $0x18] sm:$0xff]
        %v1966 = vld [vmem:[%s1961 + $0x20] sm:$0xff]
        %v1967 = vld [vmem:[%s1961 + $0x28] sm:$0xff]
        %v1968 = vld [vmem:[%s1961 + $0x30] sm:$0xff]
        %v1969 = vld [vmem:[%s1961 + $0x38] sm:$0xff]
        %v1970 = vld [vmem:[%s1961 + $0x40] sm:$0xff]
        %v1971 = vld [vmem:[%s1961 + $0x48] sm:$0xff]
        %v1972 = vld [vmem:[%s1961 + $0x50] sm:$0xff]
        %v1973 = vld [vmem:[%s1961 + $0x58] sm:$0xff]
        %v1974 = vld [vmem:[%s1961 + $0x60] sm:$0xff]
        %v1975 = vld [vmem:[%s1961 + $0x68] sm:$0xff]
        %v1976 = vld [vmem:[%s1961 + $0x70] sm:$0xff]
        %v1977 = vld [vmem:[%s1961 + $0x78] sm:$0xff]
        %1978 = vmatpush.msra.mxu0 %v1977
        %1979 = vmatpush.msra.mxu0 %v1976
        %1980 = vmatpush.msra.mxu0 %v1975
        %1981 = vmatpush.msra.mxu0 %v1974
        %1982 = vmatpush.msra.mxu0 %v1973
        %1983 = vmatpush.msra.mxu0 %v1972
        %1984 = vmatpush.msra.mxu0 %v1971
        %1985 = vmatpush.msra.mxu0 %v1970
        %1986 = vmatpush.msra.mxu0 %v1969
        %1987 = vmatpush.msra.mxu0 %v1968
        %1988 = vmatpush.msra.mxu0 %v1967
        %1989 = vmatpush.msra.mxu0 %v1966
        %1990 = vmatpush.msra.mxu0 %v1965
        %1991 = vmatpush.msra.mxu0 %v1964
        %1992 = vmatpush.msra.mxu0 %v1963
        %1993 = vmatpush.msra.mxu0 %v1962
        %1994 = vmatmul.f32.gmra.mxu0 %v1870
        %v1995 = vpop.f32.mrf.mxu0
        %v1996 = vadd.f32 0.0, %v1995
        %1997 = vmatmul.f32.gmra.mxu0 %v1871
        %v1998 = vpop.f32.mrf.mxu0
        %v1999 = vadd.f32 0.0, %v1998
        %2000 = vmatmul.f32.gmra.mxu0 %v1872
        %v2001 = vpop.f32.mrf.mxu0
        %v2002 = vadd.f32 0.0, %v2001
        %2003 = vdwg.mxu0
        %v2004 = vmax.f32 %v1958, %v1996
        %v2005 = vmax.f32 %v1959, %v1999
        %v2006 = vmax.f32 %v1960, %v2002
        %s2007 = scalar_lea.vmem %s11, 384
        %v2008 = vld [vmem:[%s2007] sm:$0xff]
        %v2009 = vld [vmem:[%s2007 + $0x8] sm:$0xff]
        %v2010 = vld [vmem:[%s2007 + $0x10] sm:$0xff]
        %v2011 = vld [vmem:[%s2007 + $0x18] sm:$0xff]
        %v2012 = vld [vmem:[%s2007 + $0x20] sm:$0xff]
        %v2013 = vld [vmem:[%s2007 + $0x28] sm:$0xff]
        %v2014 = vld [vmem:[%s2007 + $0x30] sm:$0xff]
        %v2015 = vld [vmem:[%s2007 + $0x38] sm:$0xff]
        %v2016 = vld [vmem:[%s2007 + $0x40] sm:$0xff]
        %v2017 = vld [vmem:[%s2007 + $0x48] sm:$0xff]
        %v2018 = vld [vmem:[%s2007 + $0x50] sm:$0xff]
        %v2019 = vld [vmem:[%s2007 + $0x58] sm:$0xff]
        %v2020 = vld [vmem:[%s2007 + $0x60] sm:$0xff]
        %v2021 = vld [vmem:[%s2007 + $0x68] sm:$0xff]
        %v2022 = vld [vmem:[%s2007 + $0x70] sm:$0xff]
        %v2023 = vld [vmem:[%s2007 + $0x78] sm:$0xff]
        %2024 = vmatpush.msra.mxu0 %v2023
        %2025 = vmatpush.msra.mxu0 %v2022
        %2026 = vmatpush.msra.mxu0 %v2021
        %2027 = vmatpush.msra.mxu0 %v2020
        %2028 = vmatpush.msra.mxu0 %v2019
        %2029 = vmatpush.msra.mxu0 %v2018
        %2030 = vmatpush.msra.mxu0 %v2017
        %2031 = vmatpush.msra.mxu0 %v2016
        %2032 = vmatpush.msra.mxu0 %v2015
        %2033 = vmatpush.msra.mxu0 %v2014
        %2034 = vmatpush.msra.mxu0 %v2013
        %2035 = vmatpush.msra.mxu0 %v2012
        %2036 = vmatpush.msra.mxu0 %v2011
        %2037 = vmatpush.msra.mxu0 %v2010
        %2038 = vmatpush.msra.mxu0 %v2009
        %2039 = vmatpush.msra.mxu0 %v2008
        %2040 = vmatmul.f32.gmra.mxu0 %v1870
        %v2041 = vpop.f32.mrf.mxu0
        %v2042 = vadd.f32 0.0, %v2041
        %2043 = vmatmul.f32.gmra.mxu0 %v1871
        %v2044 = vpop.f32.mrf.mxu0
        %v2045 = vadd.f32 0.0, %v2044
        %2046 = vmatmul.f32.gmra.mxu0 %v1872
        %v2047 = vpop.f32.mrf.mxu0
        %v2048 = vadd.f32 0.0, %v2047
        %2049 = vdwg.mxu0
        %v2050 = vmax.f32 %v2004, %v2042
        %v2051 = vmax.f32 %v2005, %v2045
        %v2052 = vmax.f32 %v2006, %v2048
        %v2053 = vld [vmem:[#allocation13] sm:$0xf]
        %vm2054 = vcmask 179200
        %v2056 = vsel %vm2054, %v2053, 0
        %v2059 = vsel %vm1219, %v2052, 0
        %2061 = vmatpush.msra.mxu0 0.0
        %2062 = vmatpush.msra.mxu0 0.0
        %2063 = vmatpush.msra.mxu0 0.0
        %2064 = vmatpush.msra.mxu0 0.0
        %2065 = vmatpush.msra.mxu0 0.0
        %2066 = vmatpush.msra.mxu0 0.0
        %2067 = vmatpush.msra.mxu0 0.0
        %2068 = vmatpush.msra.mxu0 0.0
        %2069 = vmatpush.msra.mxu0 0.0
        %2070 = vmatpush.msra.mxu0 0.0
        %2071 = vmatpush.msra.mxu0 0.0
        %2072 = vmatpush.msra.mxu0 0.0
        %2073 = vmatpush.msra.mxu0 0.0
        %2074 = vmatpush.msra.mxu0 %v2059
        %2075 = vmatpush.msra.mxu0 %v2051
        %2076 = vmatpush.msra.mxu0 %v2050
        %2077 = vmatmul.f32.gmra.mxu0 %v2056
        %v2078 = vpop.f32.mrf.mxu0
        %v2079 = vadd.f32 0.0, %v2078
        %2080 = vdwg.mxu0
        %s2081 = scalar_lea.vmem [#allocation13], 4
        %v2082 = vld [vmem:[%s2081] sm:$0xf]
        %v2084 = vsel %vm2054, %v2082, 0
        %2086 = vmatpush.msra.mxu0 0.0
        %2087 = vmatpush.msra.mxu0 0.0
        %2088 = vmatpush.msra.mxu0 0.0
        %2089 = vmatpush.msra.mxu0 0.0
        %2090 = vmatpush.msra.mxu0 0.0
        %2091 = vmatpush.msra.mxu0 0.0
        %2092 = vmatpush.msra.mxu0 0.0
        %2093 = vmatpush.msra.mxu0 0.0
        %2094 = vmatpush.msra.mxu0 0.0
        %2095 = vmatpush.msra.mxu0 0.0
        %2096 = vmatpush.msra.mxu0 0.0
        %2097 = vmatpush.msra.mxu0 0.0
        %2098 = vmatpush.msra.mxu0 0.0
        %2099 = vmatpush.msra.mxu0 %v2059
        %2100 = vmatpush.msra.mxu0 %v2051
        %2101 = vmatpush.msra.mxu0 %v2050
        %2102 = vmatmul.f32.gmra.mxu0 %v2084
        %v2103 = vpop.f32.mrf.mxu0
        %v2104 = vadd.f32 0.0, %v2103
        %2105 = vdwg.mxu0
        %v2106 = vmax.f32 %v2079, %v2104
        %s2107 = scalar_lea.vmem [#allocation13], 8
        %v2108 = vld [vmem:[%s2107] sm:$0xf]
        %v2110 = vsel %vm2054, %v2108, 0
        %2112 = vmatpush.msra.mxu0 0.0
        %2113 = vmatpush.msra.mxu0 0.0
        %2114 = vmatpush.msra.mxu0 0.0
        %2115 = vmatpush.msra.mxu0 0.0
        %2116 = vmatpush.msra.mxu0 0.0
        %2117 = vmatpush.msra.mxu0 0.0
        %2118 = vmatpush.msra.mxu0 0.0
        %2119 = vmatpush.msra.mxu0 0.0
        %2120 = vmatpush.msra.mxu0 0.0
        %2121 = vmatpush.msra.mxu0 0.0
        %2122 = vmatpush.msra.mxu0 0.0
        %2123 = vmatpush.msra.mxu0 0.0
        %2124 = vmatpush.msra.mxu0 0.0
        %2125 = vmatpush.msra.mxu0 %v2059
        %2126 = vmatpush.msra.mxu0 %v2051
        %2127 = vmatpush.msra.mxu0 %v2050
        %2128 = vmatmul.f32.gmra.mxu0 %v2110
        %v2129 = vpop.f32.mrf.mxu0
        %v2130 = vadd.f32 0.0, %v2129
        %2131 = vdwg.mxu0
        %v2132 = vmax.f32 %v2106, %v2130
        %s2133 = scalar_lea.vmem [#allocation13], 12
        %v2134 = vld [vmem:[%s2133] sm:$0xf]
        %v2136 = vsel %vm2054, %v2134, 0
        %2138 = vmatpush.msra.mxu0 0.0
        %2139 = vmatpush.msra.mxu0 0.0
        %2140 = vmatpush.msra.mxu0 0.0
        %2141 = vmatpush.msra.mxu0 0.0
        %2142 = vmatpush.msra.mxu0 0.0
        %2143 = vmatpush.msra.mxu0 0.0
        %2144 = vmatpush.msra.mxu0 0.0
        %2145 = vmatpush.msra.mxu0 0.0
        %2146 = vmatpush.msra.mxu0 0.0
        %2147 = vmatpush.msra.mxu0 0.0
        %2148 = vmatpush.msra.mxu0 0.0
        %2149 = vmatpush.msra.mxu0 0.0
        %2150 = vmatpush.msra.mxu0 0.0
        %2151 = vmatpush.msra.mxu0 %v2059
        %2152 = vmatpush.msra.mxu0 %v2051
        %2153 = vmatpush.msra.mxu0 %v2050
        %2154 = vmatmul.f32.gmra.mxu0 %v2136
        %v2155 = vpop.f32.mrf.mxu0
        %v2156 = vadd.f32 0.0, %v2155
        %2157 = vdwg.mxu0
        %v2158 = vmax.f32 %v2132, %v2156
        %v2159 = vld [vmem:[%s17] sm:$0xff]
        %v2160 = vld [vmem:[%s17 + $0x8] sm:$0xff]
        %v2161 = vld [vmem:[%s17 + $0x10] sm:$0xff]
        %v2162 = vld [vmem:[%s17 + $0x18] sm:$0xff]
        %v2163 = vld [vmem:[%s12] sm:$0xff]
        %v2164 = vld [vmem:[%s12 + $0x8] sm:$0xff]
        %v2165 = vld [vmem:[%s12 + $0x10] sm:$0xff]
        %v2166 = vld [vmem:[%s12 + $0x18] sm:$0xff]
        %v2167 = vld [vmem:[%s12 + $0x20] sm:$0xff]
        %v2168 = vld [vmem:[%s12 + $0x28] sm:$0xff]
        %v2169 = vld [vmem:[%s12 + $0x30] sm:$0xff]
        %v2170 = vld [vmem:[%s12 + $0x38] sm:$0xff]
        %v2171 = vld [vmem:[%s12 + $0x40] sm:$0xff]
        %v2172 = vld [vmem:[%s12 + $0x48] sm:$0xff]
        %v2173 = vld [vmem:[%s12 + $0x50] sm:$0xff]
        %v2174 = vld [vmem:[%s12 + $0x58] sm:$0xff]
        %v2175 = vld [vmem:[%s12 + $0x60] sm:$0xff]
        %v2176 = vld [vmem:[%s12 + $0x68] sm:$0xff]
        %v2177 = vld [vmem:[%s12 + $0x70] sm:$0xff]
        %v2178 = vld [vmem:[%s12 + $0x78] sm:$0xff]
        %2179 = vmatpush.msra.mxu0 %v2178
        %2180 = vmatpush.msra.mxu0 %v2177
        %2181 = vmatpush.msra.mxu0 %v2176
        %2182 = vmatpush.msra.mxu0 %v2175
        %2183 = vmatpush.msra.mxu0 %v2174
        %2184 = vmatpush.msra.mxu0 %v2173
        %2185 = vmatpush.msra.mxu0 %v2172
        %2186 = vmatpush.msra.mxu0 %v2171
        %2187 = vmatpush.msra.mxu0 %v2170
        %2188 = vmatpush.msra.mxu0 %v2169
        %2189 = vmatpush.msra.mxu0 %v2168
        %2190 = vmatpush.msra.mxu0 %v2167
        %2191 = vmatpush.msra.mxu0 %v2166
        %2192 = vmatpush.msra.mxu0 %v2165
        %2193 = vmatpush.msra.mxu0 %v2164
        %2194 = vmatpush.msra.mxu0 %v2163
        %2195 = vmatmul.f32.gmra.mxu0 %v1870
        %v2196 = vpop.f32.mrf.mxu0
        %v2197 = vadd.f32 0.0, %v2196
        %2198 = vmatmul.f32.gmra.mxu0 %v1871
        %v2199 = vpop.f32.mrf.mxu0
        %v2200 = vadd.f32 0.0, %v2199
        %2201 = vmatmul.f32.gmra.mxu0 %v1872
        %v2202 = vpop.f32.mrf.mxu0
        %v2203 = vadd.f32 0.0, %v2202
        %2204 = vdwg.mxu0
        %s2205 = scalar_lea.vmem %s12, 128
        %v2206 = vld [vmem:[%s2205] sm:$0xff]
        %v2207 = vld [vmem:[%s2205 + $0x8] sm:$0xff]
        %v2208 = vld [vmem:[%s2205 + $0x10] sm:$0xff]
        %v2209 = vld [vmem:[%s2205 + $0x18] sm:$0xff]
        %v2210 = vld [vmem:[%s2205 + $0x20] sm:$0xff]
        %v2211 = vld [vmem:[%s2205 + $0x28] sm:$0xff]
        %v2212 = vld [vmem:[%s2205 + $0x30] sm:$0xff]
        %v2213 = vld [vmem:[%s2205 + $0x38] sm:$0xff]
        %v2214 = vld [vmem:[%s2205 + $0x40] sm:$0xff]
        %v2215 = vld [vmem:[%s2205 + $0x48] sm:$0xff]
        %v2216 = vld [vmem:[%s2205 + $0x50] sm:$0xff]
        %v2217 = vld [vmem:[%s2205 + $0x58] sm:$0xff]
        %v2218 = vld [vmem:[%s2205 + $0x60] sm:$0xff]
        %v2219 = vld [vmem:[%s2205 + $0x68] sm:$0xff]
        %v2220 = vld [vmem:[%s2205 + $0x70] sm:$0xff]
        %v2221 = vld [vmem:[%s2205 + $0x78] sm:$0xff]
        %2222 = vmatpush.msra.mxu0 %v2221
        %2223 = vmatpush.msra.mxu0 %v2220
        %2224 = vmatpush.msra.mxu0 %v2219
        %2225 = vmatpush.msra.mxu0 %v2218
        %2226 = vmatpush.msra.mxu0 %v2217
        %2227 = vmatpush.msra.mxu0 %v2216
        %2228 = vmatpush.msra.mxu0 %v2215
        %2229 = vmatpush.msra.mxu0 %v2214
        %2230 = vmatpush.msra.mxu0 %v2213
        %2231 = vmatpush.msra.mxu0 %v2212
        %2232 = vmatpush.msra.mxu0 %v2211
        %2233 = vmatpush.msra.mxu0 %v2210
        %2234 = vmatpush.msra.mxu0 %v2209
        %2235 = vmatpush.msra.mxu0 %v2208
        %2236 = vmatpush.msra.mxu0 %v2207
        %2237 = vmatpush.msra.mxu0 %v2206
        %2238 = vmatmul.f32.gmra.mxu0 %v1870
        %v2239 = vpop.f32.mrf.mxu0
        %v2240 = vadd.f32 0.0, %v2239
        %2241 = vmatmul.f32.gmra.mxu0 %v1871
        %v2242 = vpop.f32.mrf.mxu0
        %v2243 = vadd.f32 0.0, %v2242
        %2244 = vmatmul.f32.gmra.mxu0 %v1872
        %v2245 = vpop.f32.mrf.mxu0
        %v2246 = vadd.f32 0.0, %v2245
        %2247 = vdwg.mxu0
        %v2248 = vmax.f32 %v2197, %v2240
        %v2249 = vmax.f32 %v2200, %v2243
        %v2250 = vmax.f32 %v2203, %v2246
        %v2251 = vld [vmem:[#allocation14] sm:$0xf]
        %v2253 = vsel %vm2054, %v2251, 0
        %v2256 = vsel %vm1219, %v2250, 0
        %2258 = vmatpush.msra.mxu0 0.0
        %2259 = vmatpush.msra.mxu0 0.0
        %2260 = vmatpush.msra.mxu0 0.0
        %2261 = vmatpush.msra.mxu0 0.0
        %2262 = vmatpush.msra.mxu0 0.0
        %2263 = vmatpush.msra.mxu0 0.0
        %2264 = vmatpush.msra.mxu0 0.0
        %2265 = vmatpush.msra.mxu0 0.0
        %2266 = vmatpush.msra.mxu0 0.0
        %2267 = vmatpush.msra.mxu0 0.0
        %2268 = vmatpush.msra.mxu0 0.0
        %2269 = vmatpush.msra.mxu0 0.0
        %2270 = vmatpush.msra.mxu0 0.0
        %2271 = vmatpush.msra.mxu0 %v2256
        %2272 = vmatpush.msra.mxu0 %v2249
        %2273 = vmatpush.msra.mxu0 %v2248
        %2274 = vmatmul.f32.gmra.mxu0 %v2253
        %v2275 = vpop.f32.mrf.mxu0
        %v2276 = vadd.f32 0.0, %v2275
        %2277 = vdwg.mxu0
        %s2278 = scalar_lea.vmem [#allocation14], 4
        %v2279 = vld [vmem:[%s2278] sm:$0xf]
        %v2281 = vsel %vm2054, %v2279, 0
        %2283 = vmatpush.msra.mxu0 0.0
        %2284 = vmatpush.msra.mxu0 0.0
        %2285 = vmatpush.msra.mxu0 0.0
        %2286 = vmatpush.msra.mxu0 0.0
        %2287 = vmatpush.msra.mxu0 0.0
        %2288 = vmatpush.msra.mxu0 0.0
        %2289 = vmatpush.msra.mxu0 0.0
        %2290 = vmatpush.msra.mxu0 0.0
        %2291 = vmatpush.msra.mxu0 0.0
        %2292 = vmatpush.msra.mxu0 0.0
        %2293 = vmatpush.msra.mxu0 0.0
        %2294 = vmatpush.msra.mxu0 0.0
        %2295 = vmatpush.msra.mxu0 0.0
        %2296 = vmatpush.msra.mxu0 %v2256
        %2297 = vmatpush.msra.mxu0 %v2249
        %2298 = vmatpush.msra.mxu0 %v2248
        %2299 = vmatmul.f32.gmra.mxu0 %v2281
        %v2300 = vpop.f32.mrf.mxu0
        %v2301 = vadd.f32 0.0, %v2300
        %2302 = vdwg.mxu0
        %v2303 = vmax.f32 %v2276, %v2301
        %v2304 = vld [vmem:[%s17 + $0x20] sm:$0xff]
        %v2305 = vld [vmem:[%s17 + $0x28] sm:$0xff]
        %v2306 = vld [vmem:[%s17 + $0x30] sm:$0xff]
        %v2307 = vld [vmem:[%s17 + $0x38] sm:$0xff]
        %v2308 = vld [vmem:[%s17 + $0x40] sm:$0xff]
        %v2309 = vld [vmem:[%s17 + $0x48] sm:$0xff]
        %v2310 = vld [vmem:[%s17 + $0x50] sm:$0xff]
        %v2311 = vld [vmem:[%s17 + $0x58] sm:$0xff]
        %vm2312 = vcmask 523264
        %v2314 = vsel %vm2312, %v2303, 0
        %2316 = vmatpush.msra.mxu0 0.0
        %2317 = vmatpush.msra.mxu0 0.0
        %2318 = vmatpush.msra.mxu0 0.0
        %2319 = vmatpush.msra.mxu0 0.0
        %2320 = vmatpush.msra.mxu0 0.0
        %2321 = vmatpush.msra.mxu0 0.0
        %2322 = vmatpush.msra.mxu0 0.0
        %2323 = vmatpush.msra.mxu0 0.0
        %2324 = vmatpush.msra.mxu0 %v2311
        %2325 = vmatpush.msra.mxu0 %v2310
        %2326 = vmatpush.msra.mxu0 %v2309
        %2327 = vmatpush.msra.mxu0 %v2308
        %2328 = vmatpush.msra.mxu0 %v2307
        %2329 = vmatpush.msra.mxu0 %v2306
        %2330 = vmatpush.msra.mxu0 %v2305
        %2331 = vmatpush.msra.mxu0 %v2304
        %2332 = vmatmul.f32.gmra.mxu0 %v2314
        %v2333 = vpop.f32.mrf.mxu0
        %v2334 = vadd.f32 0.0, %v2333
        %2335 = vdwg.mxu0
        %vm2336 = vcmask 261120
        %v2338 = vsel %vm2336, %v2158, 0
        %2340 = vmatpush.msra.mxu0 0.0
        %2341 = vmatpush.msra.mxu0 0.0
        %2342 = vmatpush.msra.mxu0 0.0
        %2343 = vmatpush.msra.mxu0 0.0
        %2344 = vmatpush.msra.mxu0 0.0
        %2345 = vmatpush.msra.mxu0 0.0
        %2346 = vmatpush.msra.mxu0 0.0
        %2347 = vmatpush.msra.mxu0 0.0
        %2348 = vmatpush.msra.mxu0 0.0
        %2349 = vmatpush.msra.mxu0 0.0
        %2350 = vmatpush.msra.mxu0 0.0
        %2351 = vmatpush.msra.mxu0 0.0
        %2352 = vmatpush.msra.mxu0 %v2162
        %2353 = vmatpush.msra.mxu0 %v2161
        %2354 = vmatpush.msra.mxu0 %v2160
        %2355 = vmatpush.msra.mxu0 %v2159
        %2356 = vmatmul.f32.gmra.mxu0 %v2338
        %v2357 = vpop.f32.mrf.mxu0
        %v2358 = vadd.f32 %v2334, %v2357
        %2359 = vdwg.mxu0
        %s2360 = scalar_lea.vmem [#allocation14], 8
        %v2361 = vld [vmem:[%s2360] sm:$0xf]
        %v2363 = vsel %vm2054, %v2361, 0
        %2365 = vmatpush.msra.mxu0 0.0
        %2366 = vmatpush.msra.mxu0 0.0
        %2367 = vmatpush.msra.mxu0 0.0
        %2368 = vmatpush.msra.mxu0 0.0
        %2369 = vmatpush.msra.mxu0 0.0
        %2370 = vmatpush.msra.mxu0 0.0
        %2371 = vmatpush.msra.mxu0 0.0
        %2372 = vmatpush.msra.mxu0 0.0
        %2373 = vmatpush.msra.mxu0 0.0
        %2374 = vmatpush.msra.mxu0 0.0
        %2375 = vmatpush.msra.mxu0 0.0
        %2376 = vmatpush.msra.mxu0 0.0
        %2377 = vmatpush.msra.mxu0 0.0
        %2378 = vmatpush.msra.mxu0 %v2256
        %2379 = vmatpush.msra.mxu0 %v2249
        %2380 = vmatpush.msra.mxu0 %v2248
        %2381 = vmatmul.f32.gmra.mxu0 %v2363
        %v2382 = vpop.f32.mrf.mxu0
        %v2383 = vadd.f32 0.0, %v2382
        %2384 = vdwg.mxu0
        %s2385 = scalar_lea.vmem [#allocation14], 12
        %v2386 = vld [vmem:[%s2385] sm:$0xf]
        %v2388 = vsel %vm2054, %v2386, 0
        %2390 = vmatpush.msra.mxu0 0.0
        %2391 = vmatpush.msra.mxu0 0.0
        %2392 = vmatpush.msra.mxu0 0.0
        %2393 = vmatpush.msra.mxu0 0.0
        %2394 = vmatpush.msra.mxu0 0.0
        %2395 = vmatpush.msra.mxu0 0.0
        %2396 = vmatpush.msra.mxu0 0.0
        %2397 = vmatpush.msra.mxu0 0.0
        %2398 = vmatpush.msra.mxu0 0.0
        %2399 = vmatpush.msra.mxu0 0.0
        %2400 = vmatpush.msra.mxu0 0.0
        %2401 = vmatpush.msra.mxu0 0.0
        %2402 = vmatpush.msra.mxu0 0.0
        %2403 = vmatpush.msra.mxu0 %v2256
        %2404 = vmatpush.msra.mxu0 %v2249
        %2405 = vmatpush.msra.mxu0 %v2248
        %2406 = vmatmul.f32.gmra.mxu0 %v2388
        %v2407 = vpop.f32.mrf.mxu0
        %v2408 = vadd.f32 0.0, %v2407
        %2409 = vdwg.mxu0
        %v2410 = vmax.f32 %v2383, %v2408
        %v2411 = vld [vmem:[%s17 + $0x60] sm:$0xff]
        %v2412 = vld [vmem:[%s17 + $0x68] sm:$0xff]
        %v2413 = vld [vmem:[%s17 + $0x70] sm:$0xff]
        %v2414 = vld [vmem:[%s17 + $0x78] sm:$0xff]
        %v2415 = vld [vmem:[%s17 + $0x80] sm:$0xff]
        %v2416 = vld [vmem:[%s17 + $0x88] sm:$0xff]
        %v2417 = vld [vmem:[%s17 + $0x90] sm:$0xff]
        %v2418 = vld [vmem:[%s17 + $0x98] sm:$0xff]
        %v2420 = vsel %vm2312, %v2410, 0
        %2422 = vmatpush.msra.mxu0 0.0
        %2423 = vmatpush.msra.mxu0 0.0
        %2424 = vmatpush.msra.mxu0 0.0
        %2425 = vmatpush.msra.mxu0 0.0
        %2426 = vmatpush.msra.mxu0 0.0
        %2427 = vmatpush.msra.mxu0 0.0
        %2428 = vmatpush.msra.mxu0 0.0
        %2429 = vmatpush.msra.mxu0 0.0
        %2430 = vmatpush.msra.mxu0 %v2418
        %2431 = vmatpush.msra.mxu0 %v2417
        %2432 = vmatpush.msra.mxu0 %v2416
        %2433 = vmatpush.msra.mxu0 %v2415
        %2434 = vmatpush.msra.mxu0 %v2414
        %2435 = vmatpush.msra.mxu0 %v2413
        %2436 = vmatpush.msra.mxu0 %v2412
        %2437 = vmatpush.msra.mxu0 %v2411
        %2438 = vmatmul.f32.gmra.mxu0 %v2420
        %v2439 = vpop.f32.mrf.mxu0
        %v2440 = vadd.f32 0.0, %v2439
        %2441 = vdwg.mxu0
        %v2442 = vadd.f32 %v2358, %v2440
        %v2443 = vld [vmem:[#allocation16] sm:$0xf]
        %v2445 = vsel %vm2054, %v2443, 0
        %v2448 = vsel %vm1219, %v1872, 0
        %2450 = vmatpush.msra.mxu0 0.0
        %2451 = vmatpush.msra.mxu0 0.0
        %2452 = vmatpush.msra.mxu0 0.0
        %2453 = vmatpush.msra.mxu0 0.0
        %2454 = vmatpush.msra.mxu0 0.0
        %2455 = vmatpush.msra.mxu0 0.0
        %2456 = vmatpush.msra.mxu0 0.0
        %2457 = vmatpush.msra.mxu0 0.0
        %2458 = vmatpush.msra.mxu0 0.0
        %2459 = vmatpush.msra.mxu0 0.0
        %2460 = vmatpush.msra.mxu0 0.0
        %2461 = vmatpush.msra.mxu0 0.0
        %2462 = vmatpush.msra.mxu0 0.0
        %2463 = vmatpush.msra.mxu0 %v2448
        %2464 = vmatpush.msra.mxu0 %v1871
        %2465 = vmatpush.msra.mxu0 %v1870
        %2466 = vmatmul.f32.gmra.mxu0 %v2445
        %v2467 = vpop.f32.mrf.mxu0
        %v2468 = vadd.f32 0.0, %v2467
        %2469 = vdwg.mxu0
        %v2470 = vld [vmem:[%s17 + $0xa0] sm:$0xff]
        %v2471 = vld [vmem:[%s17 + $0xa8] sm:$0xff]
        %v2472 = vld [vmem:[%s17 + $0xb0] sm:$0xff]
        %v2473 = vld [vmem:[%s17 + $0xb8] sm:$0xff]
        %v2474 = vld [vmem:[%s17 + $0xc0] sm:$0xff]
        %v2475 = vld [vmem:[%s17 + $0xc8] sm:$0xff]
        %v2476 = vld [vmem:[%s17 + $0xd0] sm:$0xff]
        %v2477 = vld [vmem:[%s17 + $0xd8] sm:$0xff]
        %v2478 = vld [vmem:[%s17 + $0xe0] sm:$0xff]
        %v2479 = vld [vmem:[%s17 + $0xe8] sm:$0xff]
        %v2480 = vld [vmem:[%s17 + $0xf0] sm:$0xff]
        %v2481 = vld [vmem:[%s17 + $0xf8] sm:$0xff]
        %v2482 = vld [vmem:[%s17 + $0x100] sm:$0xff]
        %v2483 = vld [vmem:[%s17 + $0x108] sm:$0xff]
        %v2484 = vld [vmem:[%s17 + $0x110] sm:$0xff]
        %v2485 = vld [vmem:[%s17 + $0x118] sm:$0xff]
        %2486 = vmatpush.msra.mxu0 %v2485
        %2487 = vmatpush.msra.mxu0 %v2484
        %2488 = vmatpush.msra.mxu0 %v2483
        %2489 = vmatpush.msra.mxu0 %v2482
        %2490 = vmatpush.msra.mxu0 %v2481
        %2491 = vmatpush.msra.mxu0 %v2480
        %2492 = vmatpush.msra.mxu0 %v2479
        %2493 = vmatpush.msra.mxu0 %v2478
        %2494 = vmatpush.msra.mxu0 %v2477
        %2495 = vmatpush.msra.mxu0 %v2476
        %2496 = vmatpush.msra.mxu0 %v2475
        %2497 = vmatpush.msra.mxu0 %v2474
        %2498 = vmatpush.msra.mxu0 %v2473
        %2499 = vmatpush.msra.mxu0 %v2472
        %2500 = vmatpush.msra.mxu0 %v2471
        %2501 = vmatpush.msra.mxu0 %v2470
        %2502 = vmatmul.f32.gmra.mxu0 %v2468
        %v2503 = vpop.f32.mrf.mxu0
        %v2504 = vadd.f32 0.0, %v2503
        %2505 = vdwg.mxu0
        %v2506 = vadd.f32 %v2442, %v2504
        %s2507 = scalar_lea.vmem [#allocation16], 4
        %v2508 = vld [vmem:[%s2507] sm:$0xf]
        %v2510 = vsel %vm2054, %v2508, 0
        %2512 = vmatpush.msra.mxu0 0.0
        %2513 = vmatpush.msra.mxu0 0.0
        %2514 = vmatpush.msra.mxu0 0.0
        %2515 = vmatpush.msra.mxu0 0.0
        %2516 = vmatpush.msra.mxu0 0.0
        %2517 = vmatpush.msra.mxu0 0.0
        %2518 = vmatpush.msra.mxu0 0.0
        %2519 = vmatpush.msra.mxu0 0.0
        %2520 = vmatpush.msra.mxu0 0.0
        %2521 = vmatpush.msra.mxu0 0.0
        %2522 = vmatpush.msra.mxu0 0.0
        %2523 = vmatpush.msra.mxu0 0.0
        %2524 = vmatpush.msra.mxu0 0.0
        %2525 = vmatpush.msra.mxu0 %v2448
        %2526 = vmatpush.msra.mxu0 %v1871
        %2527 = vmatpush.msra.mxu0 %v1870
        %2528 = vmatmul.f32.gmra.mxu0 %v2510
        %v2529 = vpop.f32.mrf.mxu0
        %v2530 = vadd.f32 0.0, %v2529
        %2531 = vdwg.mxu0
        %v2532 = vld [vmem:[%s17 + $0x120] sm:$0xff]
        %v2533 = vld [vmem:[%s17 + $0x128] sm:$0xff]
        %v2534 = vld [vmem:[%s17 + $0x130] sm:$0xff]
        %v2535 = vld [vmem:[%s17 + $0x138] sm:$0xff]
        %v2536 = vld [vmem:[%s17 + $0x140] sm:$0xff]
        %v2537 = vld [vmem:[%s17 + $0x148] sm:$0xff]
        %v2538 = vld [vmem:[%s17 + $0x150] sm:$0xff]
        %v2539 = vld [vmem:[%s17 + $0x158] sm:$0xff]
        %v2540 = vld [vmem:[%s17 + $0x160] sm:$0xff]
        %v2541 = vld [vmem:[%s17 + $0x168] sm:$0xff]
        %v2542 = vld [vmem:[%s17 + $0x170] sm:$0xff]
        %v2543 = vld [vmem:[%s17 + $0x178] sm:$0xff]
        %v2544 = vld [vmem:[%s17 + $0x180] sm:$0xff]
        %v2545 = vld [vmem:[%s17 + $0x188] sm:$0xff]
        %v2546 = vld [vmem:[%s17 + $0x190] sm:$0xff]
        %v2547 = vld [vmem:[%s17 + $0x198] sm:$0xff]
        %2548 = vmatpush.msra.mxu0 %v2547
        %2549 = vmatpush.msra.mxu0 %v2546
        %2550 = vmatpush.msra.mxu0 %v2545
        %2551 = vmatpush.msra.mxu0 %v2544
        %2552 = vmatpush.msra.mxu0 %v2543
        %2553 = vmatpush.msra.mxu0 %v2542
        %2554 = vmatpush.msra.mxu0 %v2541
        %2555 = vmatpush.msra.mxu0 %v2540
        %2556 = vmatpush.msra.mxu0 %v2539
        %2557 = vmatpush.msra.mxu0 %v2538
        %2558 = vmatpush.msra.mxu0 %v2537
        %2559 = vmatpush.msra.mxu0 %v2536
        %2560 = vmatpush.msra.mxu0 %v2535
        %2561 = vmatpush.msra.mxu0 %v2534
        %2562 = vmatpush.msra.mxu0 %v2533
        %2563 = vmatpush.msra.mxu0 %v2532
        %2564 = vmatmul.f32.gmra.mxu0 %v2530
        %v2565 = vpop.f32.mrf.mxu0
        %v2566 = vadd.f32 0.0, %v2565
        %2567 = vdwg.mxu0
        %v2568 = vadd.f32 %v2506, %v2566
        %s2569 = scalar_lea.vmem [#allocation16], 8
        %v2570 = vld [vmem:[%s2569] sm:$0xf]
        %v2572 = vsel %vm2054, %v2570, 0
        %2574 = vmatpush.msra.mxu0 0.0
        %2575 = vmatpush.msra.mxu0 0.0
        %2576 = vmatpush.msra.mxu0 0.0
        %2577 = vmatpush.msra.mxu0 0.0
        %2578 = vmatpush.msra.mxu0 0.0
        %2579 = vmatpush.msra.mxu0 0.0
        %2580 = vmatpush.msra.mxu0 0.0
        %2581 = vmatpush.msra.mxu0 0.0
        %2582 = vmatpush.msra.mxu0 0.0
        %2583 = vmatpush.msra.mxu0 0.0
        %2584 = vmatpush.msra.mxu0 0.0
        %2585 = vmatpush.msra.mxu0 0.0
        %2586 = vmatpush.msra.mxu0 0.0
        %2587 = vmatpush.msra.mxu0 %v2448
        %2588 = vmatpush.msra.mxu0 %v1871
        %2589 = vmatpush.msra.mxu0 %v1870
        %2590 = vmatmul.f32.gmra.mxu0 %v2572
        %v2591 = vpop.f32.mrf.mxu0
        %v2592 = vadd.f32 0.0, %v2591
        %2593 = vdwg.mxu0
        %v2594 = vld [vmem:[%s17 + $0x1a0] sm:$0xff]
        %v2595 = vld [vmem:[%s17 + $0x1a8] sm:$0xff]
        %v2596 = vld [vmem:[%s17 + $0x1b0] sm:$0xff]
        %v2597 = vld [vmem:[%s17 + $0x1b8] sm:$0xff]
        %v2598 = vld [vmem:[%s17 + $0x1c0] sm:$0xff]
        %v2599 = vld [vmem:[%s17 + $0x1c8] sm:$0xff]
        %v2600 = vld [vmem:[%s17 + $0x1d0] sm:$0xff]
        %v2601 = vld [vmem:[%s17 + $0x1d8] sm:$0xff]
        %v2602 = vld [vmem:[%s17 + $0x1e0] sm:$0xff]
        %v2603 = vld [vmem:[%s17 + $0x1e8] sm:$0xff]
        %v2604 = vld [vmem:[%s17 + $0x1f0] sm:$0xff]
        %v2605 = vld [vmem:[%s17 + $0x1f8] sm:$0xff]
        %v2606 = vld [vmem:[%s17 + $0x200] sm:$0xff]
        %v2607 = vld [vmem:[%s17 + $0x208] sm:$0xff]
        %v2608 = vld [vmem:[%s17 + $0x210] sm:$0xff]
        %v2609 = vld [vmem:[%s17 + $0x218] sm:$0xff]
        %2610 = vmatpush.msra.mxu0 %v2609
        %2611 = vmatpush.msra.mxu0 %v2608
        %2612 = vmatpush.msra.mxu0 %v2607
        %2613 = vmatpush.msra.mxu0 %v2606
        %2614 = vmatpush.msra.mxu0 %v2605
        %2615 = vmatpush.msra.mxu0 %v2604
        %2616 = vmatpush.msra.mxu0 %v2603
        %2617 = vmatpush.msra.mxu0 %v2602
        %2618 = vmatpush.msra.mxu0 %v2601
        %2619 = vmatpush.msra.mxu0 %v2600
        %2620 = vmatpush.msra.mxu0 %v2599
        %2621 = vmatpush.msra.mxu0 %v2598
        %2622 = vmatpush.msra.mxu0 %v2597
        %2623 = vmatpush.msra.mxu0 %v2596
        %2624 = vmatpush.msra.mxu0 %v2595
        %2625 = vmatpush.msra.mxu0 %v2594
        %2626 = vmatmul.f32.gmra.mxu0 %v2592
        %v2627 = vpop.f32.mrf.mxu0
        %v2628 = vadd.f32 0.0, %v2627
        %2629 = vdwg.mxu0
        %v2630 = vadd.f32 %v2568, %v2628
        %s2631 = scalar_lea.vmem [#allocation16], 12
        %v2632 = vld [vmem:[%s2631] sm:$0xf]
        %v2634 = vsel %vm2054, %v2632, 0
        %2636 = vmatpush.msra.mxu0 0.0
        %2637 = vmatpush.msra.mxu0 0.0
        %2638 = vmatpush.msra.mxu0 0.0
        %2639 = vmatpush.msra.mxu0 0.0
        %2640 = vmatpush.msra.mxu0 0.0
        %2641 = vmatpush.msra.mxu0 0.0
        %2642 = vmatpush.msra.mxu0 0.0
        %2643 = vmatpush.msra.mxu0 0.0
        %2644 = vmatpush.msra.mxu0 0.0
        %2645 = vmatpush.msra.mxu0 0.0
        %2646 = vmatpush.msra.mxu0 0.0
        %2647 = vmatpush.msra.mxu0 0.0
        %2648 = vmatpush.msra.mxu0 0.0
        %2649 = vmatpush.msra.mxu0 %v2448
        %2650 = vmatpush.msra.mxu0 %v1871
        %2651 = vmatpush.msra.mxu0 %v1870
        %2652 = vmatmul.f32.gmra.mxu0 %v2634
        %v2653 = vpop.f32.mrf.mxu0
        %v2654 = vadd.f32 0.0, %v2653
        %2655 = vdwg.mxu0
        %v2656 = vld [vmem:[%s17 + $0x220] sm:$0xff]
        %v2657 = vld [vmem:[%s17 + $0x228] sm:$0xff]
        %v2658 = vld [vmem:[%s17 + $0x230] sm:$0xff]
        %v2659 = vld [vmem:[%s17 + $0x238] sm:$0xff]
        %v2660 = vld [vmem:[%s17 + $0x240] sm:$0xff]
        %v2661 = vld [vmem:[%s17 + $0x248] sm:$0xff]
        %v2662 = vld [vmem:[%s17 + $0x250] sm:$0xff]
        %v2663 = vld [vmem:[%s17 + $0x258] sm:$0xff]
        %v2664 = vld [vmem:[%s17 + $0x260] sm:$0xff]
        %v2665 = vld [vmem:[%s17 + $0x268] sm:$0xff]
        %v2666 = vld [vmem:[%s17 + $0x270] sm:$0xff]
        %v2667 = vld [vmem:[%s17 + $0x278] sm:$0xff]
        %v2668 = vld [vmem:[%s17 + $0x280] sm:$0xff]
        %v2669 = vld [vmem:[%s17 + $0x288] sm:$0xff]
        %v2670 = vld [vmem:[%s17 + $0x290] sm:$0xff]
        %v2671 = vld [vmem:[%s17 + $0x298] sm:$0xff]
        %2672 = vmatpush.msra.mxu0 %v2671
        %2673 = vmatpush.msra.mxu0 %v2670
        %2674 = vmatpush.msra.mxu0 %v2669
        %2675 = vmatpush.msra.mxu0 %v2668
        %2676 = vmatpush.msra.mxu0 %v2667
        %2677 = vmatpush.msra.mxu0 %v2666
        %2678 = vmatpush.msra.mxu0 %v2665
        %2679 = vmatpush.msra.mxu0 %v2664
        %2680 = vmatpush.msra.mxu0 %v2663
        %2681 = vmatpush.msra.mxu0 %v2662
        %2682 = vmatpush.msra.mxu0 %v2661
        %2683 = vmatpush.msra.mxu0 %v2660
        %2684 = vmatpush.msra.mxu0 %v2659
        %2685 = vmatpush.msra.mxu0 %v2658
        %2686 = vmatpush.msra.mxu0 %v2657
        %2687 = vmatpush.msra.mxu0 %v2656
        %2688 = vmatmul.f32.gmra.mxu0 %v2654
        %v2689 = vpop.f32.mrf.mxu0
        %v2690 = vadd.f32 0.0, %v2689
        %2691 = vdwg.mxu0
        %v2692 = vadd.f32 %v2630, %v2690
        %v2693 = vld [vmem:[%s18] sm:$0x1]
        %v2695 = vperm.slane %v2693, 0
        %v2697 = vadd.f32 %v2692, %v2695
        %v2698 = vmax.f32 %v2697, 0.0
        %v2699 = vld [vmem:[#allocation17] sm:$0xff]
        %v2700 = vld [vmem:[#allocation17 + $0x8] sm:$0xff]
        %v2701 = vld [vmem:[#allocation17 + $0x10] sm:$0xff]
        %v2702 = vld [vmem:[#allocation17 + $0x18] sm:$0xff]
        %v2703 = vld [vmem:[#allocation17 + $0x20] sm:$0xff]
        %v2704 = vld [vmem:[#allocation17 + $0x28] sm:$0xff]
        %v2705 = vld [vmem:[#allocation17 + $0x30] sm:$0xff]
        %v2706 = vld [vmem:[#allocation17 + $0x38] sm:$0xff]
        %v2707 = vld [vmem:[%s20] sm:$0x1]
        %v2709 = vperm.slane %v2707, 0
        %v2712 = vsel %vm2312, %v2698, 0
        %2714 = vmatpush.msra.mxu0 0.0
        %2715 = vmatpush.msra.mxu0 0.0
        %2716 = vmatpush.msra.mxu0 0.0
        %2717 = vmatpush.msra.mxu0 0.0
        %2718 = vmatpush.msra.mxu0 0.0
        %2719 = vmatpush.msra.mxu0 0.0
        %2720 = vmatpush.msra.mxu0 0.0
        %2721 = vmatpush.msra.mxu0 0.0
        %2722 = vmatpush.msra.mxu0 %v2706
        %2723 = vmatpush.msra.mxu0 %v2705
        %2724 = vmatpush.msra.mxu0 %v2704
        %2725 = vmatpush.msra.mxu0 %v2703
        %2726 = vmatpush.msra.mxu0 %v2702
        %2727 = vmatpush.msra.mxu0 %v2701
        %2728 = vmatpush.msra.mxu0 %v2700
        %2729 = vmatpush.msra.mxu0 %v2699
        %2730 = vmatmul.f32.gmra.mxu0 %v2712
        %v2731 = vpop.f32.mrf.mxu0
        %v2732 = vadd.f32 %v2709, %v2731
        %2733 = vdwg.mxu0
        %2734 = vst [vmem:[%s815] sm:$0xf] %v2732
        %s2735 = sand.u32 %s495, 1
        %s2736 = scalar_lea.sflag [#allocation4], %s2735
        %s2737 = sand.u32 %s495, 1
        %s2738 = smul.addr %s2737, 4
        %s2739 = scalar_lea.vmem [#allocation19], %s2738
        // Predicated region
        $region145: #{forward.1} parent=103 // pred_check
          %p2740 = pneg %p505
        $region146: #{forward.1} parent=103 // pred_check_branch
          %2742 = sbr.rel (%p2740) target = $region148
        $region147: #{forward.1} parent=103 // pred_region
          %2744 = vsyncadd %s2736, 0
          %s2745 = smul.addr %s41, 4
          %s2746 = scalar_lea.hbm %s21, %s2745
          %s2748 = sshll.u32 %s2739, 4
          %s2749 = int_to_ptr.vmem [resolvable:$true] %s2748
          %s2750 = sshll.u32 %s2746, 4
          %s2751 = int_to_ptr.hbm [resolvable:$true] %s2750
          %2753 = dma.vmem_to_hbm [thread:$0]  %s2749, 64, %s2751, %s2736
        $region148: #{forward.1} parent=103 // pred_fallthru
          _
      $region104: #{forward.1} parent=5 // pred_fallthru
        _
      %p2754 = scmp.le.s32.totalorder 2, %s36
      // Predicated region
      $region149: #{forward.1} parent=5 // pred_check
        %p2755 = pneg %p2754
      $region150: #{forward.1} parent=5 // pred_check_branch
        %2757 = sbr.rel (%p2755) target = $region152
      $region151: #{forward.1} parent=5 // pred_region
        %s2758 = ssub.s32 %s36, 2
        // Predicated region
        $region153: #{forward.1} parent=151 // pred_check
          %p2759 = pneg %p511
        $region154: #{forward.1} parent=151 // pred_check_branch
          %2761 = sbr.rel (%p2759) target = $region156
        $region155: #{forward.1} parent=151 // pred_region
          %s2762 = sand.u32 %s496, 1
          %s2763 = scalar_lea.sflag [#allocation4], %s2762
          %s2764 = sand.u32 %s496, 1
          %s2765 = smul.addr %s2764, 4
          %s2766 = scalar_lea.vmem [#allocation19], %s2765
          %2768 = dma.done %s2763, 64
        $region156: #{forward.1} parent=151 // pred_fallthru
          _
      $region152: #{forward.1} parent=5 // pred_fallthru
        _
    $region6: #{forward.1} parent=1 // loop_footer
      %s40 = sadd.s32 1, %s36
    $region7: #{forward.1} parent=1 // loop_footer_branch
      %35 = sbr.rel target = $region3
    $region8: #{forward.1} parent=1 // loop_exit
      _
    %2769 = vsyncpa [#allocation3], 1
    %s2770 = scalar_lea.sflag [#allocation3], 1
    %2771 = vsyncpa %s2770, 1
    %2772 = vsyncpa [#allocation6], 1
    %2773 = vsyncpa [#allocation9], 1
    %2774 = vsyncpa [#allocation12], 1
    %2775 = vsyncpa [#allocation15], 1
    %2776 = vsyncpa [#allocation18], 1
    %2777 = vsyncpa [#allocation4], 1
    %s2778 = scalar_lea.sflag [#allocation4], 1
    %2779 = vsyncpa %s2778, 1

</llo_original>
